<compile_context>
chip_gen: v6e
topology: v6e:2x2x1
jax: 0.10.0
libtpu: 0.0.40
codegen_flags: <defaults>
</compile_context>

<pallas_src>
import jax
import jax.numpy as jnp
from jax.experimental import pallas as pl
from jax.experimental.pallas import tpu as pltpu  # noqa: F401  (kept for easy extension)


# ---------------------------------------------------------------------------
# Fused Pallas kernel (all GRU layers + FC + sigmoid), no grid, no scratch.
# ---------------------------------------------------------------------------
def _make_gru_model_kernel(n_layers, T, BP, HP):
    """Builds the fused kernel for fixed layer count / (padded) shapes.

    BP = batch padded to 8 sublanes, HP = 128 = per-gate padded lane width.
    Slab layout per layer: [W_ih (HP x 3HP)] [W_hh (HP x 3HP)] [bias block (8 x 3HP)]
    then for the head:     [W_fc (HP x 3HP)] [fc bias block (8 x 3HP)]
    Gate g occupies lanes [g*HP, g*HP + H); b_hr/b_hz are pre-folded into the bias row.
    """
    G = HP

    def kernel(x_ref, h0_ref, slab_ref, out_ref):
        row = 0
        layer_in = x_ref[...]                                    # (T*BP, HP)
        h = None
        for l in range(n_layers):
            wih = slab_ref[row:row + HP, :]                      # (HP, 3HP)
            row += HP
            whh = slab_ref[row:row + HP, :]                      # (HP, 3HP)
            row += HP
            bias_blk = slab_ref[row:row + 8, :]                  # (8, 3HP)
            row += 8
            bi = bias_blk[0:1, :]                                # [bir+bhr | biz+bhz | bin]
            # b_hn, pre-broadcast ONCE per layer (outside the unrolled time loop).
            bhn = jnp.broadcast_to(bias_blk[1:2, 2 * G:3 * G], (BP, G))

            # Hoisted input projection for the whole sequence: one big MXU matmul.
            gx = jnp.dot(layer_in, wih, preferred_element_type=jnp.float32) + bi

            h = h0_ref[l]                                        # (BP, HP)
            last_layer = (l + 1 == n_layers)
            hs = []
            for t in range(T):                                   # fully unrolled, static offsets
                gx_t = gx[t * BP:(t + 1) * BP, :]                # (BP, 3HP), aligned slice
                # Single fused recurrent matmul per step (the serial critical path).
                gh = jnp.dot(h, whh, preferred_element_type=jnp.float32)
                r_ = jax.nn.sigmoid(gx_t[:, 0:G] + gh[:, 0:G])
                z_ = jax.nn.sigmoid(gx_t[:, G:2 * G] + gh[:, G:2 * G])
                n_ = jnp.tanh(gx_t[:, 2 * G:3 * G] + r_ * (gh[:, 2 * G:3 * G] + bhn))
                h = (1.0 - z_) * n_ + z_ * h
                if not last_layer:
                    hs.append(h)                                 # stays in vregs
            # h_n for this layer: one full (8,128) unmasked store.
            out_ref[l * BP:(l + 1) * BP, :] = h
            if not last_layer:
                layer_in = jnp.concatenate(hs, axis=0)           # (T*BP, HP)

        # Fused FC + sigmoid on out[:, -1, :] == h_T of the top layer.
        wfc = slab_ref[row:row + HP, :]                          # real values in [:H, :O]
        row += HP
        fcb = slab_ref[row:row + 8, :]
        y = jnp.dot(h, wfc, preferred_element_type=jnp.float32)[:, 0:G] + fcb[0:1, 0:G]
        out_ref[n_layers * BP:(n_layers + 1) * BP, :] = jax.nn.sigmoid(y)

    return kernel


# ---------------------------------------------------------------------------
# Model wrapper
# ---------------------------------------------------------------------------
class GRUModelPallas:
    """Pallas re-implementation of TBM_MLv5 GRUModel.forward (single fused kernel)."""

    B_PAD = 8      # batch padded to the sublane tile
    HP = 128       # per-gate / hidden padded lane width

    def __init__(self, input_dim, hidden_dim, output_dim, n_layers, key):
        assert hidden_dim <= self.HP and input_dim <= self.HP and output_dim <= self.HP
        self.input_dim = input_dim
        self.hidden_dim = hidden_dim
        self.output_dim = output_dim
        self.n_layers = n_layers
        H, HP, O = hidden_dim, self.HP, output_dim
        k = 1.0 / jnp.sqrt(hidden_dim)

        def uni(key, shape):
            return jax.random.uniform(key, shape, jnp.float32, -k, k)

        # PyTorch-layout params (kept for the pure-JAX reference check).
        self.layer_params = []
        raw = []
        for layer in range(n_layers):
            d_in = input_dim if layer == 0 else hidden_dim
            key, *ks = jax.random.split(key, 5)
            w_ih = uni(ks[0], (3 * H, d_in))   # gates stacked r,z,n (PyTorch layout)
            w_hh = uni(ks[1], (3 * H, H))
            b_ih = uni(ks[2], (3 * H,))
            b_hh = uni(ks[3], (3 * H,))
            raw.append((w_ih, w_hh, b_ih, b_hh, d_in))
            self.layer_params.append((w_ih.T, w_hh.T,
                                      b_ih.reshape(1, 3 * H), b_hh.reshape(1, 3 * H)))

        key, k1, k2 = jax.random.split(key, 3)
        self.w_fc = uni(k1, (H, O))
        self.b_fc = uni(k2, (1, O))

        # ---- pack everything into ONE (8,128)-tiled, gate-padded f32 slab ----
        rows = n_layers * (2 * HP + 8) + HP + 8
        slab = jnp.zeros((rows, 3 * HP), jnp.float32)
        r = 0
        for (w_ih, w_hh, b_ih, b_hh, d_in) in raw:
            for g in range(3):
                slab = slab.at[r:r + d_in, g * HP:g * HP + H].set(
                    w_ih[g * H:(g + 1) * H, :].T)
            r += HP
            for g in range(3):
                slab = slab.at[r:r + H, g * HP:g * HP + H].set(
                    w_hh[g * H:(g + 1) * H, :].T)
            r += HP
            for g in range(3):
                b = b_ih[g * H:(g + 1) * H]
                if g < 2:                         # b_hr/b_hz only ever add to gx: fold in
                    b = b + b_hh[g * H:(g + 1) * H]
                slab = slab.at[r, g * HP:g * HP + H].set(b)
            slab = slab.at[r + 1, 2 * HP:2 * HP + H].set(b_hh[2 * H:3 * H])   # b_hn
            r += 8
        slab = slab.at[r:r + H, 0:O].set(self.w_fc)
        r += HP
        slab = slab.at[r, 0:O].set(self.b_fc[0])
        r += 8
        assert r == rows
        self.slab = slab

    def __call__(self, x, h):
        B, T, Din = x.shape
        H, L, O = self.hidden_dim, self.n_layers, self.output_dim
        BP, HP = self.B_PAD, self.HP
        assert B <= BP and Din == self.input_dim

        # Time-major, batch padded to 8 sublanes, features padded to 128 lanes, flattened
        # to 2-D so each time step is one aligned (8,128) sublane block.
        x_tm = jnp.transpose(x, (1, 0, 2))                                  # (T, B, Din)
        x_pad = jnp.zeros((T, BP, HP), jnp.float32).at[:, :B, :Din].set(x_tm)
        x_pad = x_pad.reshape(T * BP, HP)
        h0_pad = jnp.zeros((L, BP, HP), jnp.float32).at[:, :B, :H].set(h)

        kernel = _make_gru_model_kernel(L, T, BP, HP)
        out_slab = pl.pallas_call(
            kernel,
            out_shape=jax.ShapeDtypeStruct(((L + 1) * BP, HP), jnp.float32),
        )(x_pad, h0_pad, self.slab)

        h_n = out_slab[:L * BP].reshape(L, BP, HP)[:, :B, :H]
        out = out_slab[L * BP:L * BP + B, :O]
        return out, h_n

    def init_hidden(self, batch_size):
        return jnp.zeros((self.n_layers, batch_size, self.hidden_dim), jnp.float32)


# ---------------------------------------------------------------------------
# Pure-JAX reference (for correctness check)
# ---------------------------------------------------------------------------
def gru_model_ref(x, h0, layer_params, w_fc, b_fc):
    H = h0.shape[-1]
    inp = x
    h_finals = []
    for layer, (wih, whh, bi, bh) in enumerate(layer_params):
        def step(h, xt, wih=wih, whh=whh, bi=bi, bh=bh):
            gx = xt @ wih + bi[0]
            gh = h @ whh + bh[0]
            r = jax.nn.sigmoid(gx[:, :H] + gh[:, :H])
            z = jax.nn.sigmoid(gx[:, H:2 * H] + gh[:, H:2 * H])
            n = jnp.tanh(gx[:, 2 * H:] + r * gh[:, 2 * H:])
            hn = (1.0 - z) * n + z * h
            return hn, hn

        h_last, outs = jax.lax.scan(step, h0[layer], jnp.transpose(inp, (1, 0, 2)))
        inp = jnp.transpose(outs, (1, 0, 2))
        h_finals.append(h_last)
    out = jax.nn.sigmoid(inp[:, -1, :] @ w_fc + b_fc)
    return out, jnp.stack(h_finals, axis=0)


# ---------------------------------------------------------------------------
if __name__ == "__main__":
    INPUT_DIM, HIDDEN_DIM, OUTPUT_DIM, N_LAYERS = 16, 32, 4, 2
    BATCH, SEQ = 2, 8

    root = jax.random.PRNGKey(0)
    k_model, k_x = jax.random.split(root)

    model = GRUModelPallas(INPUT_DIM, HIDDEN_DIM, OUTPUT_DIM, N_LAYERS, k_model)
    x = jax.random.normal(k_x, (BATCH, SEQ, INPUT_DIM), jnp.float32)
    h0 = model.init_hidden(BATCH)

    out, h_n = model(x, h0)
    jax.block_until_ready((out, h_n))

    out_ref, h_ref = gru_model_ref(x, h0, model.layer_params, model.w_fc, model.b_fc)
    assert out.shape == (BATCH, OUTPUT_DIM)
    assert h_n.shape == (N_LAYERS, BATCH, HIDDEN_DIM)
    assert jnp.allclose(out, out_ref, atol=1e-4, rtol=1e-4)
    assert jnp.allclose(h_n, h_ref, atol=1e-4, rtol=1e-4)

    print("KERNEL_OK")
</pallas_src>

<mosaic_0001>
module attributes {stable_mosaic.version = 11 : i64} {
  func.func @kernel(%arg0: memref<64x128xf32, #tpu.memory_space<vmem>>, %arg1: memref<2x8x128xf32, #tpu.memory_space<vmem>>, %arg2: memref<664x384xf32, #tpu.memory_space<vmem>>, %arg3: memref<24x128xf32, #tpu.memory_space<vmem>>) attributes {dimension_semantics = [], scalar_prefetch = 0 : i64, scratch_operands = 0 : i64, tpu.core_type = #tpu.core_type<tc>} {
    %c0 = arith.constant 0 : index
    %c0_0 = arith.constant 0 : index
    %0 = vector.load %arg0[%c0, %c0_0] : memref<64x128xf32, #tpu.memory_space<vmem>>, vector<64x128xf32>
    %c0_1 = arith.constant 0 : index
    %c0_2 = arith.constant 0 : index
    %1 = vector.load %arg2[%c0_1, %c0_2] : memref<664x384xf32, #tpu.memory_space<vmem>>, vector<128x384xf32>
    %c128 = arith.constant 128 : index
    %c0_3 = arith.constant 0 : index
    %2 = vector.load %arg2[%c128, %c0_3] : memref<664x384xf32, #tpu.memory_space<vmem>>, vector<128x384xf32>
    %c256 = arith.constant 256 : index
    %c0_4 = arith.constant 0 : index
    %3 = vector.load %arg2[%c256, %c0_4] : memref<664x384xf32, #tpu.memory_space<vmem>>, vector<8x384xf32>
    %4 = vector.extract_strided_slice %3 {offsets = [0, 0], sizes = [1, 384], strides = [1, 1]} : vector<8x384xf32> to vector<1x384xf32>
    %5 = vector.extract_strided_slice %3 {offsets = [1, 256], sizes = [1, 128], strides = [1, 1]} : vector<8x384xf32> to vector<1x128xf32>
    %6 = vector.shape_cast %5 : vector<1x128xf32> to vector<1x128xf32>
    %7 = vector.broadcast %6 : vector<1x128xf32> to vector<8x128xf32>
    %cst = arith.constant dense<0.000000e+00> : vector<64x384xf32>
    %8 = tpu.matmul %0, %1, %cst {dimension_numbers = #tpu.dot_dimension_numbers<[1], [0], [0], [1], [0, 0, 1, 1], [], []>} : vector<64x128xf32>, vector<128x384xf32>, vector<64x384xf32> -> vector<64x384xf32>
    %9 = vector.broadcast %4 : vector<1x384xf32> to vector<64x384xf32>
    %10 = arith.addf %8, %9 : vector<64x384xf32>
    %c0_5 = arith.constant 0 : index
    %c0_6 = arith.constant 0 : index
    %c0_7 = arith.constant 0 : index
    %11 = vector.load %arg1[%c0_5, %c0_6, %c0_7] : memref<2x8x128xf32, #tpu.memory_space<vmem>>, vector<1x8x128xf32>
    %12 = vector.shape_cast %11 : vector<1x8x128xf32> to vector<8x128xf32>
    %13 = vector.extract_strided_slice %10 {offsets = [0, 0], sizes = [8, 384], strides = [1, 1]} : vector<64x384xf32> to vector<8x384xf32>
    %cst_8 = arith.constant dense<0.000000e+00> : vector<8x384xf32>
    %14 = tpu.matmul %12, %2, %cst_8 {dimension_numbers = #tpu.dot_dimension_numbers<[1], [0], [0], [1], [0, 0, 1, 1], [], []>} : vector<8x128xf32>, vector<128x384xf32>, vector<8x384xf32> -> vector<8x384xf32>
    %15 = vector.extract_strided_slice %13 {offsets = [0, 0], sizes = [8, 128], strides = [1, 1]} : vector<8x384xf32> to vector<8x128xf32>
    %16 = vector.extract_strided_slice %14 {offsets = [0, 0], sizes = [8, 128], strides = [1, 1]} : vector<8x384xf32> to vector<8x128xf32>
    %17 = arith.addf %15, %16 : vector<8x128xf32>
    %18 = arith.negf %17 : vector<8x128xf32>
    %19 = math.exp %18 : vector<8x128xf32>
    %cst_9 = arith.constant 1.000000e+00 : f32
    %20 = vector.broadcast %cst_9 : f32 to vector<8x128xf32>
    %21 = arith.addf %20, %19 : vector<8x128xf32>
    %22 = arith.divf %20, %21 : vector<8x128xf32>
    %23 = vector.extract_strided_slice %13 {offsets = [0, 128], sizes = [8, 128], strides = [1, 1]} : vector<8x384xf32> to vector<8x128xf32>
    %24 = vector.extract_strided_slice %14 {offsets = [0, 128], sizes = [8, 128], strides = [1, 1]} : vector<8x384xf32> to vector<8x128xf32>
    %25 = arith.addf %23, %24 : vector<8x128xf32>
    %26 = arith.negf %25 : vector<8x128xf32>
    %27 = math.exp %26 : vector<8x128xf32>
    %cst_10 = arith.constant 1.000000e+00 : f32
    %28 = vector.broadcast %cst_10 : f32 to vector<8x128xf32>
    %29 = arith.addf %28, %27 : vector<8x128xf32>
    %30 = arith.divf %28, %29 : vector<8x128xf32>
    %31 = vector.extract_strided_slice %13 {offsets = [0, 256], sizes = [8, 128], strides = [1, 1]} : vector<8x384xf32> to vector<8x128xf32>
    %32 = vector.extract_strided_slice %14 {offsets = [0, 256], sizes = [8, 128], strides = [1, 1]} : vector<8x384xf32> to vector<8x128xf32>
    %33 = arith.addf %32, %7 : vector<8x128xf32>
    %34 = arith.mulf %22, %33 : vector<8x128xf32>
    %35 = arith.addf %31, %34 : vector<8x128xf32>
    %36 = math.tanh %35 : vector<8x128xf32>
    %cst_11 = arith.constant 1.000000e+00 : f32
    %37 = vector.broadcast %cst_11 : f32 to vector<8x128xf32>
    %38 = arith.subf %37, %30 : vector<8x128xf32>
    %39 = arith.mulf %38, %36 : vector<8x128xf32>
    %40 = arith.mulf %30, %12 : vector<8x128xf32>
    %41 = arith.addf %39, %40 : vector<8x128xf32>
    %42 = vector.extract_strided_slice %10 {offsets = [8, 0], sizes = [8, 384], strides = [1, 1]} : vector<64x384xf32> to vector<8x384xf32>
    %cst_12 = arith.constant dense<0.000000e+00> : vector<8x384xf32>
    %43 = tpu.matmul %41, %2, %cst_12 {dimension_numbers = #tpu.dot_dimension_numbers<[1], [0], [0], [1], [0, 0, 1, 1], [], []>} : vector<8x128xf32>, vector<128x384xf32>, vector<8x384xf32> -> vector<8x384xf32>
    %44 = vector.extract_strided_slice %42 {offsets = [0, 0], sizes = [8, 128], strides = [1, 1]} : vector<8x384xf32> to vector<8x128xf32>
    %45 = vector.extract_strided_slice %43 {offsets = [0, 0], sizes = [8, 128], strides = [1, 1]} : vector<8x384xf32> to vector<8x128xf32>
    %46 = arith.addf %44, %45 : vector<8x128xf32>
    %47 = arith.negf %46 : vector<8x128xf32>
    %48 = math.exp %47 : vector<8x128xf32>
    %cst_13 = arith.constant 1.000000e+00 : f32
    %49 = vector.broadcast %cst_13 : f32 to vector<8x128xf32>
    %50 = arith.addf %49, %48 : vector<8x128xf32>
    %51 = arith.divf %49, %50 : vector<8x128xf32>
    %52 = vector.extract_strided_slice %42 {offsets = [0, 128], sizes = [8, 128], strides = [1, 1]} : vector<8x384xf32> to vector<8x128xf32>
    %53 = vector.extract_strided_slice %43 {offsets = [0, 128], sizes = [8, 128], strides = [1, 1]} : vector<8x384xf32> to vector<8x128xf32>
    %54 = arith.addf %52, %53 : vector<8x128xf32>
    %55 = arith.negf %54 : vector<8x128xf32>
    %56 = math.exp %55 : vector<8x128xf32>
    %cst_14 = arith.constant 1.000000e+00 : f32
    %57 = vector.broadcast %cst_14 : f32 to vector<8x128xf32>
    %58 = arith.addf %57, %56 : vector<8x128xf32>
    %59 = arith.divf %57, %58 : vector<8x128xf32>
    %60 = vector.extract_strided_slice %42 {offsets = [0, 256], sizes = [8, 128], strides = [1, 1]} : vector<8x384xf32> to vector<8x128xf32>
    %61 = vector.extract_strided_slice %43 {offsets = [0, 256], sizes = [8, 128], strides = [1, 1]} : vector<8x384xf32> to vector<8x128xf32>
    %62 = arith.addf %61, %7 : vector<8x128xf32>
    %63 = arith.mulf %51, %62 : vector<8x128xf32>
    %64 = arith.addf %60, %63 : vector<8x128xf32>
    %65 = math.tanh %64 : vector<8x128xf32>
    %cst_15 = arith.constant 1.000000e+00 : f32
    %66 = vector.broadcast %cst_15 : f32 to vector<8x128xf32>
    %67 = arith.subf %66, %59 : vector<8x128xf32>
    %68 = arith.mulf %67, %65 : vector<8x128xf32>
    %69 = arith.mulf %59, %41 : vector<8x128xf32>
    %70 = arith.addf %68, %69 : vector<8x128xf32>
    %71 = vector.extract_strided_slice %10 {offsets = [16, 0], sizes = [8, 384], strides = [1, 1]} : vector<64x384xf32> to vector<8x384xf32>
    %cst_16 = arith.constant dense<0.000000e+00> : vector<8x384xf32>
    %72 = tpu.matmul %70, %2, %cst_16 {dimension_numbers = #tpu.dot_dimension_numbers<[1], [0], [0], [1], [0, 0, 1, 1], [], []>} : vector<8x128xf32>, vector<128x384xf32>, vector<8x384xf32> -> vector<8x384xf32>
    %73 = vector.extract_strided_slice %71 {offsets = [0, 0], sizes = [8, 128], strides = [1, 1]} : vector<8x384xf32> to vector<8x128xf32>
    %74 = vector.extract_strided_slice %72 {offsets = [0, 0], sizes = [8, 128], strides = [1, 1]} : vector<8x384xf32> to vector<8x128xf32>
    %75 = arith.addf %73, %74 : vector<8x128xf32>
    %76 = arith.negf %75 : vector<8x128xf32>
    %77 = math.exp %76 : vector<8x128xf32>
    %cst_17 = arith.constant 1.000000e+00 : f32
    %78 = vector.broadcast %cst_17 : f32 to vector<8x128xf32>
    %79 = arith.addf %78, %77 : vector<8x128xf32>
    %80 = arith.divf %78, %79 : vector<8x128xf32>
    %81 = vector.extract_strided_slice %71 {offsets = [0, 128], sizes = [8, 128], strides = [1, 1]} : vector<8x384xf32> to vector<8x128xf32>
    %82 = vector.extract_strided_slice %72 {offsets = [0, 128], sizes = [8, 128], strides = [1, 1]} : vector<8x384xf32> to vector<8x128xf32>
    %83 = arith.addf %81, %82 : vector<8x128xf32>
    %84 = arith.negf %83 : vector<8x128xf32>
    %85 = math.exp %84 : vector<8x128xf32>
    %cst_18 = arith.constant 1.000000e+00 : f32
    %86 = vector.broadcast %cst_18 : f32 to vector<8x128xf32>
    %87 = arith.addf %86, %85 : vector<8x128xf32>
    %88 = arith.divf %86, %87 : vector<8x128xf32>
    %89 = vector.extract_strided_slice %71 {offsets = [0, 256], sizes = [8, 128], strides = [1, 1]} : vector<8x384xf32> to vector<8x128xf32>
    %90 = vector.extract_strided_slice %72 {offsets = [0, 256], sizes = [8, 128], strides = [1, 1]} : vector<8x384xf32> to vector<8x128xf32>
    %91 = arith.addf %90, %7 : vector<8x128xf32>
    %92 = arith.mulf %80, %91 : vector<8x128xf32>
    %93 = arith.addf %89, %92 : vector<8x128xf32>
    %94 = math.tanh %93 : vector<8x128xf32>
    %cst_19 = arith.constant 1.000000e+00 : f32
    %95 = vector.broadcast %cst_19 : f32 to vector<8x128xf32>
    %96 = arith.subf %95, %88 : vector<8x128xf32>
    %97 = arith.mulf %96, %94 : vector<8x128xf32>
    %98 = arith.mulf %88, %70 : vector<8x128xf32>
    %99 = arith.addf %97, %98 : vector<8x128xf32>
    %100 = vector.extract_strided_slice %10 {offsets = [24, 0], sizes = [8, 384], strides = [1, 1]} : vector<64x384xf32> to vector<8x384xf32>
    %cst_20 = arith.constant dense<0.000000e+00> : vector<8x384xf32>
    %101 = tpu.matmul %99, %2, %cst_20 {dimension_numbers = #tpu.dot_dimension_numbers<[1], [0], [0], [1], [0, 0, 1, 1], [], []>} : vector<8x128xf32>, vector<128x384xf32>, vector<8x384xf32> -> vector<8x384xf32>
    %102 = vector.extract_strided_slice %100 {offsets = [0, 0], sizes = [8, 128], strides = [1, 1]} : vector<8x384xf32> to vector<8x128xf32>
    %103 = vector.extract_strided_slice %101 {offsets = [0, 0], sizes = [8, 128], strides = [1, 1]} : vector<8x384xf32> to vector<8x128xf32>
    %104 = arith.addf %102, %103 : vector<8x128xf32>
    %105 = arith.negf %104 : vector<8x128xf32>
    %106 = math.exp %105 : vector<8x128xf32>
    %cst_21 = arith.constant 1.000000e+00 : f32
    %107 = vector.broadcast %cst_21 : f32 to vector<8x128xf32>
    %108 = arith.addf %107, %106 : vector<8x128xf32>
    %109 = arith.divf %107, %108 : vector<8x128xf32>
    %110 = vector.extract_strided_slice %100 {offsets = [0, 128], sizes = [8, 128], strides = [1, 1]} : vector<8x384xf32> to vector<8x128xf32>
    %111 = vector.extract_strided_slice %101 {offsets = [0, 128], sizes = [8, 128], strides = [1, 1]} : vector<8x384xf32> to vector<8x128xf32>
    %112 = arith.addf %110, %111 : vector<8x128xf32>
    %113 = arith.negf %112 : vector<8x128xf32>
    %114 = math.exp %113 : vector<8x128xf32>
    %cst_22 = arith.constant 1.000000e+00 : f32
    %115 = vector.broadcast %cst_22 : f32 to vector<8x128xf32>
    %116 = arith.addf %115, %114 : vector<8x128xf32>
    %117 = arith.divf %115, %116 : vector<8x128xf32>
    %118 = vector.extract_strided_slice %100 {offsets = [0, 256], sizes = [8, 128], strides = [1, 1]} : vector<8x384xf32> to vector<8x128xf32>
    %119 = vector.extract_strided_slice %101 {offsets = [0, 256], sizes = [8, 128], strides = [1, 1]} : vector<8x384xf32> to vector<8x128xf32>
    %120 = arith.addf %119, %7 : vector<8x128xf32>
    %121 = arith.mulf %109, %120 : vector<8x128xf32>
    %122 = arith.addf %118, %121 : vector<8x128xf32>
    %123 = math.tanh %122 : vector<8x128xf32>
    %cst_23 = arith.constant 1.000000e+00 : f32
    %124 = vector.broadcast %cst_23 : f32 to vector<8x128xf32>
    %125 = arith.subf %124, %117 : vector<8x128xf32>
    %126 = arith.mulf %125, %123 : vector<8x128xf32>
    %127 = arith.mulf %117, %99 : vector<8x128xf32>
    %128 = arith.addf %126, %127 : vector<8x128xf32>
    %129 = vector.extract_strided_slice %10 {offsets = [32, 0], sizes = [8, 384], strides = [1, 1]} : vector<64x384xf32> to vector<8x384xf32>
    %cst_24 = arith.constant dense<0.000000e+00> : vector<8x384xf32>
    %130 = tpu.matmul %128, %2, %cst_24 {dimension_numbers = #tpu.dot_dimension_numbers<[1], [0], [0], [1], [0, 0, 1, 1], [], []>} : vector<8x128xf32>, vector<128x384xf32>, vector<8x384xf32> -> vector<8x384xf32>
    %131 = vector.extract_strided_slice %129 {offsets = [0, 0], sizes = [8, 128], strides = [1, 1]} : vector<8x384xf32> to vector<8x128xf32>
    %132 = vector.extract_strided_slice %130 {offsets = [0, 0], sizes = [8, 128], strides = [1, 1]} : vector<8x384xf32> to vector<8x128xf32>
    %133 = arith.addf %131, %132 : vector<8x128xf32>
    %134 = arith.negf %133 : vector<8x128xf32>
    %135 = math.exp %134 : vector<8x128xf32>
    %cst_25 = arith.constant 1.000000e+00 : f32
    %136 = vector.broadcast %cst_25 : f32 to vector<8x128xf32>
    %137 = arith.addf %136, %135 : vector<8x128xf32>
    %138 = arith.divf %136, %137 : vector<8x128xf32>
    %139 = vector.extract_strided_slice %129 {offsets = [0, 128], sizes = [8, 128], strides = [1, 1]} : vector<8x384xf32> to vector<8x128xf32>
    %140 = vector.extract_strided_slice %130 {offsets = [0, 128], sizes = [8, 128], strides = [1, 1]} : vector<8x384xf32> to vector<8x128xf32>
    %141 = arith.addf %139, %140 : vector<8x128xf32>
    %142 = arith.negf %141 : vector<8x128xf32>
    %143 = math.exp %142 : vector<8x128xf32>
    %cst_26 = arith.constant 1.000000e+00 : f32
    %144 = vector.broadcast %cst_26 : f32 to vector<8x128xf32>
    %145 = arith.addf %144, %143 : vector<8x128xf32>
    %146 = arith.divf %144, %145 : vector<8x128xf32>
    %147 = vector.extract_strided_slice %129 {offsets = [0, 256], sizes = [8, 128], strides = [1, 1]} : vector<8x384xf32> to vector<8x128xf32>
    %148 = vector.extract_strided_slice %130 {offsets = [0, 256], sizes = [8, 128], strides = [1, 1]} : vector<8x384xf32> to vector<8x128xf32>
    %149 = arith.addf %148, %7 : vector<8x128xf32>
    %150 = arith.mulf %138, %149 : vector<8x128xf32>
    %151 = arith.addf %147, %150 : vector<8x128xf32>
    %152 = math.tanh %151 : vector<8x128xf32>
    %cst_27 = arith.constant 1.000000e+00 : f32
    %153 = vector.broadcast %cst_27 : f32 to vector<8x128xf32>
    %154 = arith.subf %153, %146 : vector<8x128xf32>
    %155 = arith.mulf %154, %152 : vector<8x128xf32>
    %156 = arith.mulf %146, %128 : vector<8x128xf32>
    %157 = arith.addf %155, %156 : vector<8x128xf32>
    %158 = vector.extract_strided_slice %10 {offsets = [40, 0], sizes = [8, 384], strides = [1, 1]} : vector<64x384xf32> to vector<8x384xf32>
    %cst_28 = arith.constant dense<0.000000e+00> : vector<8x384xf32>
    %159 = tpu.matmul %157, %2, %cst_28 {dimension_numbers = #tpu.dot_dimension_numbers<[1], [0], [0], [1], [0, 0, 1, 1], [], []>} : vector<8x128xf32>, vector<128x384xf32>, vector<8x384xf32> -> vector<8x384xf32>
    %160 = vector.extract_strided_slice %158 {offsets = [0, 0], sizes = [8, 128], strides = [1, 1]} : vector<8x384xf32> to vector<8x128xf32>
    %161 = vector.extract_strided_slice %159 {offsets = [0, 0], sizes = [8, 128], strides = [1, 1]} : vector<8x384xf32> to vector<8x128xf32>
    %162 = arith.addf %160, %161 : vector<8x128xf32>
    %163 = arith.negf %162 : vector<8x128xf32>
    %164 = math.exp %163 : vector<8x128xf32>
    %cst_29 = arith.constant 1.000000e+00 : f32
    %165 = vector.broadcast %cst_29 : f32 to vector<8x128xf32>
    %166 = arith.addf %165, %164 : vector<8x128xf32>
    %167 = arith.divf %165, %166 : vector<8x128xf32>
    %168 = vector.extract_strided_slice %158 {offsets = [0, 128], sizes = [8, 128], strides = [1, 1]} : vector<8x384xf32> to vector<8x128xf32>
    %169 = vector.extract_strided_slice %159 {offsets = [0, 128], sizes = [8, 128], strides = [1, 1]} : vector<8x384xf32> to vector<8x128xf32>
    %170 = arith.addf %168, %169 : vector<8x128xf32>
    %171 = arith.negf %170 : vector<8x128xf32>
    %172 = math.exp %171 : vector<8x128xf32>
    %cst_30 = arith.constant 1.000000e+00 : f32
    %173 = vector.broadcast %cst_30 : f32 to vector<8x128xf32>
    %174 = arith.addf %173, %172 : vector<8x128xf32>
    %175 = arith.divf %173, %174 : vector<8x128xf32>
    %176 = vector.extract_strided_slice %158 {offsets = [0, 256], sizes = [8, 128], strides = [1, 1]} : vector<8x384xf32> to vector<8x128xf32>
    %177 = vector.extract_strided_slice %159 {offsets = [0, 256], sizes = [8, 128], strides = [1, 1]} : vector<8x384xf32> to vector<8x128xf32>
    %178 = arith.addf %177, %7 : vector<8x128xf32>
    %179 = arith.mulf %167, %178 : vector<8x128xf32>
    %180 = arith.addf %176, %179 : vector<8x128xf32>
    %181 = math.tanh %180 : vector<8x128xf32>
    %cst_31 = arith.constant 1.000000e+00 : f32
    %182 = vector.broadcast %cst_31 : f32 to vector<8x128xf32>
    %183 = arith.subf %182, %175 : vector<8x128xf32>
    %184 = arith.mulf %183, %181 : vector<8x128xf32>
    %185 = arith.mulf %175, %157 : vector<8x128xf32>
    %186 = arith.addf %184, %185 : vector<8x128xf32>
    %187 = vector.extract_strided_slice %10 {offsets = [48, 0], sizes = [8, 384], strides = [1, 1]} : vector<64x384xf32> to vector<8x384xf32>
    %cst_32 = arith.constant dense<0.000000e+00> : vector<8x384xf32>
    %188 = tpu.matmul %186, %2, %cst_32 {dimension_numbers = #tpu.dot_dimension_numbers<[1], [0], [0], [1], [0, 0, 1, 1], [], []>} : vector<8x128xf32>, vector<128x384xf32>, vector<8x384xf32> -> vector<8x384xf32>
    %189 = vector.extract_strided_slice %187 {offsets = [0, 0], sizes = [8, 128], strides = [1, 1]} : vector<8x384xf32> to vector<8x128xf32>
    %190 = vector.extract_strided_slice %188 {offsets = [0, 0], sizes = [8, 128], strides = [1, 1]} : vector<8x384xf32> to vector<8x128xf32>
    %191 = arith.addf %189, %190 : vector<8x128xf32>
    %192 = arith.negf %191 : vector<8x128xf32>
    %193 = math.exp %192 : vector<8x128xf32>
    %cst_33 = arith.constant 1.000000e+00 : f32
    %194 = vector.broadcast %cst_33 : f32 to vector<8x128xf32>
    %195 = arith.addf %194, %193 : vector<8x128xf32>
    %196 = arith.divf %194, %195 : vector<8x128xf32>
    %197 = vector.extract_strided_slice %187 {offsets = [0, 128], sizes = [8, 128], strides = [1, 1]} : vector<8x384xf32> to vector<8x128xf32>
    %198 = vector.extract_strided_slice %188 {offsets = [0, 128], sizes = [8, 128], strides = [1, 1]} : vector<8x384xf32> to vector<8x128xf32>
    %199 = arith.addf %197, %198 : vector<8x128xf32>
    %200 = arith.negf %199 : vector<8x128xf32>
    %201 = math.exp %200 : vector<8x128xf32>
    %cst_34 = arith.constant 1.000000e+00 : f32
    %202 = vector.broadcast %cst_34 : f32 to vector<8x128xf32>
    %203 = arith.addf %202, %201 : vector<8x128xf32>
    %204 = arith.divf %202, %203 : vector<8x128xf32>
    %205 = vector.extract_strided_slice %187 {offsets = [0, 256], sizes = [8, 128], strides = [1, 1]} : vector<8x384xf32> to vector<8x128xf32>
    %206 = vector.extract_strided_slice %188 {offsets = [0, 256], sizes = [8, 128], strides = [1, 1]} : vector<8x384xf32> to vector<8x128xf32>
    %207 = arith.addf %206, %7 : vector<8x128xf32>
    %208 = arith.mulf %196, %207 : vector<8x128xf32>
    %209 = arith.addf %205, %208 : vector<8x128xf32>
    %210 = math.tanh %209 : vector<8x128xf32>
    %cst_35 = arith.constant 1.000000e+00 : f32
    %211 = vector.broadcast %cst_35 : f32 to vector<8x128xf32>
    %212 = arith.subf %211, %204 : vector<8x128xf32>
    %213 = arith.mulf %212, %210 : vector<8x128xf32>
    %214 = arith.mulf %204, %186 : vector<8x128xf32>
    %215 = arith.addf %213, %214 : vector<8x128xf32>
    %216 = vector.extract_strided_slice %10 {offsets = [56, 0], sizes = [8, 384], strides = [1, 1]} : vector<64x384xf32> to vector<8x384xf32>
    %cst_36 = arith.constant dense<0.000000e+00> : vector<8x384xf32>
    %217 = tpu.matmul %215, %2, %cst_36 {dimension_numbers = #tpu.dot_dimension_numbers<[1], [0], [0], [1], [0, 0, 1, 1], [], []>} : vector<8x128xf32>, vector<128x384xf32>, vector<8x384xf32> -> vector<8x384xf32>
    %218 = vector.extract_strided_slice %216 {offsets = [0, 0], sizes = [8, 128], strides = [1, 1]} : vector<8x384xf32> to vector<8x128xf32>
    %219 = vector.extract_strided_slice %217 {offsets = [0, 0], sizes = [8, 128], strides = [1, 1]} : vector<8x384xf32> to vector<8x128xf32>
    %220 = arith.addf %218, %219 : vector<8x128xf32>
    %221 = arith.negf %220 : vector<8x128xf32>
    %222 = math.exp %221 : vector<8x128xf32>
    %cst_37 = arith.constant 1.000000e+00 : f32
    %223 = vector.broadcast %cst_37 : f32 to vector<8x128xf32>
    %224 = arith.addf %223, %222 : vector<8x128xf32>
    %225 = arith.divf %223, %224 : vector<8x128xf32>
    %226 = vector.extract_strided_slice %216 {offsets = [0, 128], sizes = [8, 128], strides = [1, 1]} : vector<8x384xf32> to vector<8x128xf32>
    %227 = vector.extract_strided_slice %217 {offsets = [0, 128], sizes = [8, 128], strides = [1, 1]} : vector<8x384xf32> to vector<8x128xf32>
    %228 = arith.addf %226, %227 : vector<8x128xf32>
    %229 = arith.negf %228 : vector<8x128xf32>
    %230 = math.exp %229 : vector<8x128xf32>
    %cst_38 = arith.constant 1.000000e+00 : f32
    %231 = vector.broadcast %cst_38 : f32 to vector<8x128xf32>
    %232 = arith.addf %231, %230 : vector<8x128xf32>
    %233 = arith.divf %231, %232 : vector<8x128xf32>
    %234 = vector.extract_strided_slice %216 {offsets = [0, 256], sizes = [8, 128], strides = [1, 1]} : vector<8x384xf32> to vector<8x128xf32>
    %235 = vector.extract_strided_slice %217 {offsets = [0, 256], sizes = [8, 128], strides = [1, 1]} : vector<8x384xf32> to vector<8x128xf32>
    %236 = arith.addf %235, %7 : vector<8x128xf32>
    %237 = arith.mulf %225, %236 : vector<8x128xf32>
    %238 = arith.addf %234, %237 : vector<8x128xf32>
    %239 = math.tanh %238 : vector<8x128xf32>
    %cst_39 = arith.constant 1.000000e+00 : f32
    %240 = vector.broadcast %cst_39 : f32 to vector<8x128xf32>
    %241 = arith.subf %240, %233 : vector<8x128xf32>
    %242 = arith.mulf %241, %239 : vector<8x128xf32>
    %243 = arith.mulf %233, %215 : vector<8x128xf32>
    %244 = arith.addf %242, %243 : vector<8x128xf32>
    %c0_40 = arith.constant 0 : index
    %c0_41 = arith.constant 0 : index
    %245 = vector.load %arg3[%c0_40, %c0_41] : memref<24x128xf32, #tpu.memory_space<vmem>>, vector<8x128xf32>
    tpu.vector_store %arg3[%c0_40, %c0_41], %244 {strides = array<i32>} : memref<24x128xf32, #tpu.memory_space<vmem>>, vector<8x128xf32>,
    %246 = tpu.concatenate %41, %70, %99, %128, %157, %186, %215, %244 in 0 : vector<8x128xf32>, vector<8x128xf32>, vector<8x128xf32>, vector<8x128xf32>, vector<8x128xf32>, vector<8x128xf32>, vector<8x128xf32>, vector<8x128xf32> -> vector<64x128xf32>
    %c264 = arith.constant 264 : index
    %c0_42 = arith.constant 0 : index
    %247 = vector.load %arg2[%c264, %c0_42] : memref<664x384xf32, #tpu.memory_space<vmem>>, vector<128x384xf32>
    %c392 = arith.constant 392 : index
    %c0_43 = arith.constant 0 : index
    %248 = vector.load %arg2[%c392, %c0_43] : memref<664x384xf32, #tpu.memory_space<vmem>>, vector<128x384xf32>
    %c520 = arith.constant 520 : index
    %c0_44 = arith.constant 0 : index
    %249 = vector.load %arg2[%c520, %c0_44] : memref<664x384xf32, #tpu.memory_space<vmem>>, vector<8x384xf32>
    %250 = vector.extract_strided_slice %249 {offsets = [0, 0], sizes = [1, 384], strides = [1, 1]} : vector<8x384xf32> to vector<1x384xf32>
    %251 = vector.extract_strided_slice %249 {offsets = [1, 256], sizes = [1, 128], strides = [1, 1]} : vector<8x384xf32> to vector<1x128xf32>
    %252 = vector.shape_cast %251 : vector<1x128xf32> to vector<1x128xf32>
    %253 = vector.broadcast %252 : vector<1x128xf32> to vector<8x128xf32>
    %cst_45 = arith.constant dense<0.000000e+00> : vector<64x384xf32>
    %254 = tpu.matmul %246, %247, %cst_45 {dimension_numbers = #tpu.dot_dimension_numbers<[1], [0], [0], [1], [0, 0, 1, 1], [], []>} : vector<64x128xf32>, vector<128x384xf32>, vector<64x384xf32> -> vector<64x384xf32>
    %255 = vector.broadcast %250 : vector<1x384xf32> to vector<64x384xf32>
    %256 = arith.addf %254, %255 : vector<64x384xf32>
    %c1 = arith.constant 1 : index
    %c0_46 = arith.constant 0 : index
    %c0_47 = arith.constant 0 : index
    %257 = vector.load %arg1[%c1, %c0_46, %c0_47] : memref<2x8x128xf32, #tpu.memory_space<vmem>>, vector<1x8x128xf32>
    %258 = vector.shape_cast %257 : vector<1x8x128xf32> to vector<8x128xf32>
    %259 = vector.extract_strided_slice %256 {offsets = [0, 0], sizes = [8, 384], strides = [1, 1]} : vector<64x384xf32> to vector<8x384xf32>
    %cst_48 = arith.constant dense<0.000000e+00> : vector<8x384xf32>
    %260 = tpu.matmul %258, %248, %cst_48 {dimension_numbers = #tpu.dot_dimension_numbers<[1], [0], [0], [1], [0, 0, 1, 1], [], []>} : vector<8x128xf32>, vector<128x384xf32>, vector<8x384xf32> -> vector<8x384xf32>
    %261 = vector.extract_strided_slice %259 {offsets = [0, 0], sizes = [8, 128], strides = [1, 1]} : vector<8x384xf32> to vector<8x128xf32>
    %262 = vector.extract_strided_slice %260 {offsets = [0, 0], sizes = [8, 128], strides = [1, 1]} : vector<8x384xf32> to vector<8x128xf32>
    %263 = arith.addf %261, %262 : vector<8x128xf32>
    %264 = arith.negf %263 : vector<8x128xf32>
    %265 = math.exp %264 : vector<8x128xf32>
    %cst_49 = arith.constant 1.000000e+00 : f32
    %266 = vector.broadcast %cst_49 : f32 to vector<8x128xf32>
    %267 = arith.addf %266, %265 : vector<8x128xf32>
    %268 = arith.divf %266, %267 : vector<8x128xf32>
    %269 = vector.extract_strided_slice %259 {offsets = [0, 128], sizes = [8, 128], strides = [1, 1]} : vector<8x384xf32> to vector<8x128xf32>
    %270 = vector.extract_strided_slice %260 {offsets = [0, 128], sizes = [8, 128], strides = [1, 1]} : vector<8x384xf32> to vector<8x128xf32>
    %271 = arith.addf %269, %270 : vector<8x128xf32>
    %272 = arith.negf %271 : vector<8x128xf32>
    %273 = math.exp %272 : vector<8x128xf32>
    %cst_50 = arith.constant 1.000000e+00 : f32
    %274 = vector.broadcast %cst_50 : f32 to vector<8x128xf32>
    %275 = arith.addf %274, %273 : vector<8x128xf32>
    %276 = arith.divf %274, %275 : vector<8x128xf32>
    %277 = vector.extract_strided_slice %259 {offsets = [0, 256], sizes = [8, 128], strides = [1, 1]} : vector<8x384xf32> to vector<8x128xf32>
    %278 = vector.extract_strided_slice %260 {offsets = [0, 256], sizes = [8, 128], strides = [1, 1]} : vector<8x384xf32> to vector<8x128xf32>
    %279 = arith.addf %278, %253 : vector<8x128xf32>
    %280 = arith.mulf %268, %279 : vector<8x128xf32>
    %281 = arith.addf %277, %280 : vector<8x128xf32>
    %282 = math.tanh %281 : vector<8x128xf32>
    %cst_51 = arith.constant 1.000000e+00 : f32
    %283 = vector.broadcast %cst_51 : f32 to vector<8x128xf32>
    %284 = arith.subf %283, %276 : vector<8x128xf32>
    %285 = arith.mulf %284, %282 : vector<8x128xf32>
    %286 = arith.mulf %276, %258 : vector<8x128xf32>
    %287 = arith.addf %285, %286 : vector<8x128xf32>
    %288 = vector.extract_strided_slice %256 {offsets = [8, 0], sizes = [8, 384], strides = [1, 1]} : vector<64x384xf32> to vector<8x384xf32>
    %cst_52 = arith.constant dense<0.000000e+00> : vector<8x384xf32>
    %289 = tpu.matmul %287, %248, %cst_52 {dimension_numbers = #tpu.dot_dimension_numbers<[1], [0], [0], [1], [0, 0, 1, 1], [], []>} : vector<8x128xf32>, vector<128x384xf32>, vector<8x384xf32> -> vector<8x384xf32>
    %290 = vector.extract_strided_slice %288 {offsets = [0, 0], sizes = [8, 128], strides = [1, 1]} : vector<8x384xf32> to vector<8x128xf32>
    %291 = vector.extract_strided_slice %289 {offsets = [0, 0], sizes = [8, 128], strides = [1, 1]} : vector<8x384xf32> to vector<8x128xf32>
    %292 = arith.addf %290, %291 : vector<8x128xf32>
    %293 = arith.negf %292 : vector<8x128xf32>
    %294 = math.exp %293 : vector<8x128xf32>
    %cst_53 = arith.constant 1.000000e+00 : f32
    %295 = vector.broadcast %cst_53 : f32 to vector<8x128xf32>
    %296 = arith.addf %295, %294 : vector<8x128xf32>
    %297 = arith.divf %295, %296 : vector<8x128xf32>
    %298 = vector.extract_strided_slice %288 {offsets = [0, 128], sizes = [8, 128], strides = [1, 1]} : vector<8x384xf32> to vector<8x128xf32>
    %299 = vector.extract_strided_slice %289 {offsets = [0, 128], sizes = [8, 128], strides = [1, 1]} : vector<8x384xf32> to vector<8x128xf32>
    %300 = arith.addf %298, %299 : vector<8x128xf32>
    %301 = arith.negf %300 : vector<8x128xf32>
    %302 = math.exp %301 : vector<8x128xf32>
    %cst_54 = arith.constant 1.000000e+00 : f32
    %303 = vector.broadcast %cst_54 : f32 to vector<8x128xf32>
    %304 = arith.addf %303, %302 : vector<8x128xf32>
    %305 = arith.divf %303, %304 : vector<8x128xf32>
    %306 = vector.extract_strided_slice %288 {offsets = [0, 256], sizes = [8, 128], strides = [1, 1]} : vector<8x384xf32> to vector<8x128xf32>
    %307 = vector.extract_strided_slice %289 {offsets = [0, 256], sizes = [8, 128], strides = [1, 1]} : vector<8x384xf32> to vector<8x128xf32>
    %308 = arith.addf %307, %253 : vector<8x128xf32>
    %309 = arith.mulf %297, %308 : vector<8x128xf32>
    %310 = arith.addf %306, %309 : vector<8x128xf32>
    %311 = math.tanh %310 : vector<8x128xf32>
    %cst_55 = arith.constant 1.000000e+00 : f32
    %312 = vector.broadcast %cst_55 : f32 to vector<8x128xf32>
    %313 = arith.subf %312, %305 : vector<8x128xf32>
    %314 = arith.mulf %313, %311 : vector<8x128xf32>
    %315 = arith.mulf %305, %287 : vector<8x128xf32>
    %316 = arith.addf %314, %315 : vector<8x128xf32>
    %317 = vector.extract_strided_slice %256 {offsets = [16, 0], sizes = [8, 384], strides = [1, 1]} : vector<64x384xf32> to vector<8x384xf32>
    %cst_56 = arith.constant dense<0.000000e+00> : vector<8x384xf32>
    %318 = tpu.matmul %316, %248, %cst_56 {dimension_numbers = #tpu.dot_dimension_numbers<[1], [0], [0], [1], [0, 0, 1, 1], [], []>} : vector<8x128xf32>, vector<128x384xf32>, vector<8x384xf32> -> vector<8x384xf32>
    %319 = vector.extract_strided_slice %317 {offsets = [0, 0], sizes = [8, 128], strides = [1, 1]} : vector<8x384xf32> to vector<8x128xf32>
    %320 = vector.extract_strided_slice %318 {offsets = [0, 0], sizes = [8, 128], strides = [1, 1]} : vector<8x384xf32> to vector<8x128xf32>
    %321 = arith.addf %319, %320 : vector<8x128xf32>
    %322 = arith.negf %321 : vector<8x128xf32>
    %323 = math.exp %322 : vector<8x128xf32>
    %cst_57 = arith.constant 1.000000e+00 : f32
    %324 = vector.broadcast %cst_57 : f32 to vector<8x128xf32>
    %325 = arith.addf %324, %323 : vector<8x128xf32>
    %326 = arith.divf %324, %325 : vector<8x128xf32>
    %327 = vector.extract_strided_slice %317 {offsets = [0, 128], sizes = [8, 128], strides = [1, 1]} : vector<8x384xf32> to vector<8x128xf32>
    %328 = vector.extract_strided_slice %318 {offsets = [0, 128], sizes = [8, 128], strides = [1, 1]} : vector<8x384xf32> to vector<8x128xf32>
    %329 = arith.addf %327, %328 : vector<8x128xf32>
    %330 = arith.negf %329 : vector<8x128xf32>
    %331 = math.exp %330 : vector<8x128xf32>
    %cst_58 = arith.constant 1.000000e+00 : f32
    %332 = vector.broadcast %cst_58 : f32 to vector<8x128xf32>
    %333 = arith.addf %332, %331 : vector<8x128xf32>
    %334 = arith.divf %332, %333 : vector<8x128xf32>
    %335 = vector.extract_strided_slice %317 {offsets = [0, 256], sizes = [8, 128], strides = [1, 1]} : vector<8x384xf32> to vector<8x128xf32>
    %336 = vector.extract_strided_slice %318 {offsets = [0, 256], sizes = [8, 128], strides = [1, 1]} : vector<8x384xf32> to vector<8x128xf32>
    %337 = arith.addf %336, %253 : vector<8x128xf32>
    %338 = arith.mulf %326, %337 : vector<8x128xf32>
    %339 = arith.addf %335, %338 : vector<8x128xf32>
    %340 = math.tanh %339 : vector<8x128xf32>
    %cst_59 = arith.constant 1.000000e+00 : f32
    %341 = vector.broadcast %cst_59 : f32 to vector<8x128xf32>
    %342 = arith.subf %341, %334 : vector<8x128xf32>
    %343 = arith.mulf %342, %340 : vector<8x128xf32>
    %344 = arith.mulf %334, %316 : vector<8x128xf32>
    %345 = arith.addf %343, %344 : vector<8x128xf32>
    %346 = vector.extract_strided_slice %256 {offsets = [24, 0], sizes = [8, 384], strides = [1, 1]} : vector<64x384xf32> to vector<8x384xf32>
    %cst_60 = arith.constant dense<0.000000e+00> : vector<8x384xf32>
    %347 = tpu.matmul %345, %248, %cst_60 {dimension_numbers = #tpu.dot_dimension_numbers<[1], [0], [0], [1], [0, 0, 1, 1], [], []>} : vector<8x128xf32>, vector<128x384xf32>, vector<8x384xf32> -> vector<8x384xf32>
    %348 = vector.extract_strided_slice %346 {offsets = [0, 0], sizes = [8, 128], strides = [1, 1]} : vector<8x384xf32> to vector<8x128xf32>
    %349 = vector.extract_strided_slice %347 {offsets = [0, 0], sizes = [8, 128], strides = [1, 1]} : vector<8x384xf32> to vector<8x128xf32>
    %350 = arith.addf %348, %349 : vector<8x128xf32>
    %351 = arith.negf %350 : vector<8x128xf32>
    %352 = math.exp %351 : vector<8x128xf32>
    %cst_61 = arith.constant 1.000000e+00 : f32
    %353 = vector.broadcast %cst_61 : f32 to vector<8x128xf32>
    %354 = arith.addf %353, %352 : vector<8x128xf32>
    %355 = arith.divf %353, %354 : vector<8x128xf32>
    %356 = vector.extract_strided_slice %346 {offsets = [0, 128], sizes = [8, 128], strides = [1, 1]} : vector<8x384xf32> to vector<8x128xf32>
    %357 = vector.extract_strided_slice %347 {offsets = [0, 128], sizes = [8, 128], strides = [1, 1]} : vector<8x384xf32> to vector<8x128xf32>
    %358 = arith.addf %356, %357 : vector<8x128xf32>
    %359 = arith.negf %358 : vector<8x128xf32>
    %360 = math.exp %359 : vector<8x128xf32>
    %cst_62 = arith.constant 1.000000e+00 : f32
    %361 = vector.broadcast %cst_62 : f32 to vector<8x128xf32>
    %362 = arith.addf %361, %360 : vector<8x128xf32>
    %363 = arith.divf %361, %362 : vector<8x128xf32>
    %364 = vector.extract_strided_slice %346 {offsets = [0, 256], sizes = [8, 128], strides = [1, 1]} : vector<8x384xf32> to vector<8x128xf32>
    %365 = vector.extract_strided_slice %347 {offsets = [0, 256], sizes = [8, 128], strides = [1, 1]} : vector<8x384xf32> to vector<8x128xf32>
    %366 = arith.addf %365, %253 : vector<8x128xf32>
    %367 = arith.mulf %355, %366 : vector<8x128xf32>
    %368 = arith.addf %364, %367 : vector<8x128xf32>
    %369 = math.tanh %368 : vector<8x128xf32>
    %cst_63 = arith.constant 1.000000e+00 : f32
    %370 = vector.broadcast %cst_63 : f32 to vector<8x128xf32>
    %371 = arith.subf %370, %363 : vector<8x128xf32>
    %372 = arith.mulf %371, %369 : vector<8x128xf32>
    %373 = arith.mulf %363, %345 : vector<8x128xf32>
    %374 = arith.addf %372, %373 : vector<8x128xf32>
    %375 = vector.extract_strided_slice %256 {offsets = [32, 0], sizes = [8, 384], strides = [1, 1]} : vector<64x384xf32> to vector<8x384xf32>
    %cst_64 = arith.constant dense<0.000000e+00> : vector<8x384xf32>
    %376 = tpu.matmul %374, %248, %cst_64 {dimension_numbers = #tpu.dot_dimension_numbers<[1], [0], [0], [1], [0, 0, 1, 1], [], []>} : vector<8x128xf32>, vector<128x384xf32>, vector<8x384xf32> -> vector<8x384xf32>
    %377 = vector.extract_strided_slice %375 {offsets = [0, 0], sizes = [8, 128], strides = [1, 1]} : vector<8x384xf32> to vector<8x128xf32>
    %378 = vector.extract_strided_slice %376 {offsets = [0, 0], sizes = [8, 128], strides = [1, 1]} : vector<8x384xf32> to vector<8x128xf32>
    %379 = arith.addf %377, %378 : vector<8x128xf32>
    %380 = arith.negf %379 : vector<8x128xf32>
    %381 = math.exp %380 : vector<8x128xf32>
    %cst_65 = arith.constant 1.000000e+00 : f32
    %382 = vector.broadcast %cst_65 : f32 to vector<8x128xf32>
    %383 = arith.addf %382, %381 : vector<8x128xf32>
    %384 = arith.divf %382, %383 : vector<8x128xf32>
    %385 = vector.extract_strided_slice %375 {offsets = [0, 128], sizes = [8, 128], strides = [1, 1]} : vector<8x384xf32> to vector<8x128xf32>
    %386 = vector.extract_strided_slice %376 {offsets = [0, 128], sizes = [8, 128], strides = [1, 1]} : vector<8x384xf32> to vector<8x128xf32>
    %387 = arith.addf %385, %386 : vector<8x128xf32>
    %388 = arith.negf %387 : vector<8x128xf32>
    %389 = math.exp %388 : vector<8x128xf32>
    %cst_66 = arith.constant 1.000000e+00 : f32
    %390 = vector.broadcast %cst_66 : f32 to vector<8x128xf32>
    %391 = arith.addf %390, %389 : vector<8x128xf32>
    %392 = arith.divf %390, %391 : vector<8x128xf32>
    %393 = vector.extract_strided_slice %375 {offsets = [0, 256], sizes = [8, 128], strides = [1, 1]} : vector<8x384xf32> to vector<8x128xf32>
    %394 = vector.extract_strided_slice %376 {offsets = [0, 256], sizes = [8, 128], strides = [1, 1]} : vector<8x384xf32> to vector<8x128xf32>
    %395 = arith.addf %394, %253 : vector<8x128xf32>
    %396 = arith.mulf %384, %395 : vector<8x128xf32>
    %397 = arith.addf %393, %396 : vector<8x128xf32>
    %398 = math.tanh %397 : vector<8x128xf32>
    %cst_67 = arith.constant 1.000000e+00 : f32
    %399 = vector.broadcast %cst_67 : f32 to vector<8x128xf32>
    %400 = arith.subf %399, %392 : vector<8x128xf32>
    %401 = arith.mulf %400, %398 : vector<8x128xf32>
    %402 = arith.mulf %392, %374 : vector<8x128xf32>
    %403 = arith.addf %401, %402 : vector<8x128xf32>
    %404 = vector.extract_strided_slice %256 {offsets = [40, 0], sizes = [8, 384], strides = [1, 1]} : vector<64x384xf32> to vector<8x384xf32>
    %cst_68 = arith.constant dense<0.000000e+00> : vector<8x384xf32>
    %405 = tpu.matmul %403, %248, %cst_68 {dimension_numbers = #tpu.dot_dimension_numbers<[1], [0], [0], [1], [0, 0, 1, 1], [], []>} : vector<8x128xf32>, vector<128x384xf32>, vector<8x384xf32> -> vector<8x384xf32>
    %406 = vector.extract_strided_slice %404 {offsets = [0, 0], sizes = [8, 128], strides = [1, 1]} : vector<8x384xf32> to vector<8x128xf32>
    %407 = vector.extract_strided_slice %405 {offsets = [0, 0], sizes = [8, 128], strides = [1, 1]} : vector<8x384xf32> to vector<8x128xf32>
    %408 = arith.addf %406, %407 : vector<8x128xf32>
    %409 = arith.negf %408 : vector<8x128xf32>
    %410 = math.exp %409 : vector<8x128xf32>
    %cst_69 = arith.constant 1.000000e+00 : f32
    %411 = vector.broadcast %cst_69 : f32 to vector<8x128xf32>
    %412 = arith.addf %411, %410 : vector<8x128xf32>
    %413 = arith.divf %411, %412 : vector<8x128xf32>
    %414 = vector.extract_strided_slice %404 {offsets = [0, 128], sizes = [8, 128], strides = [1, 1]} : vector<8x384xf32> to vector<8x128xf32>
    %415 = vector.extract_strided_slice %405 {offsets = [0, 128], sizes = [8, 128], strides = [1, 1]} : vector<8x384xf32> to vector<8x128xf32>
    %416 = arith.addf %414, %415 : vector<8x128xf32>
    %417 = arith.negf %416 : vector<8x128xf32>
    %418 = math.exp %417 : vector<8x128xf32>
    %cst_70 = arith.constant 1.000000e+00 : f32
    %419 = vector.broadcast %cst_70 : f32 to vector<8x128xf32>
    %420 = arith.addf %419, %418 : vector<8x128xf32>
    %421 = arith.divf %419, %420 : vector<8x128xf32>
    %422 = vector.extract_strided_slice %404 {offsets = [0, 256], sizes = [8, 128], strides = [1, 1]} : vector<8x384xf32> to vector<8x128xf32>
    %423 = vector.extract_strided_slice %405 {offsets = [0, 256], sizes = [8, 128], strides = [1, 1]} : vector<8x384xf32> to vector<8x128xf32>
    %424 = arith.addf %423, %253 : vector<8x128xf32>
    %425 = arith.mulf %413, %424 : vector<8x128xf32>
    %426 = arith.addf %422, %425 : vector<8x128xf32>
    %427 = math.tanh %426 : vector<8x128xf32>
    %cst_71 = arith.constant 1.000000e+00 : f32
    %428 = vector.broadcast %cst_71 : f32 to vector<8x128xf32>
    %429 = arith.subf %428, %421 : vector<8x128xf32>
    %430 = arith.mulf %429, %427 : vector<8x128xf32>
    %431 = arith.mulf %421, %403 : vector<8x128xf32>
    %432 = arith.addf %430, %431 : vector<8x128xf32>
    %433 = vector.extract_strided_slice %256 {offsets = [48, 0], sizes = [8, 384], strides = [1, 1]} : vector<64x384xf32> to vector<8x384xf32>
    %cst_72 = arith.constant dense<0.000000e+00> : vector<8x384xf32>
    %434 = tpu.matmul %432, %248, %cst_72 {dimension_numbers = #tpu.dot_dimension_numbers<[1], [0], [0], [1], [0, 0, 1, 1], [], []>} : vector<8x128xf32>, vector<128x384xf32>, vector<8x384xf32> -> vector<8x384xf32>
    %435 = vector.extract_strided_slice %433 {offsets = [0, 0], sizes = [8, 128], strides = [1, 1]} : vector<8x384xf32> to vector<8x128xf32>
    %436 = vector.extract_strided_slice %434 {offsets = [0, 0], sizes = [8, 128], strides = [1, 1]} : vector<8x384xf32> to vector<8x128xf32>
    %437 = arith.addf %435, %436 : vector<8x128xf32>
    %438 = arith.negf %437 : vector<8x128xf32>
    %439 = math.exp %438 : vector<8x128xf32>
    %cst_73 = arith.constant 1.000000e+00 : f32
    %440 = vector.broadcast %cst_73 : f32 to vector<8x128xf32>
    %441 = arith.addf %440, %439 : vector<8x128xf32>
    %442 = arith.divf %440, %441 : vector<8x128xf32>
    %443 = vector.extract_strided_slice %433 {offsets = [0, 128], sizes = [8, 128], strides = [1, 1]} : vector<8x384xf32> to vector<8x128xf32>
    %444 = vector.extract_strided_slice %434 {offsets = [0, 128], sizes = [8, 128], strides = [1, 1]} : vector<8x384xf32> to vector<8x128xf32>
    %445 = arith.addf %443, %444 : vector<8x128xf32>
    %446 = arith.negf %445 : vector<8x128xf32>
    %447 = math.exp %446 : vector<8x128xf32>
    %cst_74 = arith.constant 1.000000e+00 : f32
    %448 = vector.broadcast %cst_74 : f32 to vector<8x128xf32>
    %449 = arith.addf %448, %447 : vector<8x128xf32>
    %450 = arith.divf %448, %449 : vector<8x128xf32>
    %451 = vector.extract_strided_slice %433 {offsets = [0, 256], sizes = [8, 128], strides = [1, 1]} : vector<8x384xf32> to vector<8x128xf32>
    %452 = vector.extract_strided_slice %434 {offsets = [0, 256], sizes = [8, 128], strides = [1, 1]} : vector<8x384xf32> to vector<8x128xf32>
    %453 = arith.addf %452, %253 : vector<8x128xf32>
    %454 = arith.mulf %442, %453 : vector<8x128xf32>
    %455 = arith.addf %451, %454 : vector<8x128xf32>
    %456 = math.tanh %455 : vector<8x128xf32>
    %cst_75 = arith.constant 1.000000e+00 : f32
    %457 = vector.broadcast %cst_75 : f32 to vector<8x128xf32>
    %458 = arith.subf %457, %450 : vector<8x128xf32>
    %459 = arith.mulf %458, %456 : vector<8x128xf32>
    %460 = arith.mulf %450, %432 : vector<8x128xf32>
    %461 = arith.addf %459, %460 : vector<8x128xf32>
    %462 = vector.extract_strided_slice %256 {offsets = [56, 0], sizes = [8, 384], strides = [1, 1]} : vector<64x384xf32> to vector<8x384xf32>
    %cst_76 = arith.constant dense<0.000000e+00> : vector<8x384xf32>
    %463 = tpu.matmul %461, %248, %cst_76 {dimension_numbers = #tpu.dot_dimension_numbers<[1], [0], [0], [1], [0, 0, 1, 1], [], []>} : vector<8x128xf32>, vector<128x384xf32>, vector<8x384xf32> -> vector<8x384xf32>
    %464 = vector.extract_strided_slice %462 {offsets = [0, 0], sizes = [8, 128], strides = [1, 1]} : vector<8x384xf32> to vector<8x128xf32>
    %465 = vector.extract_strided_slice %463 {offsets = [0, 0], sizes = [8, 128], strides = [1, 1]} : vector<8x384xf32> to vector<8x128xf32>
    %466 = arith.addf %464, %465 : vector<8x128xf32>
    %467 = arith.negf %466 : vector<8x128xf32>
    %468 = math.exp %467 : vector<8x128xf32>
    %cst_77 = arith.constant 1.000000e+00 : f32
    %469 = vector.broadcast %cst_77 : f32 to vector<8x128xf32>
    %470 = arith.addf %469, %468 : vector<8x128xf32>
    %471 = arith.divf %469, %470 : vector<8x128xf32>
    %472 = vector.extract_strided_slice %462 {offsets = [0, 128], sizes = [8, 128], strides = [1, 1]} : vector<8x384xf32> to vector<8x128xf32>
    %473 = vector.extract_strided_slice %463 {offsets = [0, 128], sizes = [8, 128], strides = [1, 1]} : vector<8x384xf32> to vector<8x128xf32>
    %474 = arith.addf %472, %473 : vector<8x128xf32>
    %475 = arith.negf %474 : vector<8x128xf32>
    %476 = math.exp %475 : vector<8x128xf32>
    %cst_78 = arith.constant 1.000000e+00 : f32
    %477 = vector.broadcast %cst_78 : f32 to vector<8x128xf32>
    %478 = arith.addf %477, %476 : vector<8x128xf32>
    %479 = arith.divf %477, %478 : vector<8x128xf32>
    %480 = vector.extract_strided_slice %462 {offsets = [0, 256], sizes = [8, 128], strides = [1, 1]} : vector<8x384xf32> to vector<8x128xf32>
    %481 = vector.extract_strided_slice %463 {offsets = [0, 256], sizes = [8, 128], strides = [1, 1]} : vector<8x384xf32> to vector<8x128xf32>
    %482 = arith.addf %481, %253 : vector<8x128xf32>
    %483 = arith.mulf %471, %482 : vector<8x128xf32>
    %484 = arith.addf %480, %483 : vector<8x128xf32>
    %485 = math.tanh %484 : vector<8x128xf32>
    %cst_79 = arith.constant 1.000000e+00 : f32
    %486 = vector.broadcast %cst_79 : f32 to vector<8x128xf32>
    %487 = arith.subf %486, %479 : vector<8x128xf32>
    %488 = arith.mulf %487, %485 : vector<8x128xf32>
    %489 = arith.mulf %479, %461 : vector<8x128xf32>
    %490 = arith.addf %488, %489 : vector<8x128xf32>
    %c8 = arith.constant 8 : index
    %c0_80 = arith.constant 0 : index
    %491 = vector.load %arg3[%c8, %c0_80] : memref<24x128xf32, #tpu.memory_space<vmem>>, vector<8x128xf32>
    tpu.vector_store %arg3[%c8, %c0_80], %490 {strides = array<i32>} : memref<24x128xf32, #tpu.memory_space<vmem>>, vector<8x128xf32>,
    %c528 = arith.constant 528 : index
    %c0_81 = arith.constant 0 : index
    %492 = vector.load %arg2[%c528, %c0_81] : memref<664x384xf32, #tpu.memory_space<vmem>>, vector<128x384xf32>
    %c656 = arith.constant 656 : index
    %c0_82 = arith.constant 0 : index
    %493 = vector.load %arg2[%c656, %c0_82] : memref<664x384xf32, #tpu.memory_space<vmem>>, vector<8x384xf32>
    %cst_83 = arith.constant dense<0.000000e+00> : vector<8x384xf32>
    %494 = tpu.matmul %490, %492, %cst_83 {dimension_numbers = #tpu.dot_dimension_numbers<[1], [0], [0], [1], [0, 0, 1, 1], [], []>} : vector<8x128xf32>, vector<128x384xf32>, vector<8x384xf32> -> vector<8x384xf32>
    %495 = vector.extract_strided_slice %494 {offsets = [0, 0], sizes = [8, 128], strides = [1, 1]} : vector<8x384xf32> to vector<8x128xf32>
    %496 = vector.extract_strided_slice %493 {offsets = [0, 0], sizes = [1, 128], strides = [1, 1]} : vector<8x384xf32> to vector<1x128xf32>
    %497 = vector.broadcast %496 : vector<1x128xf32> to vector<8x128xf32>
    %498 = arith.addf %495, %497 : vector<8x128xf32>
    %499 = arith.negf %498 : vector<8x128xf32>
    %500 = math.exp %499 : vector<8x128xf32>
    %cst_84 = arith.constant 1.000000e+00 : f32
    %501 = vector.broadcast %cst_84 : f32 to vector<8x128xf32>
    %502 = arith.addf %501, %500 : vector<8x128xf32>
    %503 = arith.divf %501, %502 : vector<8x128xf32>
    %c16 = arith.constant 16 : index
    %c0_85 = arith.constant 0 : index
    %504 = vector.load %arg3[%c16, %c0_85] : memref<24x128xf32, #tpu.memory_space<vmem>>, vector<8x128xf32>
    tpu.vector_store %arg3[%c16, %c0_85], %503 {strides = array<i32>} : memref<24x128xf32, #tpu.memory_space<vmem>>, vector<8x128xf32>,
    return
  }
}

</mosaic_0001>

<llo_original>
// kernel: tpu_custom_call.1
$region0: #{tpu_custom_call.1}
  #allocation0 [shape = 'u32[]', space=smem, size = 0x4, offset = 0x4, fixed_abs, tag = 'smem constant byte address 0x4 - core index']
  #allocation1 [shape = 'u32[144,128]{1,0:T(1,128)}', space=vmem, size = 0x12000, scoped, tag = 'internal scratch']
  %s0 = inlined_call_operand.hbm [shape: f32[64,128], index: 0, kind: input, shape index: {}]
  %s1 = inlined_call_operand.hbm [shape: f32[2,8,128], index: 1, kind: input, shape index: {}]
  %s2 = inlined_call_operand.hbm [shape: f32[664,384], index: 2, kind: input, shape index: {}]
  %s3 = inlined_call_operand.hbm [shape: f32[24,128], index: 3, kind: output, shape index: {}]
  %s4 = sld [smem:[#allocation0]]
  $region34: #{tpu_custom_call.1} parent=0
    _
  %s6 = ssub.s32 1, %s4
  %s7 = scalar_select 0, %s6, %s4
  $region1: #{tpu_custom_call.1} parent=0
    #allocation2 [shape = 'u8[32768]{0}', space=vmem, size = 0x8000, scoped, tag = 'input window, operand 0, single buffered']
    #allocation3 [shape = 's32[1]{0}', space=sflag, size = 0x4, scoped, tag = 'scoped memory for tpu_custom_call.1']
    #allocation4 [shape = 's32[1]{0}', space=sflag, size = 0x4, scoped, tag = 'scoped memory for tpu_custom_call.1']
    #allocation5 [shape = 'u8[8192]{0}', space=vmem, size = 0x2000, scoped, tag = 'input window, operand 1, single buffered']
    #allocation6 [shape = 's32[1]{0}', space=sflag, size = 0x4, scoped, tag = 'scoped memory for tpu_custom_call.1']
    #allocation7 [shape = 'u8[1019904]{0}', space=vmem, size = 0xf9000, scoped, tag = 'input window, operand 2, single buffered']
    #allocation8 [shape = 'u8[12288]{0}', space=vmem, size = 0x3000, scoped, tag = 'output window, operand 0, single buffered']
    %8 = vsyncpa [#allocation3], 0
    %9 = vsyncpa [#allocation6], 0
    %10 = vsyncpa [#allocation4], 0
    // Predicated region
    $region2: #{tpu_custom_call.1} parent=1 // pred_check
      _
    $region3: #{tpu_custom_call.1} parent=1 // pred_check_branch
      %12 = sbr.rel (0) target = $region5
    $region4: #{tpu_custom_call.1} parent=1 // pred_region
      %s14 = ssub.s32 1024, 1024
      %15 = vsyncadd [#allocation3], %s14
      %s16 = sshll.u32 [#allocation2], 4
      %s17 = int_to_ptr.vmem [resolvable:$true] %s16
      %22 = dma.hbm_to_vmem [thread:$0]  %s0, 1024, %s17, [#allocation3], 128, 128, 8
    $region5: #{tpu_custom_call.1} parent=1 // pred_fallthru
      _
    // Predicated region
    $region6: #{tpu_custom_call.1} parent=1 // pred_check
      _
    $region7: #{tpu_custom_call.1} parent=1 // pred_check_branch
      %24 = sbr.rel (0) target = $region9
    $region8: #{tpu_custom_call.1} parent=1 // pred_region
      %s26 = ssub.s32 256, 256
      %27 = vsyncadd [#allocation6], %s26
      %s28 = sshll.u32 [#allocation5], 4
      %s29 = int_to_ptr.vmem [resolvable:$true] %s28
      %34 = dma.hbm_to_vmem [thread:$0]  %s1, 256, %s29, [#allocation6], 128, 128, 8
    $region9: #{tpu_custom_call.1} parent=1 // pred_fallthru
      _
    // Predicated region
    $region10: #{tpu_custom_call.1} parent=1 // pred_check
      _
    $region11: #{tpu_custom_call.1} parent=1 // pred_check_branch
      %36 = sbr.rel (0) target = $region13
    $region12: #{tpu_custom_call.1} parent=1 // pred_region
      %s38 = ssub.s32 31872, 31872
      %39 = vsyncadd [#allocation6], %s38
      %s40 = sshll.u32 [#allocation7], 4
      %s41 = int_to_ptr.vmem [resolvable:$true] %s40
      %46 = dma.hbm_to_vmem [thread:$0]  %s2, 31872, %s41, [#allocation6], 384, 384, 24
    $region13: #{tpu_custom_call.1} parent=1 // pred_fallthru
      _
    // Predicated region
    $region14: #{tpu_custom_call.1} parent=1 // pred_check
      _
    $region15: #{tpu_custom_call.1} parent=1 // pred_check_branch
      %48 = sbr.rel (0) target = $region17
    $region16: #{tpu_custom_call.1} parent=1 // pred_region
      %49 = dma.done [#allocation3], 1024
    $region17: #{tpu_custom_call.1} parent=1 // pred_fallthru
      _
    // Predicated region
    $region18: #{tpu_custom_call.1} parent=1 // pred_check
      _
    $region19: #{tpu_custom_call.1} parent=1 // pred_check_branch
      %51 = sbr.rel (0) target = $region21
    $region20: #{tpu_custom_call.1} parent=1 // pred_region
      %52 = dma.done [#allocation6], 256
    $region21: #{tpu_custom_call.1} parent=1 // pred_fallthru
      _
    // Predicated region
    $region22: #{tpu_custom_call.1} parent=1 // pred_check
      _
    $region23: #{tpu_custom_call.1} parent=1 // pred_check_branch
      %54 = sbr.rel (0) target = $region25
    $region24: #{tpu_custom_call.1} parent=1 // pred_region
      %55 = dma.done [#allocation6], 31872
    $region25: #{tpu_custom_call.1} parent=1 // pred_fallthru
      _
    %v56 = vld [vmem:[#allocation2] sm:$0xff]
    %v57 = vld [vmem:[#allocation2 + $0x8] sm:$0xff]
    %v58 = vld [vmem:[#allocation2 + $0x10] sm:$0xff]
    %v59 = vld [vmem:[#allocation2 + $0x18] sm:$0xff]
    %v60 = vld [vmem:[#allocation2 + $0x20] sm:$0xff]
    %v61 = vld [vmem:[#allocation2 + $0x28] sm:$0xff]
    %v62 = vld [vmem:[#allocation2 + $0x30] sm:$0xff]
    %v63 = vld [vmem:[#allocation2 + $0x38] sm:$0xff]
    %v64 = vld [vmem:[#allocation7] sm:$0xff]
    %v65 = vld [vmem:[#allocation7 + $0x8] sm:$0xff]
    %v66 = vld [vmem:[#allocation7 + $0x10] sm:$0xff]
    %v67 = vld [vmem:[#allocation7 + $0x18] sm:$0xff]
    %v68 = vld [vmem:[#allocation7 + $0x20] sm:$0xff]
    %v69 = vld [vmem:[#allocation7 + $0x28] sm:$0xff]
    %v70 = vld [vmem:[#allocation7 + $0x30] sm:$0xff]
    %v71 = vld [vmem:[#allocation7 + $0x38] sm:$0xff]
    %v72 = vld [vmem:[#allocation7 + $0x40] sm:$0xff]
    %v73 = vld [vmem:[#allocation7 + $0x48] sm:$0xff]
    %v74 = vld [vmem:[#allocation7 + $0x50] sm:$0xff]
    %v75 = vld [vmem:[#allocation7 + $0x58] sm:$0xff]
    %v76 = vld [vmem:[#allocation7 + $0x60] sm:$0xff]
    %v77 = vld [vmem:[#allocation7 + $0x68] sm:$0xff]
    %v78 = vld [vmem:[#allocation7 + $0x70] sm:$0xff]
    %v79 = vld [vmem:[#allocation7 + $0x78] sm:$0xff]
    %v80 = vld [vmem:[#allocation7 + $0x80] sm:$0xff]
    %v81 = vld [vmem:[#allocation7 + $0x88] sm:$0xff]
    %v82 = vld [vmem:[#allocation7 + $0x90] sm:$0xff]
    %v83 = vld [vmem:[#allocation7 + $0x98] sm:$0xff]
    %v84 = vld [vmem:[#allocation7 + $0xa0] sm:$0xff]
    %v85 = vld [vmem:[#allocation7 + $0xa8] sm:$0xff]
    %v86 = vld [vmem:[#allocation7 + $0xb0] sm:$0xff]
    %v87 = vld [vmem:[#allocation7 + $0xb8] sm:$0xff]
    %v88 = vld [vmem:[#allocation7 + $0xc0] sm:$0xff]
    %v89 = vld [vmem:[#allocation7 + $0xc8] sm:$0xff]
    %v90 = vld [vmem:[#allocation7 + $0xd0] sm:$0xff]
    %v91 = vld [vmem:[#allocation7 + $0xd8] sm:$0xff]
    %v92 = vld [vmem:[#allocation7 + $0xe0] sm:$0xff]
    %v93 = vld [vmem:[#allocation7 + $0xe8] sm:$0xff]
    %v94 = vld [vmem:[#allocation7 + $0xf0] sm:$0xff]
    %v95 = vld [vmem:[#allocation7 + $0xf8] sm:$0xff]
    %v96 = vld [vmem:[#allocation7 + $0x100] sm:$0xff]
    %v97 = vld [vmem:[#allocation7 + $0x108] sm:$0xff]
    %v98 = vld [vmem:[#allocation7 + $0x110] sm:$0xff]
    %v99 = vld [vmem:[#allocation7 + $0x118] sm:$0xff]
    %v100 = vld [vmem:[#allocation7 + $0x120] sm:$0xff]
    %v101 = vld [vmem:[#allocation7 + $0x128] sm:$0xff]
    %v102 = vld [vmem:[#allocation7 + $0x130] sm:$0xff]
    %v103 = vld [vmem:[#allocation7 + $0x138] sm:$0xff]
    %v104 = vld [vmem:[#allocation7 + $0x140] sm:$0xff]
    %v105 = vld [vmem:[#allocation7 + $0x148] sm:$0xff]
    %v106 = vld [vmem:[#allocation7 + $0x150] sm:$0xff]
    %v107 = vld [vmem:[#allocation7 + $0x158] sm:$0xff]
    %v108 = vld [vmem:[#allocation7 + $0x160] sm:$0xff]
    %v109 = vld [vmem:[#allocation7 + $0x168] sm:$0xff]
    %v110 = vld [vmem:[#allocation7 + $0x170] sm:$0xff]
    %v111 = vld [vmem:[#allocation7 + $0x178] sm:$0xff]
    %v112 = vld [vmem:[#allocation7 + $0x180] sm:$0xff]
    %v113 = vld [vmem:[#allocation7 + $0x188] sm:$0xff]
    %v114 = vld [vmem:[#allocation7 + $0x190] sm:$0xff]
    %v115 = vld [vmem:[#allocation7 + $0x198] sm:$0xff]
    %v116 = vld [vmem:[#allocation7 + $0x1a0] sm:$0xff]
    %v117 = vld [vmem:[#allocation7 + $0x1a8] sm:$0xff]
    %v118 = vld [vmem:[#allocation7 + $0x1b0] sm:$0xff]
    %v119 = vld [vmem:[#allocation7 + $0x1b8] sm:$0xff]
    %v120 = vld [vmem:[#allocation7 + $0x1c0] sm:$0xff]
    %v121 = vld [vmem:[#allocation7 + $0x1c8] sm:$0xff]
    %v122 = vld [vmem:[#allocation7 + $0x1d0] sm:$0xff]
    %v123 = vld [vmem:[#allocation7 + $0x1d8] sm:$0xff]
    %v124 = vld [vmem:[#allocation7 + $0x1e0] sm:$0xff]
    %v125 = vld [vmem:[#allocation7 + $0x1e8] sm:$0xff]
    %v126 = vld [vmem:[#allocation7 + $0x1f0] sm:$0xff]
    %v127 = vld [vmem:[#allocation7 + $0x1f8] sm:$0xff]
    %v128 = vld [vmem:[#allocation7 + $0x200] sm:$0xff]
    %v129 = vld [vmem:[#allocation7 + $0x208] sm:$0xff]
    %v130 = vld [vmem:[#allocation7 + $0x210] sm:$0xff]
    %v131 = vld [vmem:[#allocation7 + $0x218] sm:$0xff]
    %v132 = vld [vmem:[#allocation7 + $0x220] sm:$0xff]
    %v133 = vld [vmem:[#allocation7 + $0x228] sm:$0xff]
    %v134 = vld [vmem:[#allocation7 + $0x230] sm:$0xff]
    %v135 = vld [vmem:[#allocation7 + $0x238] sm:$0xff]
    %v136 = vld [vmem:[#allocation7 + $0x240] sm:$0xff]
    %v137 = vld [vmem:[#allocation7 + $0x248] sm:$0xff]
    %v138 = vld [vmem:[#allocation7 + $0x250] sm:$0xff]
    %v139 = vld [vmem:[#allocation7 + $0x258] sm:$0xff]
    %v140 = vld [vmem:[#allocation7 + $0x260] sm:$0xff]
    %v141 = vld [vmem:[#allocation7 + $0x268] sm:$0xff]
    %v142 = vld [vmem:[#allocation7 + $0x270] sm:$0xff]
    %v143 = vld [vmem:[#allocation7 + $0x278] sm:$0xff]
    %v144 = vld [vmem:[#allocation7 + $0x280] sm:$0xff]
    %v145 = vld [vmem:[#allocation7 + $0x288] sm:$0xff]
    %v146 = vld [vmem:[#allocation7 + $0x290] sm:$0xff]
    %v147 = vld [vmem:[#allocation7 + $0x298] sm:$0xff]
    %v148 = vld [vmem:[#allocation7 + $0x2a0] sm:$0xff]
    %v149 = vld [vmem:[#allocation7 + $0x2a8] sm:$0xff]
    %v150 = vld [vmem:[#allocation7 + $0x2b0] sm:$0xff]
    %v151 = vld [vmem:[#allocation7 + $0x2b8] sm:$0xff]
    %v152 = vld [vmem:[#allocation7 + $0x2c0] sm:$0xff]
    %v153 = vld [vmem:[#allocation7 + $0x2c8] sm:$0xff]
    %v154 = vld [vmem:[#allocation7 + $0x2d0] sm:$0xff]
    %v155 = vld [vmem:[#allocation7 + $0x2d8] sm:$0xff]
    %v156 = vld [vmem:[#allocation7 + $0x2e0] sm:$0xff]
    %v157 = vld [vmem:[#allocation7 + $0x2e8] sm:$0xff]
    %v158 = vld [vmem:[#allocation7 + $0x2f0] sm:$0xff]
    %v159 = vld [vmem:[#allocation7 + $0x2f8] sm:$0xff]
    %v160 = vld [vmem:[#allocation7 + $0x300] sm:$0xff]
    %v161 = vld [vmem:[#allocation7 + $0x308] sm:$0xff]
    %v162 = vld [vmem:[#allocation7 + $0x310] sm:$0xff]
    %v163 = vlaneseq
    %v164 = vshrl.u32 %v163, 7
    %v165 = vsub.s32 1, %v164
    %v166 = vrot.slane %v162, %v165
    %v167 = vlaneseq
    %v168 = vshrl.u32 %v167, 7
    %v169 = vsub.s32 0, %v168
    %v170 = vrot.slane %v160, %v169
    %v171 = vlaneseq
    %v172 = vshrl.u32 %v171, 7
    %v173 = vsub.s32 0, %v172
    %v174 = vrot.slane %v161, %v173
    %v175 = vlaneseq
    %v176 = vshrl.u32 %v175, 7
    %v177 = vsub.s32 0, %v176
    %v178 = vrot.slane %v162, %v177
    %179 = vmatprep.subr.mxu0 %v110
    %180 = vmatpush1.msra.mxu0 %v109
    %181 = vmatprep.subr.mxu0 %v107
    %182 = vmatpush1.msra.mxu0 %v106
    %183 = vmatprep.subr.mxu0 %v104
    %184 = vmatpush1.msra.mxu0 %v103
    %185 = vmatprep.subr.mxu0 %v101
    %186 = vmatpush1.msra.mxu0 %v100
    %187 = vmatprep.subr.mxu0 %v98
    %188 = vmatpush1.msra.mxu0 %v97
    %189 = vmatprep.subr.mxu0 %v95
    %190 = vmatpush1.msra.mxu0 %v94
    %191 = vmatprep.subr.mxu0 %v92
    %192 = vmatpush1.msra.mxu0 %v91
    %193 = vmatprep.subr.mxu0 %v89
    %194 = vmatpush1.msra.mxu0 %v88
    %195 = vmatprep.subr.mxu0 %v86
    %196 = vmatpush1.msra.mxu0 %v85
    %197 = vmatprep.subr.mxu0 %v83
    %198 = vmatpush1.msra.mxu0 %v82
    %199 = vmatprep.subr.mxu0 %v80
    %200 = vmatpush1.msra.mxu0 %v79
    %201 = vmatprep.subr.mxu0 %v77
    %202 = vmatpush1.msra.mxu0 %v76
    %203 = vmatprep.subr.mxu0 %v74
    %204 = vmatpush1.msra.mxu0 %v73
    %205 = vmatprep.subr.mxu0 %v71
    %206 = vmatpush1.msra.mxu0 %v70
    %207 = vmatprep.subr.mxu0 %v68
    %208 = vmatpush1.msra.mxu0 %v67
    %209 = vmatprep.subr.mxu0 %v65
    %210 = vmatpush1.msra.mxu0 %v64
    %211 = vmatprep.subr.mxu0 0.0
    %212 = vmatpush2.msra.mxu0 0.0
    %213 = vmatprep.subr.mxu0 0.0
    %214 = vmatpush2.msra.mxu0 0.0
    %215 = vmatprep.subr.mxu0 0.0
    %216 = vmatpush2.msra.mxu0 0.0
    %217 = vmatprep.subr.mxu0 0.0
    %218 = vmatpush2.msra.mxu0 0.0
    %219 = vmatprep.subr.mxu0 0.0
    %220 = vmatpush2.msra.mxu0 0.0
    %221 = vmatprep.subr.mxu0 0.0
    %222 = vmatpush2.msra.mxu0 0.0
    %223 = vmatprep.subr.mxu0 0.0
    %224 = vmatpush2.msra.mxu0 0.0
    %225 = vmatprep.subr.mxu0 0.0
    %226 = vmatpush2.msra.mxu0 0.0
    %227 = vmatprep.subr.mxu0 0.0
    %228 = vmatpush2.msra.mxu0 0.0
    %229 = vmatprep.subr.mxu0 0.0
    %230 = vmatpush2.msra.mxu0 0.0
    %231 = vmatprep.subr.mxu0 0.0
    %232 = vmatpush2.msra.mxu0 0.0
    %233 = vmatprep.subr.mxu0 0.0
    %234 = vmatpush2.msra.mxu0 0.0
    %235 = vmatprep.subr.mxu0 0.0
    %236 = vmatpush2.msra.mxu0 0.0
    %237 = vmatprep.subr.mxu0 0.0
    %238 = vmatpush2.msra.mxu0 0.0
    %239 = vmatprep.subr.mxu0 0.0
    %240 = vmatpush2.msra.mxu0 0.0
    %241 = vmatprep.subr.mxu0 0.0
    %242 = vmatpush2.msra.mxu0 0.0
    %243 = vmatprep.mubr.f32.mxu0 0.0
    %244 = vmatmul.mubr.f32.gmra.mxu0 %v56
    %v245 = vpop.f32.mrf.mxu0
    %v246 = vadd.f32 %v170, %v245
    %v247 = vpop.f32.mrf.mxu0
    %v248 = vadd.f32 %v174, %v247
    %249 = vmatprep.mubr.f32.mxu0 0.0
    %250 = vmatmul.mubr.f32.gmra.mxu0 %v57
    %v251 = vpop.f32.mrf.mxu0
    %v252 = vadd.f32 %v170, %v251
    %v253 = vpop.f32.mrf.mxu0
    %v254 = vadd.f32 %v174, %v253
    %255 = vmatprep.mubr.f32.mxu0 0.0
    %256 = vmatmul.mubr.f32.gmra.mxu0 %v58
    %v257 = vpop.f32.mrf.mxu0
    %v258 = vadd.f32 %v170, %v257
    %v259 = vpop.f32.mrf.mxu0
    %v260 = vadd.f32 %v174, %v259
    %261 = vmatprep.mubr.f32.mxu0 0.0
    %262 = vmatmul.mubr.f32.gmra.mxu0 %v59
    %v263 = vpop.f32.mrf.mxu0
    %v264 = vadd.f32 %v170, %v263
    %v265 = vpop.f32.mrf.mxu0
    %v266 = vadd.f32 %v174, %v265
    %267 = vmatprep.mubr.f32.mxu0 0.0
    %268 = vmatmul.mubr.f32.gmra.mxu0 %v60
    %v269 = vpop.f32.mrf.mxu0
    %v270 = vadd.f32 %v170, %v269
    %v271 = vpop.f32.mrf.mxu0
    %v272 = vadd.f32 %v174, %v271
    %273 = vmatprep.mubr.f32.mxu0 0.0
    %274 = vmatmul.mubr.f32.gmra.mxu0 %v61
    %v275 = vpop.f32.mrf.mxu0
    %v276 = vadd.f32 %v170, %v275
    %v277 = vpop.f32.mrf.mxu0
    %v278 = vadd.f32 %v174, %v277
    %279 = vmatprep.mubr.f32.mxu0 0.0
    %280 = vmatmul.mubr.f32.gmra.mxu0 %v62
    %v281 = vpop.f32.mrf.mxu0
    %v282 = vadd.f32 %v170, %v281
    %v283 = vpop.f32.mrf.mxu0
    %v284 = vadd.f32 %v174, %v283
    %285 = vmatprep.mubr.f32.mxu0 0.0
    %286 = vmatmul.mubr.f32.gmra.mxu0 %v63
    %v287 = vpop.f32.mrf.mxu0
    %v288 = vadd.f32 %v170, %v287
    %v289 = vpop.f32.mrf.mxu0
    %v290 = vadd.f32 %v174, %v289
    %291 = vdwg.mxu0
    %292 = vmatprep.subr.mxu0 0.0
    %293 = vmatpush1.msra.mxu0 %v111
    %294 = vmatprep.subr.mxu0 0.0
    %295 = vmatpush1.msra.mxu0 %v108
    %296 = vmatprep.subr.mxu0 0.0
    %297 = vmatpush1.msra.mxu0 %v105
    %298 = vmatprep.subr.mxu0 0.0
    %299 = vmatpush1.msra.mxu0 %v102
    %300 = vmatprep.subr.mxu0 0.0
    %301 = vmatpush1.msra.mxu0 %v99
    %302 = vmatprep.subr.mxu0 0.0
    %303 = vmatpush1.msra.mxu0 %v96
    %304 = vmatprep.subr.mxu0 0.0
    %305 = vmatpush1.msra.mxu0 %v93
    %306 = vmatprep.subr.mxu0 0.0
    %307 = vmatpush1.msra.mxu0 %v90
    %308 = vmatprep.subr.mxu0 0.0
    %309 = vmatpush1.msra.mxu0 %v87
    %310 = vmatprep.subr.mxu0 0.0
    %311 = vmatpush1.msra.mxu0 %v84
    %312 = vmatprep.subr.mxu0 0.0
    %313 = vmatpush1.msra.mxu0 %v81
    %314 = vmatprep.subr.mxu0 0.0
    %315 = vmatpush1.msra.mxu0 %v78
    %316 = vmatprep.subr.mxu0 0.0
    %317 = vmatpush1.msra.mxu0 %v75
    %318 = vmatprep.subr.mxu0 0.0
    %319 = vmatpush1.msra.mxu0 %v72
    %320 = vmatprep.subr.mxu0 0.0
    %321 = vmatpush1.msra.mxu0 %v69
    %322 = vmatprep.subr.mxu0 0.0
    %323 = vmatpush1.msra.mxu0 %v66
    %324 = vmatprep.subr.mxu0 0.0
    %325 = vmatpush2.msra.mxu0 0.0
    %326 = vmatprep.subr.mxu0 0.0
    %327 = vmatpush2.msra.mxu0 0.0
    %328 = vmatprep.subr.mxu0 0.0
    %329 = vmatpush2.msra.mxu0 0.0
    %330 = vmatprep.subr.mxu0 0.0
    %331 = vmatpush2.msra.mxu0 0.0
    %332 = vmatprep.subr.mxu0 0.0
    %333 = vmatpush2.msra.mxu0 0.0
    %334 = vmatprep.subr.mxu0 0.0
    %335 = vmatpush2.msra.mxu0 0.0
    %336 = vmatprep.subr.mxu0 0.0
    %337 = vmatpush2.msra.mxu0 0.0
    %338 = vmatprep.subr.mxu0 0.0
    %339 = vmatpush2.msra.mxu0 0.0
    %340 = vmatprep.subr.mxu0 0.0
    %341 = vmatpush2.msra.mxu0 0.0
    %342 = vmatprep.subr.mxu0 0.0
    %343 = vmatpush2.msra.mxu0 0.0
    %344 = vmatprep.subr.mxu0 0.0
    %345 = vmatpush2.msra.mxu0 0.0
    %346 = vmatprep.subr.mxu0 0.0
    %347 = vmatpush2.msra.mxu0 0.0
    %348 = vmatprep.subr.mxu0 0.0
    %349 = vmatpush2.msra.mxu0 0.0
    %350 = vmatprep.subr.mxu0 0.0
    %351 = vmatpush2.msra.mxu0 0.0
    %352 = vmatprep.subr.mxu0 0.0
    %353 = vmatpush2.msra.mxu0 0.0
    %354 = vmatprep.subr.mxu0 0.0
    %355 = vmatpush2.msra.mxu0 0.0
    %356 = vmatprep.mubr.f32.mxu0 0.0
    %357 = vmatmul.mubr.f32.gmra.mxu0 %v56
    %v358 = vpop.f32.mrf.mxu0
    %v359 = vadd.f32 %v178, %v358
    %v360 = vpop.f32.mrf.mxu0
    %361 = vmatprep.mubr.f32.mxu0 0.0
    %362 = vmatmul.mubr.f32.gmra.mxu0 %v57
    %v363 = vpop.f32.mrf.mxu0
    %v364 = vadd.f32 %v178, %v363
    %v365 = vpop.f32.mrf.mxu0
    %366 = vmatprep.mubr.f32.mxu0 0.0
    %367 = vmatmul.mubr.f32.gmra.mxu0 %v58
    %v368 = vpop.f32.mrf.mxu0
    %v369 = vadd.f32 %v178, %v368
    %v370 = vpop.f32.mrf.mxu0
    %371 = vmatprep.mubr.f32.mxu0 0.0
    %372 = vmatmul.mubr.f32.gmra.mxu0 %v59
    %v373 = vpop.f32.mrf.mxu0
    %v374 = vadd.f32 %v178, %v373
    %v375 = vpop.f32.mrf.mxu0
    %376 = vmatprep.mubr.f32.mxu0 0.0
    %377 = vmatmul.mubr.f32.gmra.mxu0 %v60
    %v378 = vpop.f32.mrf.mxu0
    %v379 = vadd.f32 %v178, %v378
    %v380 = vpop.f32.mrf.mxu0
    %381 = vmatprep.mubr.f32.mxu0 0.0
    %382 = vmatmul.mubr.f32.gmra.mxu0 %v61
    %v383 = vpop.f32.mrf.mxu0
    %v384 = vadd.f32 %v178, %v383
    %v385 = vpop.f32.mrf.mxu0
    %386 = vmatprep.mubr.f32.mxu0 0.0
    %387 = vmatmul.mubr.f32.gmra.mxu0 %v62
    %v388 = vpop.f32.mrf.mxu0
    %v389 = vadd.f32 %v178, %v388
    %v390 = vpop.f32.mrf.mxu0
    %391 = vmatprep.mubr.f32.mxu0 0.0
    %392 = vmatmul.mubr.f32.gmra.mxu0 %v63
    %v393 = vpop.f32.mrf.mxu0
    %v394 = vadd.f32 %v178, %v393
    %v395 = vpop.f32.mrf.mxu0
    %396 = vdwg.mxu0
    %v397 = vld [vmem:[#allocation5] sm:$0xff]
    %398 = vmatprep.subr.mxu0 %v158
    %399 = vmatpush1.msra.mxu0 %v157
    %400 = vmatprep.subr.mxu0 %v155
    %401 = vmatpush1.msra.mxu0 %v154
    %402 = vmatprep.subr.mxu0 %v152
    %403 = vmatpush1.msra.mxu0 %v151
    %404 = vmatprep.subr.mxu0 %v149
    %405 = vmatpush1.msra.mxu0 %v148
    %406 = vmatprep.subr.mxu0 %v146
    %407 = vmatpush1.msra.mxu0 %v145
    %408 = vmatprep.subr.mxu0 %v143
    %409 = vmatpush1.msra.mxu0 %v142
    %410 = vmatprep.subr.mxu0 %v140
    %411 = vmatpush1.msra.mxu0 %v139
    %412 = vmatprep.subr.mxu0 %v137
    %413 = vmatpush1.msra.mxu0 %v136
    %414 = vmatprep.subr.mxu0 %v134
    %415 = vmatpush1.msra.mxu0 %v133
    %416 = vmatprep.subr.mxu0 %v131
    %417 = vmatpush1.msra.mxu0 %v130
    %418 = vmatprep.subr.mxu0 %v128
    %419 = vmatpush1.msra.mxu0 %v127
    %420 = vmatprep.subr.mxu0 %v125
    %421 = vmatpush1.msra.mxu0 %v124
    %422 = vmatprep.subr.mxu0 %v122
    %423 = vmatpush1.msra.mxu0 %v121
    %424 = vmatprep.subr.mxu0 %v119
    %425 = vmatpush1.msra.mxu0 %v118
    %426 = vmatprep.subr.mxu0 %v116
    %427 = vmatpush1.msra.mxu0 %v115
    %428 = vmatprep.subr.mxu0 %v113
    %429 = vmatpush1.msra.mxu0 %v112
    %430 = vmatprep.subr.mxu0 0.0
    %431 = vmatpush2.msra.mxu0 0.0
    %432 = vmatprep.subr.mxu0 0.0
    %433 = vmatpush2.msra.mxu0 0.0
    %434 = vmatprep.subr.mxu0 0.0
    %435 = vmatpush2.msra.mxu0 0.0
    %436 = vmatprep.subr.mxu0 0.0
    %437 = vmatpush2.msra.mxu0 0.0
    %438 = vmatprep.subr.mxu0 0.0
    %439 = vmatpush2.msra.mxu0 0.0
    %440 = vmatprep.subr.mxu0 0.0
    %441 = vmatpush2.msra.mxu0 0.0
    %442 = vmatprep.subr.mxu0 0.0
    %443 = vmatpush2.msra.mxu0 0.0
    %444 = vmatprep.subr.mxu0 0.0
    %445 = vmatpush2.msra.mxu0 0.0
    %446 = vmatprep.subr.mxu0 0.0
    %447 = vmatpush2.msra.mxu0 0.0
    %448 = vmatprep.subr.mxu0 0.0
    %449 = vmatpush2.msra.mxu0 0.0
    %450 = vmatprep.subr.mxu0 0.0
    %451 = vmatpush2.msra.mxu0 0.0
    %452 = vmatprep.subr.mxu0 0.0
    %453 = vmatpush2.msra.mxu0 0.0
    %454 = vmatprep.subr.mxu0 0.0
    %455 = vmatpush2.msra.mxu0 0.0
    %456 = vmatprep.subr.mxu0 0.0
    %457 = vmatpush2.msra.mxu0 0.0
    %458 = vmatprep.subr.mxu0 0.0
    %459 = vmatpush2.msra.mxu0 0.0
    %460 = vmatprep.subr.mxu0 0.0
    %461 = vmatpush2.msra.mxu0 0.0
    %462 = vmatprep.mubr.f32.mxu0 0.0
    %463 = vmatmul.mubr.f32.gmra.mxu0 %v397
    %v464 = vpop.f32.mrf.mxu0
    %v465 = vadd.f32 0.0, %v464
    %v466 = vpop.f32.mrf.mxu0
    %v467 = vadd.f32 0.0, %v466
    %468 = vdwg.mxu0
    %469 = vmatprep.subr.mxu0 0.0
    %470 = vmatpush1.msra.mxu0 %v159
    %471 = vmatprep.subr.mxu0 0.0
    %472 = vmatpush1.msra.mxu0 %v156
    %473 = vmatprep.subr.mxu0 0.0
    %474 = vmatpush1.msra.mxu0 %v153
    %475 = vmatprep.subr.mxu0 0.0
    %476 = vmatpush1.msra.mxu0 %v150
    %477 = vmatprep.subr.mxu0 0.0
    %478 = vmatpush1.msra.mxu0 %v147
    %479 = vmatprep.subr.mxu0 0.0
    %480 = vmatpush1.msra.mxu0 %v144
    %481 = vmatprep.subr.mxu0 0.0
    %482 = vmatpush1.msra.mxu0 %v141
    %483 = vmatprep.subr.mxu0 0.0
    %484 = vmatpush1.msra.mxu0 %v138
    %485 = vmatprep.subr.mxu0 0.0
    %486 = vmatpush1.msra.mxu0 %v135
    %487 = vmatprep.subr.mxu0 0.0
    %488 = vmatpush1.msra.mxu0 %v132
    %489 = vmatprep.subr.mxu0 0.0
    %490 = vmatpush1.msra.mxu0 %v129
    %491 = vmatprep.subr.mxu0 0.0
    %492 = vmatpush1.msra.mxu0 %v126
    %493 = vmatprep.subr.mxu0 0.0
    %494 = vmatpush1.msra.mxu0 %v123
    %495 = vmatprep.subr.mxu0 0.0
    %496 = vmatpush1.msra.mxu0 %v120
    %497 = vmatprep.subr.mxu0 0.0
    %498 = vmatpush1.msra.mxu0 %v117
    %499 = vmatprep.subr.mxu0 0.0
    %500 = vmatpush1.msra.mxu0 %v114
    %501 = vmatprep.subr.mxu0 0.0
    %502 = vmatpush2.msra.mxu0 0.0
    %503 = vmatprep.subr.mxu0 0.0
    %504 = vmatpush2.msra.mxu0 0.0
    %505 = vmatprep.subr.mxu0 0.0
    %506 = vmatpush2.msra.mxu0 0.0
    %507 = vmatprep.subr.mxu0 0.0
    %508 = vmatpush2.msra.mxu0 0.0
    %509 = vmatprep.subr.mxu0 0.0
    %510 = vmatpush2.msra.mxu0 0.0
    %511 = vmatprep.subr.mxu0 0.0
    %512 = vmatpush2.msra.mxu0 0.0
    %513 = vmatprep.subr.mxu0 0.0
    %514 = vmatpush2.msra.mxu0 0.0
    %515 = vmatprep.subr.mxu0 0.0
    %516 = vmatpush2.msra.mxu0 0.0
    %517 = vmatprep.subr.mxu0 0.0
    %518 = vmatpush2.msra.mxu0 0.0
    %519 = vmatprep.subr.mxu0 0.0
    %520 = vmatpush2.msra.mxu0 0.0
    %521 = vmatprep.subr.mxu0 0.0
    %522 = vmatpush2.msra.mxu0 0.0
    %523 = vmatprep.subr.mxu0 0.0
    %524 = vmatpush2.msra.mxu0 0.0
    %525 = vmatprep.subr.mxu0 0.0
    %526 = vmatpush2.msra.mxu0 0.0
    %527 = vmatprep.subr.mxu0 0.0
    %528 = vmatpush2.msra.mxu0 0.0
    %529 = vmatprep.subr.mxu0 0.0
    %530 = vmatpush2.msra.mxu0 0.0
    %531 = vmatprep.subr.mxu0 0.0
    %532 = vmatpush2.msra.mxu0 0.0
    %533 = vmatprep.mubr.f32.mxu0 0.0
    %534 = vmatmul.mubr.f32.gmra.mxu0 %v397
    %v535 = vpop.f32.mrf.mxu0
    %v536 = vadd.f32 0.0, %v535
    %v537 = vpop.f32.mrf.mxu0
    %538 = vdwg.mxu0
    %v539 = vadd.f32 %v246, %v465
    %v540 = vxor.u32 %v539, 2147483648
    %v541 = vmul.f32 %v540, 1.442695
    %v542 = vpow.pop %v541
    %v543 = vadd.f32 %v542, 1.0
    %v544 = vrcp.pop %v543
    %v545 = vmul.f32 1.0, %v544
    %v546 = vadd.f32 %v248, %v467
    %v547 = vxor.u32 %v546, 2147483648
    %v548 = vmul.f32 %v547, 1.442695
    %v549 = vpow.pop %v548
    %v550 = vadd.f32 %v549, 1.0
    %v551 = vrcp.pop %v550
    %v552 = vmul.f32 1.0, %v551
    %v553 = vadd.f32 %v536, %v166
    %v554 = vmul.f32 %v545, %v553
    %v555 = vadd.f32 %v359, %v554
    %v556 = vtanh.pop %v555
    %v557 = vsub.f32 1.0, %v552
    %v558 = vmul.f32 %v557, %v556
    %v559 = vmul.f32 %v552, %v397
    %v560 = vadd.f32 %v558, %v559
    %561 = vmatprep.subr.mxu0 %v158
    %562 = vmatpush1.msra.mxu0 %v157
    %563 = vmatprep.subr.mxu0 %v155
    %564 = vmatpush1.msra.mxu0 %v154
    %565 = vmatprep.subr.mxu0 %v152
    %566 = vmatpush1.msra.mxu0 %v151
    %567 = vmatprep.subr.mxu0 %v149
    %568 = vmatpush1.msra.mxu0 %v148
    %569 = vmatprep.subr.mxu0 %v146
    %570 = vmatpush1.msra.mxu0 %v145
    %571 = vmatprep.subr.mxu0 %v143
    %572 = vmatpush1.msra.mxu0 %v142
    %573 = vmatprep.subr.mxu0 %v140
    %574 = vmatpush1.msra.mxu0 %v139
    %575 = vmatprep.subr.mxu0 %v137
    %576 = vmatpush1.msra.mxu0 %v136
    %577 = vmatprep.subr.mxu0 %v134
    %578 = vmatpush1.msra.mxu0 %v133
    %579 = vmatprep.subr.mxu0 %v131
    %580 = vmatpush1.msra.mxu0 %v130
    %581 = vmatprep.subr.mxu0 %v128
    %582 = vmatpush1.msra.mxu0 %v127
    %583 = vmatprep.subr.mxu0 %v125
    %584 = vmatpush1.msra.mxu0 %v124
    %585 = vmatprep.subr.mxu0 %v122
    %586 = vmatpush1.msra.mxu0 %v121
    %587 = vmatprep.subr.mxu0 %v119
    %588 = vmatpush1.msra.mxu0 %v118
    %589 = vmatprep.subr.mxu0 %v116
    %590 = vmatpush1.msra.mxu0 %v115
    %591 = vmatprep.subr.mxu0 %v113
    %592 = vmatpush1.msra.mxu0 %v112
    %593 = vmatprep.subr.mxu0 0.0
    %594 = vmatpush2.msra.mxu0 0.0
    %595 = vmatprep.subr.mxu0 0.0
    %596 = vmatpush2.msra.mxu0 0.0
    %597 = vmatprep.subr.mxu0 0.0
    %598 = vmatpush2.msra.mxu0 0.0
    %599 = vmatprep.subr.mxu0 0.0
    %600 = vmatpush2.msra.mxu0 0.0
    %601 = vmatprep.subr.mxu0 0.0
    %602 = vmatpush2.msra.mxu0 0.0
    %603 = vmatprep.subr.mxu0 0.0
    %604 = vmatpush2.msra.mxu0 0.0
    %605 = vmatprep.subr.mxu0 0.0
    %606 = vmatpush2.msra.mxu0 0.0
    %607 = vmatprep.subr.mxu0 0.0
    %608 = vmatpush2.msra.mxu0 0.0
    %609 = vmatprep.subr.mxu0 0.0
    %610 = vmatpush2.msra.mxu0 0.0
    %611 = vmatprep.subr.mxu0 0.0
    %612 = vmatpush2.msra.mxu0 0.0
    %613 = vmatprep.subr.mxu0 0.0
    %614 = vmatpush2.msra.mxu0 0.0
    %615 = vmatprep.subr.mxu0 0.0
    %616 = vmatpush2.msra.mxu0 0.0
    %617 = vmatprep.subr.mxu0 0.0
    %618 = vmatpush2.msra.mxu0 0.0
    %619 = vmatprep.subr.mxu0 0.0
    %620 = vmatpush2.msra.mxu0 0.0
    %621 = vmatprep.subr.mxu0 0.0
    %622 = vmatpush2.msra.mxu0 0.0
    %623 = vmatprep.subr.mxu0 0.0
    %624 = vmatpush2.msra.mxu0 0.0
    %625 = vmatprep.mubr.f32.mxu0 0.0
    %626 = vmatmul.mubr.f32.gmra.mxu0 %v560
    %v627 = vpop.f32.mrf.mxu0
    %v628 = vadd.f32 0.0, %v627
    %v629 = vpop.f32.mrf.mxu0
    %v630 = vadd.f32 0.0, %v629
    %631 = vdwg.mxu0
    %632 = vmatprep.subr.mxu0 0.0
    %633 = vmatpush1.msra.mxu0 %v159
    %634 = vmatprep.subr.mxu0 0.0
    %635 = vmatpush1.msra.mxu0 %v156
    %636 = vmatprep.subr.mxu0 0.0
    %637 = vmatpush1.msra.mxu0 %v153
    %638 = vmatprep.subr.mxu0 0.0
    %639 = vmatpush1.msra.mxu0 %v150
    %640 = vmatprep.subr.mxu0 0.0
    %641 = vmatpush1.msra.mxu0 %v147
    %642 = vmatprep.subr.mxu0 0.0
    %643 = vmatpush1.msra.mxu0 %v144
    %644 = vmatprep.subr.mxu0 0.0
    %645 = vmatpush1.msra.mxu0 %v141
    %646 = vmatprep.subr.mxu0 0.0
    %647 = vmatpush1.msra.mxu0 %v138
    %648 = vmatprep.subr.mxu0 0.0
    %649 = vmatpush1.msra.mxu0 %v135
    %650 = vmatprep.subr.mxu0 0.0
    %651 = vmatpush1.msra.mxu0 %v132
    %652 = vmatprep.subr.mxu0 0.0
    %653 = vmatpush1.msra.mxu0 %v129
    %654 = vmatprep.subr.mxu0 0.0
    %655 = vmatpush1.msra.mxu0 %v126
    %656 = vmatprep.subr.mxu0 0.0
    %657 = vmatpush1.msra.mxu0 %v123
    %658 = vmatprep.subr.mxu0 0.0
    %659 = vmatpush1.msra.mxu0 %v120
    %660 = vmatprep.subr.mxu0 0.0
    %661 = vmatpush1.msra.mxu0 %v117
    %662 = vmatprep.subr.mxu0 0.0
    %663 = vmatpush1.msra.mxu0 %v114
    %664 = vmatprep.subr.mxu0 0.0
    %665 = vmatpush2.msra.mxu0 0.0
    %666 = vmatprep.subr.mxu0 0.0
    %667 = vmatpush2.msra.mxu0 0.0
    %668 = vmatprep.subr.mxu0 0.0
    %669 = vmatpush2.msra.mxu0 0.0
    %670 = vmatprep.subr.mxu0 0.0
    %671 = vmatpush2.msra.mxu0 0.0
    %672 = vmatprep.subr.mxu0 0.0
    %673 = vmatpush2.msra.mxu0 0.0
    %674 = vmatprep.subr.mxu0 0.0
    %675 = vmatpush2.msra.mxu0 0.0
    %676 = vmatprep.subr.mxu0 0.0
    %677 = vmatpush2.msra.mxu0 0.0
    %678 = vmatprep.subr.mxu0 0.0
    %679 = vmatpush2.msra.mxu0 0.0
    %680 = vmatprep.subr.mxu0 0.0
    %681 = vmatpush2.msra.mxu0 0.0
    %682 = vmatprep.subr.mxu0 0.0
    %683 = vmatpush2.msra.mxu0 0.0
    %684 = vmatprep.subr.mxu0 0.0
    %685 = vmatpush2.msra.mxu0 0.0
    %686 = vmatprep.subr.mxu0 0.0
    %687 = vmatpush2.msra.mxu0 0.0
    %688 = vmatprep.subr.mxu0 0.0
    %689 = vmatpush2.msra.mxu0 0.0
    %690 = vmatprep.subr.mxu0 0.0
    %691 = vmatpush2.msra.mxu0 0.0
    %692 = vmatprep.subr.mxu0 0.0
    %693 = vmatpush2.msra.mxu0 0.0
    %694 = vmatprep.subr.mxu0 0.0
    %695 = vmatpush2.msra.mxu0 0.0
    %696 = vmatprep.mubr.f32.mxu0 0.0
    %697 = vmatmul.mubr.f32.gmra.mxu0 %v560
    %v698 = vpop.f32.mrf.mxu0
    %v699 = vadd.f32 0.0, %v698
    %v700 = vpop.f32.mrf.mxu0
    %701 = vdwg.mxu0
    %v702 = vadd.f32 %v252, %v628
    %v703 = vxor.u32 %v702, 2147483648
    %v704 = vmul.f32 %v703, 1.442695
    %v705 = vpow.pop %v704
    %v706 = vadd.f32 %v705, 1.0
    %v707 = vrcp.pop %v706
    %v708 = vmul.f32 1.0, %v707
    %v709 = vadd.f32 %v254, %v630
    %v710 = vxor.u32 %v709, 2147483648
    %v711 = vmul.f32 %v710, 1.442695
    %v712 = vpow.pop %v711
    %v713 = vadd.f32 %v712, 1.0
    %v714 = vrcp.pop %v713
    %v715 = vmul.f32 1.0, %v714
    %v716 = vadd.f32 %v699, %v166
    %v717 = vmul.f32 %v708, %v716
    %v718 = vadd.f32 %v364, %v717
    %v719 = vtanh.pop %v718
    %v720 = vsub.f32 1.0, %v715
    %v721 = vmul.f32 %v720, %v719
    %v722 = vmul.f32 %v715, %v560
    %v723 = vadd.f32 %v721, %v722
    %724 = vmatprep.subr.mxu0 %v158
    %725 = vmatpush1.msra.mxu0 %v157
    %726 = vmatprep.subr.mxu0 %v155
    %727 = vmatpush1.msra.mxu0 %v154
    %728 = vmatprep.subr.mxu0 %v152
    %729 = vmatpush1.msra.mxu0 %v151
    %730 = vmatprep.subr.mxu0 %v149
    %731 = vmatpush1.msra.mxu0 %v148
    %732 = vmatprep.subr.mxu0 %v146
    %733 = vmatpush1.msra.mxu0 %v145
    %734 = vmatprep.subr.mxu0 %v143
    %735 = vmatpush1.msra.mxu0 %v142
    %736 = vmatprep.subr.mxu0 %v140
    %737 = vmatpush1.msra.mxu0 %v139
    %738 = vmatprep.subr.mxu0 %v137
    %739 = vmatpush1.msra.mxu0 %v136
    %740 = vmatprep.subr.mxu0 %v134
    %741 = vmatpush1.msra.mxu0 %v133
    %742 = vmatprep.subr.mxu0 %v131
    %743 = vmatpush1.msra.mxu0 %v130
    %744 = vmatprep.subr.mxu0 %v128
    %745 = vmatpush1.msra.mxu0 %v127
    %746 = vmatprep.subr.mxu0 %v125
    %747 = vmatpush1.msra.mxu0 %v124
    %748 = vmatprep.subr.mxu0 %v122
    %749 = vmatpush1.msra.mxu0 %v121
    %750 = vmatprep.subr.mxu0 %v119
    %751 = vmatpush1.msra.mxu0 %v118
    %752 = vmatprep.subr.mxu0 %v116
    %753 = vmatpush1.msra.mxu0 %v115
    %754 = vmatprep.subr.mxu0 %v113
    %755 = vmatpush1.msra.mxu0 %v112
    %756 = vmatprep.subr.mxu0 0.0
    %757 = vmatpush2.msra.mxu0 0.0
    %758 = vmatprep.subr.mxu0 0.0
    %759 = vmatpush2.msra.mxu0 0.0
    %760 = vmatprep.subr.mxu0 0.0
    %761 = vmatpush2.msra.mxu0 0.0
    %762 = vmatprep.subr.mxu0 0.0
    %763 = vmatpush2.msra.mxu0 0.0
    %764 = vmatprep.subr.mxu0 0.0
    %765 = vmatpush2.msra.mxu0 0.0
    %766 = vmatprep.subr.mxu0 0.0
    %767 = vmatpush2.msra.mxu0 0.0
    %768 = vmatprep.subr.mxu0 0.0
    %769 = vmatpush2.msra.mxu0 0.0
    %770 = vmatprep.subr.mxu0 0.0
    %771 = vmatpush2.msra.mxu0 0.0
    %772 = vmatprep.subr.mxu0 0.0
    %773 = vmatpush2.msra.mxu0 0.0
    %774 = vmatprep.subr.mxu0 0.0
    %775 = vmatpush2.msra.mxu0 0.0
    %776 = vmatprep.subr.mxu0 0.0
    %777 = vmatpush2.msra.mxu0 0.0
    %778 = vmatprep.subr.mxu0 0.0
    %779 = vmatpush2.msra.mxu0 0.0
    %780 = vmatprep.subr.mxu0 0.0
    %781 = vmatpush2.msra.mxu0 0.0
    %782 = vmatprep.subr.mxu0 0.0
    %783 = vmatpush2.msra.mxu0 0.0
    %784 = vmatprep.subr.mxu0 0.0
    %785 = vmatpush2.msra.mxu0 0.0
    %786 = vmatprep.subr.mxu0 0.0
    %787 = vmatpush2.msra.mxu0 0.0
    %788 = vmatprep.mubr.f32.mxu0 0.0
    %789 = vmatmul.mubr.f32.gmra.mxu0 %v723
    %v790 = vpop.f32.mrf.mxu0
    %v791 = vadd.f32 0.0, %v790
    %v792 = vpop.f32.mrf.mxu0
    %v793 = vadd.f32 0.0, %v792
    %794 = vdwg.mxu0
    %795 = vmatprep.subr.mxu0 0.0
    %796 = vmatpush1.msra.mxu0 %v159
    %797 = vmatprep.subr.mxu0 0.0
    %798 = vmatpush1.msra.mxu0 %v156
    %799 = vmatprep.subr.mxu0 0.0
    %800 = vmatpush1.msra.mxu0 %v153
    %801 = vmatprep.subr.mxu0 0.0
    %802 = vmatpush1.msra.mxu0 %v150
    %803 = vmatprep.subr.mxu0 0.0
    %804 = vmatpush1.msra.mxu0 %v147
    %805 = vmatprep.subr.mxu0 0.0
    %806 = vmatpush1.msra.mxu0 %v144
    %807 = vmatprep.subr.mxu0 0.0
    %808 = vmatpush1.msra.mxu0 %v141
    %809 = vmatprep.subr.mxu0 0.0
    %810 = vmatpush1.msra.mxu0 %v138
    %811 = vmatprep.subr.mxu0 0.0
    %812 = vmatpush1.msra.mxu0 %v135
    %813 = vmatprep.subr.mxu0 0.0
    %814 = vmatpush1.msra.mxu0 %v132
    %815 = vmatprep.subr.mxu0 0.0
    %816 = vmatpush1.msra.mxu0 %v129
    %817 = vmatprep.subr.mxu0 0.0
    %818 = vmatpush1.msra.mxu0 %v126
    %819 = vmatprep.subr.mxu0 0.0
    %820 = vmatpush1.msra.mxu0 %v123
    %821 = vmatprep.subr.mxu0 0.0
    %822 = vmatpush1.msra.mxu0 %v120
    %823 = vmatprep.subr.mxu0 0.0
    %824 = vmatpush1.msra.mxu0 %v117
    %825 = vmatprep.subr.mxu0 0.0
    %826 = vmatpush1.msra.mxu0 %v114
    %827 = vmatprep.subr.mxu0 0.0
    %828 = vmatpush2.msra.mxu0 0.0
    %829 = vmatprep.subr.mxu0 0.0
    %830 = vmatpush2.msra.mxu0 0.0
    %831 = vmatprep.subr.mxu0 0.0
    %832 = vmatpush2.msra.mxu0 0.0
    %833 = vmatprep.subr.mxu0 0.0
    %834 = vmatpush2.msra.mxu0 0.0
    %835 = vmatprep.subr.mxu0 0.0
    %836 = vmatpush2.msra.mxu0 0.0
    %837 = vmatprep.subr.mxu0 0.0
    %838 = vmatpush2.msra.mxu0 0.0
    %839 = vmatprep.subr.mxu0 0.0
    %840 = vmatpush2.msra.mxu0 0.0
    %841 = vmatprep.subr.mxu0 0.0
    %842 = vmatpush2.msra.mxu0 0.0
    %843 = vmatprep.subr.mxu0 0.0
    %844 = vmatpush2.msra.mxu0 0.0
    %845 = vmatprep.subr.mxu0 0.0
    %846 = vmatpush2.msra.mxu0 0.0
    %847 = vmatprep.subr.mxu0 0.0
    %848 = vmatpush2.msra.mxu0 0.0
    %849 = vmatprep.subr.mxu0 0.0
    %850 = vmatpush2.msra.mxu0 0.0
    %851 = vmatprep.subr.mxu0 0.0
    %852 = vmatpush2.msra.mxu0 0.0
    %853 = vmatprep.subr.mxu0 0.0
    %854 = vmatpush2.msra.mxu0 0.0
    %855 = vmatprep.subr.mxu0 0.0
    %856 = vmatpush2.msra.mxu0 0.0
    %857 = vmatprep.subr.mxu0 0.0
    %858 = vmatpush2.msra.mxu0 0.0
    %859 = vmatprep.mubr.f32.mxu0 0.0
    %860 = vmatmul.mubr.f32.gmra.mxu0 %v723
    %v861 = vpop.f32.mrf.mxu0
    %v862 = vadd.f32 0.0, %v861
    %v863 = vpop.f32.mrf.mxu0
    %864 = vdwg.mxu0
    %v865 = vadd.f32 %v258, %v791
    %v866 = vxor.u32 %v865, 2147483648
    %v867 = vmul.f32 %v866, 1.442695
    %v868 = vpow.pop %v867
    %v869 = vadd.f32 %v868, 1.0
    %v870 = vrcp.pop %v869
    %v871 = vmul.f32 1.0, %v870
    %v872 = vadd.f32 %v260, %v793
    %v873 = vxor.u32 %v872, 2147483648
    %v874 = vmul.f32 %v873, 1.442695
    %v875 = vpow.pop %v874
    %v876 = vadd.f32 %v875, 1.0
    %v877 = vrcp.pop %v876
    %v878 = vmul.f32 1.0, %v877
    %v879 = vadd.f32 %v862, %v166
    %v880 = vmul.f32 %v871, %v879
    %v881 = vadd.f32 %v369, %v880
    %v882 = vtanh.pop %v881
    %v883 = vsub.f32 1.0, %v878
    %v884 = vmul.f32 %v883, %v882
    %v885 = vmul.f32 %v878, %v723
    %v886 = vadd.f32 %v884, %v885
    %887 = vmatprep.subr.mxu0 %v158
    %888 = vmatpush1.msra.mxu0 %v157
    %889 = vmatprep.subr.mxu0 %v155
    %890 = vmatpush1.msra.mxu0 %v154
    %891 = vmatprep.subr.mxu0 %v152
    %892 = vmatpush1.msra.mxu0 %v151
    %893 = vmatprep.subr.mxu0 %v149
    %894 = vmatpush1.msra.mxu0 %v148
    %895 = vmatprep.subr.mxu0 %v146
    %896 = vmatpush1.msra.mxu0 %v145
    %897 = vmatprep.subr.mxu0 %v143
    %898 = vmatpush1.msra.mxu0 %v142
    %899 = vmatprep.subr.mxu0 %v140
    %900 = vmatpush1.msra.mxu0 %v139
    %901 = vmatprep.subr.mxu0 %v137
    %902 = vmatpush1.msra.mxu0 %v136
    %903 = vmatprep.subr.mxu0 %v134
    %904 = vmatpush1.msra.mxu0 %v133
    %905 = vmatprep.subr.mxu0 %v131
    %906 = vmatpush1.msra.mxu0 %v130
    %907 = vmatprep.subr.mxu0 %v128
    %908 = vmatpush1.msra.mxu0 %v127
    %909 = vmatprep.subr.mxu0 %v125
    %910 = vmatpush1.msra.mxu0 %v124
    %911 = vmatprep.subr.mxu0 %v122
    %912 = vmatpush1.msra.mxu0 %v121
    %913 = vmatprep.subr.mxu0 %v119
    %914 = vmatpush1.msra.mxu0 %v118
    %915 = vmatprep.subr.mxu0 %v116
    %916 = vmatpush1.msra.mxu0 %v115
    %917 = vmatprep.subr.mxu0 %v113
    %918 = vmatpush1.msra.mxu0 %v112
    %919 = vmatprep.subr.mxu0 0.0
    %920 = vmatpush2.msra.mxu0 0.0
    %921 = vmatprep.subr.mxu0 0.0
    %922 = vmatpush2.msra.mxu0 0.0
    %923 = vmatprep.subr.mxu0 0.0
    %924 = vmatpush2.msra.mxu0 0.0
    %925 = vmatprep.subr.mxu0 0.0
    %926 = vmatpush2.msra.mxu0 0.0
    %927 = vmatprep.subr.mxu0 0.0
    %928 = vmatpush2.msra.mxu0 0.0
    %929 = vmatprep.subr.mxu0 0.0
    %930 = vmatpush2.msra.mxu0 0.0
    %931 = vmatprep.subr.mxu0 0.0
    %932 = vmatpush2.msra.mxu0 0.0
    %933 = vmatprep.subr.mxu0 0.0
    %934 = vmatpush2.msra.mxu0 0.0
    %935 = vmatprep.subr.mxu0 0.0
    %936 = vmatpush2.msra.mxu0 0.0
    %937 = vmatprep.subr.mxu0 0.0
    %938 = vmatpush2.msra.mxu0 0.0
    %939 = vmatprep.subr.mxu0 0.0
    %940 = vmatpush2.msra.mxu0 0.0
    %941 = vmatprep.subr.mxu0 0.0
    %942 = vmatpush2.msra.mxu0 0.0
    %943 = vmatprep.subr.mxu0 0.0
    %944 = vmatpush2.msra.mxu0 0.0
    %945 = vmatprep.subr.mxu0 0.0
    %946 = vmatpush2.msra.mxu0 0.0
    %947 = vmatprep.subr.mxu0 0.0
    %948 = vmatpush2.msra.mxu0 0.0
    %949 = vmatprep.subr.mxu0 0.0
    %950 = vmatpush2.msra.mxu0 0.0
    %951 = vmatprep.mubr.f32.mxu0 0.0
    %952 = vmatmul.mubr.f32.gmra.mxu0 %v886
    %v953 = vpop.f32.mrf.mxu0
    %v954 = vadd.f32 0.0, %v953
    %v955 = vpop.f32.mrf.mxu0
    %v956 = vadd.f32 0.0, %v955
    %957 = vdwg.mxu0
    %958 = vmatprep.subr.mxu0 0.0
    %959 = vmatpush1.msra.mxu0 %v159
    %960 = vmatprep.subr.mxu0 0.0
    %961 = vmatpush1.msra.mxu0 %v156
    %962 = vmatprep.subr.mxu0 0.0
    %963 = vmatpush1.msra.mxu0 %v153
    %964 = vmatprep.subr.mxu0 0.0
    %965 = vmatpush1.msra.mxu0 %v150
    %966 = vmatprep.subr.mxu0 0.0
    %967 = vmatpush1.msra.mxu0 %v147
    %968 = vmatprep.subr.mxu0 0.0
    %969 = vmatpush1.msra.mxu0 %v144
    %970 = vmatprep.subr.mxu0 0.0
    %971 = vmatpush1.msra.mxu0 %v141
    %972 = vmatprep.subr.mxu0 0.0
    %973 = vmatpush1.msra.mxu0 %v138
    %974 = vmatprep.subr.mxu0 0.0
    %975 = vmatpush1.msra.mxu0 %v135
    %976 = vmatprep.subr.mxu0 0.0
    %977 = vmatpush1.msra.mxu0 %v132
    %978 = vmatprep.subr.mxu0 0.0
    %979 = vmatpush1.msra.mxu0 %v129
    %980 = vmatprep.subr.mxu0 0.0
    %981 = vmatpush1.msra.mxu0 %v126
    %982 = vmatprep.subr.mxu0 0.0
    %983 = vmatpush1.msra.mxu0 %v123
    %984 = vmatprep.subr.mxu0 0.0
    %985 = vmatpush1.msra.mxu0 %v120
    %986 = vmatprep.subr.mxu0 0.0
    %987 = vmatpush1.msra.mxu0 %v117
    %988 = vmatprep.subr.mxu0 0.0
    %989 = vmatpush1.msra.mxu0 %v114
    %990 = vmatprep.subr.mxu0 0.0
    %991 = vmatpush2.msra.mxu0 0.0
    %992 = vmatprep.subr.mxu0 0.0
    %993 = vmatpush2.msra.mxu0 0.0
    %994 = vmatprep.subr.mxu0 0.0
    %995 = vmatpush2.msra.mxu0 0.0
    %996 = vmatprep.subr.mxu0 0.0
    %997 = vmatpush2.msra.mxu0 0.0
    %998 = vmatprep.subr.mxu0 0.0
    %999 = vmatpush2.msra.mxu0 0.0
    %1000 = vmatprep.subr.mxu0 0.0
    %1001 = vmatpush2.msra.mxu0 0.0
    %1002 = vmatprep.subr.mxu0 0.0
    %1003 = vmatpush2.msra.mxu0 0.0
    %1004 = vmatprep.subr.mxu0 0.0
    %1005 = vmatpush2.msra.mxu0 0.0
    %1006 = vmatprep.subr.mxu0 0.0
    %1007 = vmatpush2.msra.mxu0 0.0
    %1008 = vmatprep.subr.mxu0 0.0
    %1009 = vmatpush2.msra.mxu0 0.0
    %1010 = vmatprep.subr.mxu0 0.0
    %1011 = vmatpush2.msra.mxu0 0.0
    %1012 = vmatprep.subr.mxu0 0.0
    %1013 = vmatpush2.msra.mxu0 0.0
    %1014 = vmatprep.subr.mxu0 0.0
    %1015 = vmatpush2.msra.mxu0 0.0
    %1016 = vmatprep.subr.mxu0 0.0
    %1017 = vmatpush2.msra.mxu0 0.0
    %1018 = vmatprep.subr.mxu0 0.0
    %1019 = vmatpush2.msra.mxu0 0.0
    %1020 = vmatprep.subr.mxu0 0.0
    %1021 = vmatpush2.msra.mxu0 0.0
    %1022 = vmatprep.mubr.f32.mxu0 0.0
    %1023 = vmatmul.mubr.f32.gmra.mxu0 %v886
    %v1024 = vpop.f32.mrf.mxu0
    %v1025 = vadd.f32 0.0, %v1024
    %v1026 = vpop.f32.mrf.mxu0
    %1027 = vdwg.mxu0
    %v1028 = vadd.f32 %v264, %v954
    %v1029 = vxor.u32 %v1028, 2147483648
    %v1030 = vmul.f32 %v1029, 1.442695
    %v1031 = vpow.pop %v1030
    %v1032 = vadd.f32 %v1031, 1.0
    %v1033 = vrcp.pop %v1032
    %v1034 = vmul.f32 1.0, %v1033
    %v1035 = vadd.f32 %v266, %v956
    %v1036 = vxor.u32 %v1035, 2147483648
    %v1037 = vmul.f32 %v1036, 1.442695
    %v1038 = vpow.pop %v1037
    %v1039 = vadd.f32 %v1038, 1.0
    %v1040 = vrcp.pop %v1039
    %v1041 = vmul.f32 1.0, %v1040
    %v1042 = vadd.f32 %v1025, %v166
    %v1043 = vmul.f32 %v1034, %v1042
    %v1044 = vadd.f32 %v374, %v1043
    %v1045 = vtanh.pop %v1044
    %v1046 = vsub.f32 1.0, %v1041
    %v1047 = vmul.f32 %v1046, %v1045
    %v1048 = vmul.f32 %v1041, %v886
    %v1049 = vadd.f32 %v1047, %v1048
    %1050 = vmatprep.subr.mxu0 %v158
    %1051 = vmatpush1.msra.mxu0 %v157
    %1052 = vmatprep.subr.mxu0 %v155
    %1053 = vmatpush1.msra.mxu0 %v154
    %1054 = vmatprep.subr.mxu0 %v152
    %1055 = vmatpush1.msra.mxu0 %v151
    %1056 = vmatprep.subr.mxu0 %v149
    %1057 = vmatpush1.msra.mxu0 %v148
    %1058 = vmatprep.subr.mxu0 %v146
    %1059 = vmatpush1.msra.mxu0 %v145
    %1060 = vmatprep.subr.mxu0 %v143
    %1061 = vmatpush1.msra.mxu0 %v142
    %1062 = vmatprep.subr.mxu0 %v140
    %1063 = vmatpush1.msra.mxu0 %v139
    %1064 = vmatprep.subr.mxu0 %v137
    %1065 = vmatpush1.msra.mxu0 %v136
    %1066 = vmatprep.subr.mxu0 %v134
    %1067 = vmatpush1.msra.mxu0 %v133
    %1068 = vmatprep.subr.mxu0 %v131
    %1069 = vmatpush1.msra.mxu0 %v130
    %1070 = vmatprep.subr.mxu0 %v128
    %1071 = vmatpush1.msra.mxu0 %v127
    %1072 = vmatprep.subr.mxu0 %v125
    %1073 = vmatpush1.msra.mxu0 %v124
    %1074 = vmatprep.subr.mxu0 %v122
    %1075 = vmatpush1.msra.mxu0 %v121
    %1076 = vmatprep.subr.mxu0 %v119
    %1077 = vmatpush1.msra.mxu0 %v118
    %1078 = vmatprep.subr.mxu0 %v116
    %1079 = vmatpush1.msra.mxu0 %v115
    %1080 = vmatprep.subr.mxu0 %v113
    %1081 = vmatpush1.msra.mxu0 %v112
    %1082 = vmatprep.subr.mxu0 0.0
    %1083 = vmatpush2.msra.mxu0 0.0
    %1084 = vmatprep.subr.mxu0 0.0
    %1085 = vmatpush2.msra.mxu0 0.0
    %1086 = vmatprep.subr.mxu0 0.0
    %1087 = vmatpush2.msra.mxu0 0.0
    %1088 = vmatprep.subr.mxu0 0.0
    %1089 = vmatpush2.msra.mxu0 0.0
    %1090 = vmatprep.subr.mxu0 0.0
    %1091 = vmatpush2.msra.mxu0 0.0
    %1092 = vmatprep.subr.mxu0 0.0
    %1093 = vmatpush2.msra.mxu0 0.0
    %1094 = vmatprep.subr.mxu0 0.0
    %1095 = vmatpush2.msra.mxu0 0.0
    %1096 = vmatprep.subr.mxu0 0.0
    %1097 = vmatpush2.msra.mxu0 0.0
    %1098 = vmatprep.subr.mxu0 0.0
    %1099 = vmatpush2.msra.mxu0 0.0
    %1100 = vmatprep.subr.mxu0 0.0
    %1101 = vmatpush2.msra.mxu0 0.0
    %1102 = vmatprep.subr.mxu0 0.0
    %1103 = vmatpush2.msra.mxu0 0.0
    %1104 = vmatprep.subr.mxu0 0.0
    %1105 = vmatpush2.msra.mxu0 0.0
    %1106 = vmatprep.subr.mxu0 0.0
    %1107 = vmatpush2.msra.mxu0 0.0
    %1108 = vmatprep.subr.mxu0 0.0
    %1109 = vmatpush2.msra.mxu0 0.0
    %1110 = vmatprep.subr.mxu0 0.0
    %1111 = vmatpush2.msra.mxu0 0.0
    %1112 = vmatprep.subr.mxu0 0.0
    %1113 = vmatpush2.msra.mxu0 0.0
    %1114 = vmatprep.mubr.f32.mxu0 0.0
    %1115 = vmatmul.mubr.f32.gmra.mxu0 %v1049
    %v1116 = vpop.f32.mrf.mxu0
    %v1117 = vadd.f32 0.0, %v1116
    %v1118 = vpop.f32.mrf.mxu0
    %v1119 = vadd.f32 0.0, %v1118
    %1120 = vdwg.mxu0
    %1121 = vmatprep.subr.mxu0 0.0
    %1122 = vmatpush1.msra.mxu0 %v159
    %1123 = vmatprep.subr.mxu0 0.0
    %1124 = vmatpush1.msra.mxu0 %v156
    %1125 = vmatprep.subr.mxu0 0.0
    %1126 = vmatpush1.msra.mxu0 %v153
    %1127 = vmatprep.subr.mxu0 0.0
    %1128 = vmatpush1.msra.mxu0 %v150
    %1129 = vmatprep.subr.mxu0 0.0
    %1130 = vmatpush1.msra.mxu0 %v147
    %1131 = vmatprep.subr.mxu0 0.0
    %1132 = vmatpush1.msra.mxu0 %v144
    %1133 = vmatprep.subr.mxu0 0.0
    %1134 = vmatpush1.msra.mxu0 %v141
    %1135 = vmatprep.subr.mxu0 0.0
    %1136 = vmatpush1.msra.mxu0 %v138
    %1137 = vmatprep.subr.mxu0 0.0
    %1138 = vmatpush1.msra.mxu0 %v135
    %1139 = vmatprep.subr.mxu0 0.0
    %1140 = vmatpush1.msra.mxu0 %v132
    %1141 = vmatprep.subr.mxu0 0.0
    %1142 = vmatpush1.msra.mxu0 %v129
    %1143 = vmatprep.subr.mxu0 0.0
    %1144 = vmatpush1.msra.mxu0 %v126
    %1145 = vmatprep.subr.mxu0 0.0
    %1146 = vmatpush1.msra.mxu0 %v123
    %1147 = vmatprep.subr.mxu0 0.0
    %1148 = vmatpush1.msra.mxu0 %v120
    %1149 = vmatprep.subr.mxu0 0.0
    %1150 = vmatpush1.msra.mxu0 %v117
    %1151 = vmatprep.subr.mxu0 0.0
    %1152 = vmatpush1.msra.mxu0 %v114
    %1153 = vmatprep.subr.mxu0 0.0
    %1154 = vmatpush2.msra.mxu0 0.0
    %1155 = vmatprep.subr.mxu0 0.0
    %1156 = vmatpush2.msra.mxu0 0.0
    %1157 = vmatprep.subr.mxu0 0.0
    %1158 = vmatpush2.msra.mxu0 0.0
    %1159 = vmatprep.subr.mxu0 0.0
    %1160 = vmatpush2.msra.mxu0 0.0
    %1161 = vmatprep.subr.mxu0 0.0
    %1162 = vmatpush2.msra.mxu0 0.0
    %1163 = vmatprep.subr.mxu0 0.0
    %1164 = vmatpush2.msra.mxu0 0.0
    %1165 = vmatprep.subr.mxu0 0.0
    %1166 = vmatpush2.msra.mxu0 0.0
    %1167 = vmatprep.subr.mxu0 0.0
    %1168 = vmatpush2.msra.mxu0 0.0
    %1169 = vmatprep.subr.mxu0 0.0
    %1170 = vmatpush2.msra.mxu0 0.0
    %1171 = vmatprep.subr.mxu0 0.0
    %1172 = vmatpush2.msra.mxu0 0.0
    %1173 = vmatprep.subr.mxu0 0.0
    %1174 = vmatpush2.msra.mxu0 0.0
    %1175 = vmatprep.subr.mxu0 0.0
    %1176 = vmatpush2.msra.mxu0 0.0
    %1177 = vmatprep.subr.mxu0 0.0
    %1178 = vmatpush2.msra.mxu0 0.0
    %1179 = vmatprep.subr.mxu0 0.0
    %1180 = vmatpush2.msra.mxu0 0.0
    %1181 = vmatprep.subr.mxu0 0.0
    %1182 = vmatpush2.msra.mxu0 0.0
    %1183 = vmatprep.subr.mxu0 0.0
    %1184 = vmatpush2.msra.mxu0 0.0
    %1185 = vmatprep.mubr.f32.mxu0 0.0
    %1186 = vmatmul.mubr.f32.gmra.mxu0 %v1049
    %v1187 = vpop.f32.mrf.mxu0
    %v1188 = vadd.f32 0.0, %v1187
    %v1189 = vpop.f32.mrf.mxu0
    %1190 = vdwg.mxu0
    %v1191 = vadd.f32 %v270, %v1117
    %v1192 = vxor.u32 %v1191, 2147483648
    %v1193 = vmul.f32 %v1192, 1.442695
    %v1194 = vpow.pop %v1193
    %v1195 = vadd.f32 %v1194, 1.0
    %v1196 = vrcp.pop %v1195
    %v1197 = vmul.f32 1.0, %v1196
    %v1198 = vadd.f32 %v272, %v1119
    %v1199 = vxor.u32 %v1198, 2147483648
    %v1200 = vmul.f32 %v1199, 1.442695
    %v1201 = vpow.pop %v1200
    %v1202 = vadd.f32 %v1201, 1.0
    %v1203 = vrcp.pop %v1202
    %v1204 = vmul.f32 1.0, %v1203
    %v1205 = vadd.f32 %v1188, %v166
    %v1206 = vmul.f32 %v1197, %v1205
    %v1207 = vadd.f32 %v379, %v1206
    %v1208 = vtanh.pop %v1207
    %v1209 = vsub.f32 1.0, %v1204
    %v1210 = vmul.f32 %v1209, %v1208
    %v1211 = vmul.f32 %v1204, %v1049
    %v1212 = vadd.f32 %v1210, %v1211
    %1213 = vmatprep.subr.mxu0 %v158
    %1214 = vmatpush1.msra.mxu0 %v157
    %1215 = vmatprep.subr.mxu0 %v155
    %1216 = vmatpush1.msra.mxu0 %v154
    %1217 = vmatprep.subr.mxu0 %v152
    %1218 = vmatpush1.msra.mxu0 %v151
    %1219 = vmatprep.subr.mxu0 %v149
    %1220 = vmatpush1.msra.mxu0 %v148
    %1221 = vmatprep.subr.mxu0 %v146
    %1222 = vmatpush1.msra.mxu0 %v145
    %1223 = vmatprep.subr.mxu0 %v143
    %1224 = vmatpush1.msra.mxu0 %v142
    %1225 = vmatprep.subr.mxu0 %v140
    %1226 = vmatpush1.msra.mxu0 %v139
    %1227 = vmatprep.subr.mxu0 %v137
    %1228 = vmatpush1.msra.mxu0 %v136
    %1229 = vmatprep.subr.mxu0 %v134
    %1230 = vmatpush1.msra.mxu0 %v133
    %1231 = vmatprep.subr.mxu0 %v131
    %1232 = vmatpush1.msra.mxu0 %v130
    %1233 = vmatprep.subr.mxu0 %v128
    %1234 = vmatpush1.msra.mxu0 %v127
    %1235 = vmatprep.subr.mxu0 %v125
    %1236 = vmatpush1.msra.mxu0 %v124
    %1237 = vmatprep.subr.mxu0 %v122
    %1238 = vmatpush1.msra.mxu0 %v121
    %1239 = vmatprep.subr.mxu0 %v119
    %1240 = vmatpush1.msra.mxu0 %v118
    %1241 = vmatprep.subr.mxu0 %v116
    %1242 = vmatpush1.msra.mxu0 %v115
    %1243 = vmatprep.subr.mxu0 %v113
    %1244 = vmatpush1.msra.mxu0 %v112
    %1245 = vmatprep.subr.mxu0 0.0
    %1246 = vmatpush2.msra.mxu0 0.0
    %1247 = vmatprep.subr.mxu0 0.0
    %1248 = vmatpush2.msra.mxu0 0.0
    %1249 = vmatprep.subr.mxu0 0.0
    %1250 = vmatpush2.msra.mxu0 0.0
    %1251 = vmatprep.subr.mxu0 0.0
    %1252 = vmatpush2.msra.mxu0 0.0
    %1253 = vmatprep.subr.mxu0 0.0
    %1254 = vmatpush2.msra.mxu0 0.0
    %1255 = vmatprep.subr.mxu0 0.0
    %1256 = vmatpush2.msra.mxu0 0.0
    %1257 = vmatprep.subr.mxu0 0.0
    %1258 = vmatpush2.msra.mxu0 0.0
    %1259 = vmatprep.subr.mxu0 0.0
    %1260 = vmatpush2.msra.mxu0 0.0
    %1261 = vmatprep.subr.mxu0 0.0
    %1262 = vmatpush2.msra.mxu0 0.0
    %1263 = vmatprep.subr.mxu0 0.0
    %1264 = vmatpush2.msra.mxu0 0.0
    %1265 = vmatprep.subr.mxu0 0.0
    %1266 = vmatpush2.msra.mxu0 0.0
    %1267 = vmatprep.subr.mxu0 0.0
    %1268 = vmatpush2.msra.mxu0 0.0
    %1269 = vmatprep.subr.mxu0 0.0
    %1270 = vmatpush2.msra.mxu0 0.0
    %1271 = vmatprep.subr.mxu0 0.0
    %1272 = vmatpush2.msra.mxu0 0.0
    %1273 = vmatprep.subr.mxu0 0.0
    %1274 = vmatpush2.msra.mxu0 0.0
    %1275 = vmatprep.subr.mxu0 0.0
    %1276 = vmatpush2.msra.mxu0 0.0
    %1277 = vmatprep.mubr.f32.mxu0 0.0
    %1278 = vmatmul.mubr.f32.gmra.mxu0 %v1212
    %v1279 = vpop.f32.mrf.mxu0
    %v1280 = vadd.f32 0.0, %v1279
    %v1281 = vpop.f32.mrf.mxu0
    %v1282 = vadd.f32 0.0, %v1281
    %1283 = vdwg.mxu0
    %1284 = vmatprep.subr.mxu0 0.0
    %1285 = vmatpush1.msra.mxu0 %v159
    %1286 = vmatprep.subr.mxu0 0.0
    %1287 = vmatpush1.msra.mxu0 %v156
    %1288 = vmatprep.subr.mxu0 0.0
    %1289 = vmatpush1.msra.mxu0 %v153
    %1290 = vmatprep.subr.mxu0 0.0
    %1291 = vmatpush1.msra.mxu0 %v150
    %1292 = vmatprep.subr.mxu0 0.0
    %1293 = vmatpush1.msra.mxu0 %v147
    %1294 = vmatprep.subr.mxu0 0.0
    %1295 = vmatpush1.msra.mxu0 %v144
    %1296 = vmatprep.subr.mxu0 0.0
    %1297 = vmatpush1.msra.mxu0 %v141
    %1298 = vmatprep.subr.mxu0 0.0
    %1299 = vmatpush1.msra.mxu0 %v138
    %1300 = vmatprep.subr.mxu0 0.0
    %1301 = vmatpush1.msra.mxu0 %v135
    %1302 = vmatprep.subr.mxu0 0.0
    %1303 = vmatpush1.msra.mxu0 %v132
    %1304 = vmatprep.subr.mxu0 0.0
    %1305 = vmatpush1.msra.mxu0 %v129
    %1306 = vmatprep.subr.mxu0 0.0
    %1307 = vmatpush1.msra.mxu0 %v126
    %1308 = vmatprep.subr.mxu0 0.0
    %1309 = vmatpush1.msra.mxu0 %v123
    %1310 = vmatprep.subr.mxu0 0.0
    %1311 = vmatpush1.msra.mxu0 %v120
    %1312 = vmatprep.subr.mxu0 0.0
    %1313 = vmatpush1.msra.mxu0 %v117
    %1314 = vmatprep.subr.mxu0 0.0
    %1315 = vmatpush1.msra.mxu0 %v114
    %1316 = vmatprep.subr.mxu0 0.0
    %1317 = vmatpush2.msra.mxu0 0.0
    %1318 = vmatprep.subr.mxu0 0.0
    %1319 = vmatpush2.msra.mxu0 0.0
    %1320 = vmatprep.subr.mxu0 0.0
    %1321 = vmatpush2.msra.mxu0 0.0
    %1322 = vmatprep.subr.mxu0 0.0
    %1323 = vmatpush2.msra.mxu0 0.0
    %1324 = vmatprep.subr.mxu0 0.0
    %1325 = vmatpush2.msra.mxu0 0.0
    %1326 = vmatprep.subr.mxu0 0.0
    %1327 = vmatpush2.msra.mxu0 0.0
    %1328 = vmatprep.subr.mxu0 0.0
    %1329 = vmatpush2.msra.mxu0 0.0
    %1330 = vmatprep.subr.mxu0 0.0
    %1331 = vmatpush2.msra.mxu0 0.0
    %1332 = vmatprep.subr.mxu0 0.0
    %1333 = vmatpush2.msra.mxu0 0.0
    %1334 = vmatprep.subr.mxu0 0.0
    %1335 = vmatpush2.msra.mxu0 0.0
    %1336 = vmatprep.subr.mxu0 0.0
    %1337 = vmatpush2.msra.mxu0 0.0
    %1338 = vmatprep.subr.mxu0 0.0
    %1339 = vmatpush2.msra.mxu0 0.0
    %1340 = vmatprep.subr.mxu0 0.0
    %1341 = vmatpush2.msra.mxu0 0.0
    %1342 = vmatprep.subr.mxu0 0.0
    %1343 = vmatpush2.msra.mxu0 0.0
    %1344 = vmatprep.subr.mxu0 0.0
    %1345 = vmatpush2.msra.mxu0 0.0
    %1346 = vmatprep.subr.mxu0 0.0
    %1347 = vmatpush2.msra.mxu0 0.0
    %1348 = vmatprep.mubr.f32.mxu0 0.0
    %1349 = vmatmul.mubr.f32.gmra.mxu0 %v1212
    %v1350 = vpop.f32.mrf.mxu0
    %v1351 = vadd.f32 0.0, %v1350
    %v1352 = vpop.f32.mrf.mxu0
    %1353 = vdwg.mxu0
    %v1354 = vadd.f32 %v276, %v1280
    %v1355 = vxor.u32 %v1354, 2147483648
    %v1356 = vmul.f32 %v1355, 1.442695
    %v1357 = vpow.pop %v1356
    %v1358 = vadd.f32 %v1357, 1.0
    %v1359 = vrcp.pop %v1358
    %v1360 = vmul.f32 1.0, %v1359
    %v1361 = vadd.f32 %v278, %v1282
    %v1362 = vxor.u32 %v1361, 2147483648
    %v1363 = vmul.f32 %v1362, 1.442695
    %v1364 = vpow.pop %v1363
    %v1365 = vadd.f32 %v1364, 1.0
    %v1366 = vrcp.pop %v1365
    %v1367 = vmul.f32 1.0, %v1366
    %v1368 = vadd.f32 %v1351, %v166
    %v1369 = vmul.f32 %v1360, %v1368
    %v1370 = vadd.f32 %v384, %v1369
    %v1371 = vtanh.pop %v1370
    %v1372 = vsub.f32 1.0, %v1367
    %v1373 = vmul.f32 %v1372, %v1371
    %v1374 = vmul.f32 %v1367, %v1212
    %v1375 = vadd.f32 %v1373, %v1374
    %1376 = vmatprep.subr.mxu0 %v158
    %1377 = vmatpush1.msra.mxu0 %v157
    %1378 = vmatprep.subr.mxu0 %v155
    %1379 = vmatpush1.msra.mxu0 %v154
    %1380 = vmatprep.subr.mxu0 %v152
    %1381 = vmatpush1.msra.mxu0 %v151
    %1382 = vmatprep.subr.mxu0 %v149
    %1383 = vmatpush1.msra.mxu0 %v148
    %1384 = vmatprep.subr.mxu0 %v146
    %1385 = vmatpush1.msra.mxu0 %v145
    %1386 = vmatprep.subr.mxu0 %v143
    %1387 = vmatpush1.msra.mxu0 %v142
    %1388 = vmatprep.subr.mxu0 %v140
    %1389 = vmatpush1.msra.mxu0 %v139
    %1390 = vmatprep.subr.mxu0 %v137
    %1391 = vmatpush1.msra.mxu0 %v136
    %1392 = vmatprep.subr.mxu0 %v134
    %1393 = vmatpush1.msra.mxu0 %v133
    %1394 = vmatprep.subr.mxu0 %v131
    %1395 = vmatpush1.msra.mxu0 %v130
    %1396 = vmatprep.subr.mxu0 %v128
    %1397 = vmatpush1.msra.mxu0 %v127
    %1398 = vmatprep.subr.mxu0 %v125
    %1399 = vmatpush1.msra.mxu0 %v124
    %1400 = vmatprep.subr.mxu0 %v122
    %1401 = vmatpush1.msra.mxu0 %v121
    %1402 = vmatprep.subr.mxu0 %v119
    %1403 = vmatpush1.msra.mxu0 %v118
    %1404 = vmatprep.subr.mxu0 %v116
    %1405 = vmatpush1.msra.mxu0 %v115
    %1406 = vmatprep.subr.mxu0 %v113
    %1407 = vmatpush1.msra.mxu0 %v112
    %1408 = vmatprep.subr.mxu0 0.0
    %1409 = vmatpush2.msra.mxu0 0.0
    %1410 = vmatprep.subr.mxu0 0.0
    %1411 = vmatpush2.msra.mxu0 0.0
    %1412 = vmatprep.subr.mxu0 0.0
    %1413 = vmatpush2.msra.mxu0 0.0
    %1414 = vmatprep.subr.mxu0 0.0
    %1415 = vmatpush2.msra.mxu0 0.0
    %1416 = vmatprep.subr.mxu0 0.0
    %1417 = vmatpush2.msra.mxu0 0.0
    %1418 = vmatprep.subr.mxu0 0.0
    %1419 = vmatpush2.msra.mxu0 0.0
    %1420 = vmatprep.subr.mxu0 0.0
    %1421 = vmatpush2.msra.mxu0 0.0
    %1422 = vmatprep.subr.mxu0 0.0
    %1423 = vmatpush2.msra.mxu0 0.0
    %1424 = vmatprep.subr.mxu0 0.0
    %1425 = vmatpush2.msra.mxu0 0.0
    %1426 = vmatprep.subr.mxu0 0.0
    %1427 = vmatpush2.msra.mxu0 0.0
    %1428 = vmatprep.subr.mxu0 0.0
    %1429 = vmatpush2.msra.mxu0 0.0
    %1430 = vmatprep.subr.mxu0 0.0
    %1431 = vmatpush2.msra.mxu0 0.0
    %1432 = vmatprep.subr.mxu0 0.0
    %1433 = vmatpush2.msra.mxu0 0.0
    %1434 = vmatprep.subr.mxu0 0.0
    %1435 = vmatpush2.msra.mxu0 0.0
    %1436 = vmatprep.subr.mxu0 0.0
    %1437 = vmatpush2.msra.mxu0 0.0
    %1438 = vmatprep.subr.mxu0 0.0
    %1439 = vmatpush2.msra.mxu0 0.0
    %1440 = vmatprep.mubr.f32.mxu0 0.0
    %1441 = vmatmul.mubr.f32.gmra.mxu0 %v1375
    %v1442 = vpop.f32.mrf.mxu0
    %v1443 = vadd.f32 0.0, %v1442
    %v1444 = vpop.f32.mrf.mxu0
    %v1445 = vadd.f32 0.0, %v1444
    %1446 = vdwg.mxu0
    %1447 = vmatprep.subr.mxu0 0.0
    %1448 = vmatpush1.msra.mxu0 %v159
    %1449 = vmatprep.subr.mxu0 0.0
    %1450 = vmatpush1.msra.mxu0 %v156
    %1451 = vmatprep.subr.mxu0 0.0
    %1452 = vmatpush1.msra.mxu0 %v153
    %1453 = vmatprep.subr.mxu0 0.0
    %1454 = vmatpush1.msra.mxu0 %v150
    %1455 = vmatprep.subr.mxu0 0.0
    %1456 = vmatpush1.msra.mxu0 %v147
    %1457 = vmatprep.subr.mxu0 0.0
    %1458 = vmatpush1.msra.mxu0 %v144
    %1459 = vmatprep.subr.mxu0 0.0
    %1460 = vmatpush1.msra.mxu0 %v141
    %1461 = vmatprep.subr.mxu0 0.0
    %1462 = vmatpush1.msra.mxu0 %v138
    %1463 = vmatprep.subr.mxu0 0.0
    %1464 = vmatpush1.msra.mxu0 %v135
    %1465 = vmatprep.subr.mxu0 0.0
    %1466 = vmatpush1.msra.mxu0 %v132
    %1467 = vmatprep.subr.mxu0 0.0
    %1468 = vmatpush1.msra.mxu0 %v129
    %1469 = vmatprep.subr.mxu0 0.0
    %1470 = vmatpush1.msra.mxu0 %v126
    %1471 = vmatprep.subr.mxu0 0.0
    %1472 = vmatpush1.msra.mxu0 %v123
    %1473 = vmatprep.subr.mxu0 0.0
    %1474 = vmatpush1.msra.mxu0 %v120
    %1475 = vmatprep.subr.mxu0 0.0
    %1476 = vmatpush1.msra.mxu0 %v117
    %1477 = vmatprep.subr.mxu0 0.0
    %1478 = vmatpush1.msra.mxu0 %v114
    %1479 = vmatprep.subr.mxu0 0.0
    %1480 = vmatpush2.msra.mxu0 0.0
    %1481 = vmatprep.subr.mxu0 0.0
    %1482 = vmatpush2.msra.mxu0 0.0
    %1483 = vmatprep.subr.mxu0 0.0
    %1484 = vmatpush2.msra.mxu0 0.0
    %1485 = vmatprep.subr.mxu0 0.0
    %1486 = vmatpush2.msra.mxu0 0.0
    %1487 = vmatprep.subr.mxu0 0.0
    %1488 = vmatpush2.msra.mxu0 0.0
    %1489 = vmatprep.subr.mxu0 0.0
    %1490 = vmatpush2.msra.mxu0 0.0
    %1491 = vmatprep.subr.mxu0 0.0
    %1492 = vmatpush2.msra.mxu0 0.0
    %1493 = vmatprep.subr.mxu0 0.0
    %1494 = vmatpush2.msra.mxu0 0.0
    %1495 = vmatprep.subr.mxu0 0.0
    %1496 = vmatpush2.msra.mxu0 0.0
    %1497 = vmatprep.subr.mxu0 0.0
    %1498 = vmatpush2.msra.mxu0 0.0
    %1499 = vmatprep.subr.mxu0 0.0
    %1500 = vmatpush2.msra.mxu0 0.0
    %1501 = vmatprep.subr.mxu0 0.0
    %1502 = vmatpush2.msra.mxu0 0.0
    %1503 = vmatprep.subr.mxu0 0.0
    %1504 = vmatpush2.msra.mxu0 0.0
    %1505 = vmatprep.subr.mxu0 0.0
    %1506 = vmatpush2.msra.mxu0 0.0
    %1507 = vmatprep.subr.mxu0 0.0
    %1508 = vmatpush2.msra.mxu0 0.0
    %1509 = vmatprep.subr.mxu0 0.0
    %1510 = vmatpush2.msra.mxu0 0.0
    %1511 = vmatprep.mubr.f32.mxu0 0.0
    %1512 = vmatmul.mubr.f32.gmra.mxu0 %v1375
    %v1513 = vpop.f32.mrf.mxu0
    %v1514 = vadd.f32 0.0, %v1513
    %v1515 = vpop.f32.mrf.mxu0
    %1516 = vdwg.mxu0
    %v1517 = vadd.f32 %v282, %v1443
    %v1518 = vxor.u32 %v1517, 2147483648
    %v1519 = vmul.f32 %v1518, 1.442695
    %v1520 = vpow.pop %v1519
    %v1521 = vadd.f32 %v1520, 1.0
    %v1522 = vrcp.pop %v1521
    %v1523 = vmul.f32 1.0, %v1522
    %v1524 = vadd.f32 %v284, %v1445
    %v1525 = vxor.u32 %v1524, 2147483648
    %v1526 = vmul.f32 %v1525, 1.442695
    %v1527 = vpow.pop %v1526
    %v1528 = vadd.f32 %v1527, 1.0
    %v1529 = vrcp.pop %v1528
    %v1530 = vmul.f32 1.0, %v1529
    %v1531 = vadd.f32 %v1514, %v166
    %v1532 = vmul.f32 %v1523, %v1531
    %v1533 = vadd.f32 %v389, %v1532
    %v1534 = vtanh.pop %v1533
    %v1535 = vsub.f32 1.0, %v1530
    %v1536 = vmul.f32 %v1535, %v1534
    %v1537 = vmul.f32 %v1530, %v1375
    %v1538 = vadd.f32 %v1536, %v1537
    %1539 = vmatprep.subr.mxu0 %v158
    %1540 = vmatpush1.msra.mxu0 %v157
    %1541 = vmatprep.subr.mxu0 %v155
    %1542 = vmatpush1.msra.mxu0 %v154
    %1543 = vmatprep.subr.mxu0 %v152
    %1544 = vmatpush1.msra.mxu0 %v151
    %1545 = vmatprep.subr.mxu0 %v149
    %1546 = vmatpush1.msra.mxu0 %v148
    %1547 = vmatprep.subr.mxu0 %v146
    %1548 = vmatpush1.msra.mxu0 %v145
    %1549 = vmatprep.subr.mxu0 %v143
    %1550 = vmatpush1.msra.mxu0 %v142
    %1551 = vmatprep.subr.mxu0 %v140
    %1552 = vmatpush1.msra.mxu0 %v139
    %1553 = vmatprep.subr.mxu0 %v137
    %1554 = vmatpush1.msra.mxu0 %v136
    %1555 = vmatprep.subr.mxu0 %v134
    %1556 = vmatpush1.msra.mxu0 %v133
    %1557 = vmatprep.subr.mxu0 %v131
    %1558 = vmatpush1.msra.mxu0 %v130
    %1559 = vmatprep.subr.mxu0 %v128
    %1560 = vmatpush1.msra.mxu0 %v127
    %1561 = vmatprep.subr.mxu0 %v125
    %1562 = vmatpush1.msra.mxu0 %v124
    %1563 = vmatprep.subr.mxu0 %v122
    %1564 = vmatpush1.msra.mxu0 %v121
    %1565 = vmatprep.subr.mxu0 %v119
    %1566 = vmatpush1.msra.mxu0 %v118
    %1567 = vmatprep.subr.mxu0 %v116
    %1568 = vmatpush1.msra.mxu0 %v115
    %1569 = vmatprep.subr.mxu0 %v113
    %1570 = vmatpush1.msra.mxu0 %v112
    %1571 = vmatprep.subr.mxu0 0.0
    %1572 = vmatpush2.msra.mxu0 0.0
    %1573 = vmatprep.subr.mxu0 0.0
    %1574 = vmatpush2.msra.mxu0 0.0
    %1575 = vmatprep.subr.mxu0 0.0
    %1576 = vmatpush2.msra.mxu0 0.0
    %1577 = vmatprep.subr.mxu0 0.0
    %1578 = vmatpush2.msra.mxu0 0.0
    %1579 = vmatprep.subr.mxu0 0.0
    %1580 = vmatpush2.msra.mxu0 0.0
    %1581 = vmatprep.subr.mxu0 0.0
    %1582 = vmatpush2.msra.mxu0 0.0
    %1583 = vmatprep.subr.mxu0 0.0
    %1584 = vmatpush2.msra.mxu0 0.0
    %1585 = vmatprep.subr.mxu0 0.0
    %1586 = vmatpush2.msra.mxu0 0.0
    %1587 = vmatprep.subr.mxu0 0.0
    %1588 = vmatpush2.msra.mxu0 0.0
    %1589 = vmatprep.subr.mxu0 0.0
    %1590 = vmatpush2.msra.mxu0 0.0
    %1591 = vmatprep.subr.mxu0 0.0
    %1592 = vmatpush2.msra.mxu0 0.0
    %1593 = vmatprep.subr.mxu0 0.0
    %1594 = vmatpush2.msra.mxu0 0.0
    %1595 = vmatprep.subr.mxu0 0.0
    %1596 = vmatpush2.msra.mxu0 0.0
    %1597 = vmatprep.subr.mxu0 0.0
    %1598 = vmatpush2.msra.mxu0 0.0
    %1599 = vmatprep.subr.mxu0 0.0
    %1600 = vmatpush2.msra.mxu0 0.0
    %1601 = vmatprep.subr.mxu0 0.0
    %1602 = vmatpush2.msra.mxu0 0.0
    %1603 = vmatprep.mubr.f32.mxu0 0.0
    %1604 = vmatmul.mubr.f32.gmra.mxu0 %v1538
    %v1605 = vpop.f32.mrf.mxu0
    %v1606 = vadd.f32 0.0, %v1605
    %v1607 = vpop.f32.mrf.mxu0
    %v1608 = vadd.f32 0.0, %v1607
    %1609 = vdwg.mxu0
    %1610 = vmatprep.subr.mxu0 0.0
    %1611 = vmatpush1.msra.mxu0 %v159
    %1612 = vmatprep.subr.mxu0 0.0
    %1613 = vmatpush1.msra.mxu0 %v156
    %1614 = vmatprep.subr.mxu0 0.0
    %1615 = vmatpush1.msra.mxu0 %v153
    %1616 = vmatprep.subr.mxu0 0.0
    %1617 = vmatpush1.msra.mxu0 %v150
    %1618 = vmatprep.subr.mxu0 0.0
    %1619 = vmatpush1.msra.mxu0 %v147
    %1620 = vmatprep.subr.mxu0 0.0
    %1621 = vmatpush1.msra.mxu0 %v144
    %1622 = vmatprep.subr.mxu0 0.0
    %1623 = vmatpush1.msra.mxu0 %v141
    %1624 = vmatprep.subr.mxu0 0.0
    %1625 = vmatpush1.msra.mxu0 %v138
    %1626 = vmatprep.subr.mxu0 0.0
    %1627 = vmatpush1.msra.mxu0 %v135
    %1628 = vmatprep.subr.mxu0 0.0
    %1629 = vmatpush1.msra.mxu0 %v132
    %1630 = vmatprep.subr.mxu0 0.0
    %1631 = vmatpush1.msra.mxu0 %v129
    %1632 = vmatprep.subr.mxu0 0.0
    %1633 = vmatpush1.msra.mxu0 %v126
    %1634 = vmatprep.subr.mxu0 0.0
    %1635 = vmatpush1.msra.mxu0 %v123
    %1636 = vmatprep.subr.mxu0 0.0
    %1637 = vmatpush1.msra.mxu0 %v120
    %1638 = vmatprep.subr.mxu0 0.0
    %1639 = vmatpush1.msra.mxu0 %v117
    %1640 = vmatprep.subr.mxu0 0.0
    %1641 = vmatpush1.msra.mxu0 %v114
    %1642 = vmatprep.subr.mxu0 0.0
    %1643 = vmatpush2.msra.mxu0 0.0
    %1644 = vmatprep.subr.mxu0 0.0
    %1645 = vmatpush2.msra.mxu0 0.0
    %1646 = vmatprep.subr.mxu0 0.0
    %1647 = vmatpush2.msra.mxu0 0.0
    %1648 = vmatprep.subr.mxu0 0.0
    %1649 = vmatpush2.msra.mxu0 0.0
    %1650 = vmatprep.subr.mxu0 0.0
    %1651 = vmatpush2.msra.mxu0 0.0
    %1652 = vmatprep.subr.mxu0 0.0
    %1653 = vmatpush2.msra.mxu0 0.0
    %1654 = vmatprep.subr.mxu0 0.0
    %1655 = vmatpush2.msra.mxu0 0.0
    %1656 = vmatprep.subr.mxu0 0.0
    %1657 = vmatpush2.msra.mxu0 0.0
    %1658 = vmatprep.subr.mxu0 0.0
    %1659 = vmatpush2.msra.mxu0 0.0
    %1660 = vmatprep.subr.mxu0 0.0
    %1661 = vmatpush2.msra.mxu0 0.0
    %1662 = vmatprep.subr.mxu0 0.0
    %1663 = vmatpush2.msra.mxu0 0.0
    %1664 = vmatprep.subr.mxu0 0.0
    %1665 = vmatpush2.msra.mxu0 0.0
    %1666 = vmatprep.subr.mxu0 0.0
    %1667 = vmatpush2.msra.mxu0 0.0
    %1668 = vmatprep.subr.mxu0 0.0
    %1669 = vmatpush2.msra.mxu0 0.0
    %1670 = vmatprep.subr.mxu0 0.0
    %1671 = vmatpush2.msra.mxu0 0.0
    %1672 = vmatprep.subr.mxu0 0.0
    %1673 = vmatpush2.msra.mxu0 0.0
    %1674 = vmatprep.mubr.f32.mxu0 0.0
    %1675 = vmatmul.mubr.f32.gmra.mxu0 %v1538
    %v1676 = vpop.f32.mrf.mxu0
    %v1677 = vadd.f32 0.0, %v1676
    %v1678 = vpop.f32.mrf.mxu0
    %1679 = vdwg.mxu0
    %v1680 = vadd.f32 %v288, %v1606
    %v1681 = vxor.u32 %v1680, 2147483648
    %v1682 = vmul.f32 %v1681, 1.442695
    %v1683 = vpow.pop %v1682
    %v1684 = vadd.f32 %v1683, 1.0
    %v1685 = vrcp.pop %v1684
    %v1686 = vmul.f32 1.0, %v1685
    %v1687 = vadd.f32 %v290, %v1608
    %v1688 = vxor.u32 %v1687, 2147483648
    %v1689 = vmul.f32 %v1688, 1.442695
    %v1690 = vpow.pop %v1689
    %v1691 = vadd.f32 %v1690, 1.0
    %v1692 = vrcp.pop %v1691
    %v1693 = vmul.f32 1.0, %v1692
    %v1694 = vadd.f32 %v1677, %v166
    %v1695 = vmul.f32 %v1686, %v1694
    %v1696 = vadd.f32 %v394, %v1695
    %v1697 = vtanh.pop %v1696
    %v1698 = vsub.f32 1.0, %v1693
    %v1699 = vmul.f32 %v1698, %v1697
    %v1700 = vmul.f32 %v1693, %v1538
    %v1701 = vadd.f32 %v1699, %v1700
    %1702 = vst [vmem:[#allocation8] sm:$0xff] %v1701
    %v1703 = vld [vmem:[#allocation7 + $0x318] sm:$0xff]
    %v1704 = vld [vmem:[#allocation7 + $0x320] sm:$0xff]
    %v1705 = vld [vmem:[#allocation7 + $0x328] sm:$0xff]
    %v1706 = vld [vmem:[#allocation7 + $0x330] sm:$0xff]
    %v1707 = vld [vmem:[#allocation7 + $0x338] sm:$0xff]
    %v1708 = vld [vmem:[#allocation7 + $0x340] sm:$0xff]
    %v1709 = vld [vmem:[#allocation7 + $0x348] sm:$0xff]
    %v1710 = vld [vmem:[#allocation7 + $0x350] sm:$0xff]
    %v1711 = vld [vmem:[#allocation7 + $0x358] sm:$0xff]
    %v1712 = vld [vmem:[#allocation7 + $0x360] sm:$0xff]
    %v1713 = vld [vmem:[#allocation7 + $0x368] sm:$0xff]
    %v1714 = vld [vmem:[#allocation7 + $0x370] sm:$0xff]
    %v1715 = vld [vmem:[#allocation7 + $0x378] sm:$0xff]
    %v1716 = vld [vmem:[#allocation7 + $0x380] sm:$0xff]
    %v1717 = vld [vmem:[#allocation7 + $0x388] sm:$0xff]
    %v1718 = vld [vmem:[#allocation7 + $0x390] sm:$0xff]
    %v1719 = vld [vmem:[#allocation7 + $0x398] sm:$0xff]
    %v1720 = vld [vmem:[#allocation7 + $0x3a0] sm:$0xff]
    %v1721 = vld [vmem:[#allocation7 + $0x3a8] sm:$0xff]
    %v1722 = vld [vmem:[#allocation7 + $0x3b0] sm:$0xff]
    %v1723 = vld [vmem:[#allocation7 + $0x3b8] sm:$0xff]
    %v1724 = vld [vmem:[#allocation7 + $0x3c0] sm:$0xff]
    %v1725 = vld [vmem:[#allocation7 + $0x3c8] sm:$0xff]
    %v1726 = vld [vmem:[#allocation7 + $0x3d0] sm:$0xff]
    %v1727 = vld [vmem:[#allocation7 + $0x3d8] sm:$0xff]
    %v1728 = vld [vmem:[#allocation7 + $0x3e0] sm:$0xff]
    %v1729 = vld [vmem:[#allocation7 + $0x3e8] sm:$0xff]
    %v1730 = vld [vmem:[#allocation7 + $0x3f0] sm:$0xff]
    %v1731 = vld [vmem:[#allocation7 + $0x3f8] sm:$0xff]
    %v1732 = vld [vmem:[#allocation7 + $0x400] sm:$0xff]
    %v1733 = vld [vmem:[#allocation7 + $0x408] sm:$0xff]
    %v1734 = vld [vmem:[#allocation7 + $0x410] sm:$0xff]
    %v1735 = vld [vmem:[#allocation7 + $0x418] sm:$0xff]
    %v1736 = vld [vmem:[#allocation7 + $0x420] sm:$0xff]
    %v1737 = vld [vmem:[#allocation7 + $0x428] sm:$0xff]
    %v1738 = vld [vmem:[#allocation7 + $0x430] sm:$0xff]
    %v1739 = vld [vmem:[#allocation7 + $0x438] sm:$0xff]
    %v1740 = vld [vmem:[#allocation7 + $0x440] sm:$0xff]
    %v1741 = vld [vmem:[#allocation7 + $0x448] sm:$0xff]
    %v1742 = vld [vmem:[#allocation7 + $0x450] sm:$0xff]
    %v1743 = vld [vmem:[#allocation7 + $0x458] sm:$0xff]
    %v1744 = vld [vmem:[#allocation7 + $0x460] sm:$0xff]
    %v1745 = vld [vmem:[#allocation7 + $0x468] sm:$0xff]
    %v1746 = vld [vmem:[#allocation7 + $0x470] sm:$0xff]
    %v1747 = vld [vmem:[#allocation7 + $0x478] sm:$0xff]
    %v1748 = vld [vmem:[#allocation7 + $0x480] sm:$0xff]
    %v1749 = vld [vmem:[#allocation7 + $0x488] sm:$0xff]
    %v1750 = vld [vmem:[#allocation7 + $0x490] sm:$0xff]
    %v1751 = vld [vmem:[#allocation7 + $0x498] sm:$0xff]
    %v1752 = vld [vmem:[#allocation7 + $0x4a0] sm:$0xff]
    %v1753 = vld [vmem:[#allocation7 + $0x4a8] sm:$0xff]
    %v1754 = vld [vmem:[#allocation7 + $0x4b0] sm:$0xff]
    %v1755 = vld [vmem:[#allocation7 + $0x4b8] sm:$0xff]
    %v1756 = vld [vmem:[#allocation7 + $0x4c0] sm:$0xff]
    %v1757 = vld [vmem:[#allocation7 + $0x4c8] sm:$0xff]
    %v1758 = vld [vmem:[#allocation7 + $0x4d0] sm:$0xff]
    %v1759 = vld [vmem:[#allocation7 + $0x4d8] sm:$0xff]
    %v1760 = vld [vmem:[#allocation7 + $0x4e0] sm:$0xff]
    %v1761 = vld [vmem:[#allocation7 + $0x4e8] sm:$0xff]
    %v1762 = vld [vmem:[#allocation7 + $0x4f0] sm:$0xff]
    %v1763 = vld [vmem:[#allocation7 + $0x4f8] sm:$0xff]
    %v1764 = vld [vmem:[#allocation7 + $0x500] sm:$0xff]
    %v1765 = vld [vmem:[#allocation7 + $0x508] sm:$0xff]
    %v1766 = vld [vmem:[#allocation7 + $0x510] sm:$0xff]
    %v1767 = vld [vmem:[#allocation7 + $0x518] sm:$0xff]
    %v1768 = vld [vmem:[#allocation7 + $0x520] sm:$0xff]
    %v1769 = vld [vmem:[#allocation7 + $0x528] sm:$0xff]
    %v1770 = vld [vmem:[#allocation7 + $0x530] sm:$0xff]
    %v1771 = vld [vmem:[#allocation7 + $0x538] sm:$0xff]
    %v1772 = vld [vmem:[#allocation7 + $0x540] sm:$0xff]
    %v1773 = vld [vmem:[#allocation7 + $0x548] sm:$0xff]
    %v1774 = vld [vmem:[#allocation7 + $0x550] sm:$0xff]
    %v1775 = vld [vmem:[#allocation7 + $0x558] sm:$0xff]
    %v1776 = vld [vmem:[#allocation7 + $0x560] sm:$0xff]
    %v1777 = vld [vmem:[#allocation7 + $0x568] sm:$0xff]
    %v1778 = vld [vmem:[#allocation7 + $0x570] sm:$0xff]
    %v1779 = vld [vmem:[#allocation7 + $0x578] sm:$0xff]
    %v1780 = vld [vmem:[#allocation7 + $0x580] sm:$0xff]
    %v1781 = vld [vmem:[#allocation7 + $0x588] sm:$0xff]
    %v1782 = vld [vmem:[#allocation7 + $0x590] sm:$0xff]
    %v1783 = vld [vmem:[#allocation7 + $0x598] sm:$0xff]
    %v1784 = vld [vmem:[#allocation7 + $0x5a0] sm:$0xff]
    %v1785 = vld [vmem:[#allocation7 + $0x5a8] sm:$0xff]
    %v1786 = vld [vmem:[#allocation7 + $0x5b0] sm:$0xff]
    %v1787 = vld [vmem:[#allocation7 + $0x5b8] sm:$0xff]
    %v1788 = vld [vmem:[#allocation7 + $0x5c0] sm:$0xff]
    %v1789 = vld [vmem:[#allocation7 + $0x5c8] sm:$0xff]
    %v1790 = vld [vmem:[#allocation7 + $0x5d0] sm:$0xff]
    %v1791 = vld [vmem:[#allocation7 + $0x5d8] sm:$0xff]
    %v1792 = vld [vmem:[#allocation7 + $0x5e0] sm:$0xff]
    %v1793 = vld [vmem:[#allocation7 + $0x5e8] sm:$0xff]
    %v1794 = vld [vmem:[#allocation7 + $0x5f0] sm:$0xff]
    %v1795 = vld [vmem:[#allocation7 + $0x5f8] sm:$0xff]
    %v1796 = vld [vmem:[#allocation7 + $0x600] sm:$0xff]
    %v1797 = vld [vmem:[#allocation7 + $0x608] sm:$0xff]
    %v1798 = vld [vmem:[#allocation7 + $0x610] sm:$0xff]
    %v1799 = vld [vmem:[#allocation7 + $0x618] sm:$0xff]
    %v1800 = vld [vmem:[#allocation7 + $0x620] sm:$0xff]
    %v1801 = vld [vmem:[#allocation7 + $0x628] sm:$0xff]
    %v1802 = vlaneseq
    %v1803 = vshrl.u32 %v1802, 7
    %v1804 = vsub.s32 1, %v1803
    %v1805 = vrot.slane %v1801, %v1804
    %v1806 = vlaneseq
    %v1807 = vshrl.u32 %v1806, 7
    %v1808 = vsub.s32 0, %v1807
    %v1809 = vrot.slane %v1799, %v1808
    %v1810 = vlaneseq
    %v1811 = vshrl.u32 %v1810, 7
    %v1812 = vsub.s32 0, %v1811
    %v1813 = vrot.slane %v1800, %v1812
    %v1814 = vlaneseq
    %v1815 = vshrl.u32 %v1814, 7
    %v1816 = vsub.s32 0, %v1815
    %v1817 = vrot.slane %v1801, %v1816
    %1818 = vmatprep.subr.mxu0 %v1749
    %1819 = vmatpush1.msra.mxu0 %v1748
    %1820 = vmatprep.subr.mxu0 %v1746
    %1821 = vmatpush1.msra.mxu0 %v1745
    %1822 = vmatprep.subr.mxu0 %v1743
    %1823 = vmatpush1.msra.mxu0 %v1742
    %1824 = vmatprep.subr.mxu0 %v1740
    %1825 = vmatpush1.msra.mxu0 %v1739
    %1826 = vmatprep.subr.mxu0 %v1737
    %1827 = vmatpush1.msra.mxu0 %v1736
    %1828 = vmatprep.subr.mxu0 %v1734
    %1829 = vmatpush1.msra.mxu0 %v1733
    %1830 = vmatprep.subr.mxu0 %v1731
    %1831 = vmatpush1.msra.mxu0 %v1730
    %1832 = vmatprep.subr.mxu0 %v1728
    %1833 = vmatpush1.msra.mxu0 %v1727
    %1834 = vmatprep.subr.mxu0 %v1725
    %1835 = vmatpush1.msra.mxu0 %v1724
    %1836 = vmatprep.subr.mxu0 %v1722
    %1837 = vmatpush1.msra.mxu0 %v1721
    %1838 = vmatprep.subr.mxu0 %v1719
    %1839 = vmatpush1.msra.mxu0 %v1718
    %1840 = vmatprep.subr.mxu0 %v1716
    %1841 = vmatpush1.msra.mxu0 %v1715
    %1842 = vmatprep.subr.mxu0 %v1713
    %1843 = vmatpush1.msra.mxu0 %v1712
    %1844 = vmatprep.subr.mxu0 %v1710
    %1845 = vmatpush1.msra.mxu0 %v1709
    %1846 = vmatprep.subr.mxu0 %v1707
    %1847 = vmatpush1.msra.mxu0 %v1706
    %1848 = vmatprep.subr.mxu0 %v1704
    %1849 = vmatpush1.msra.mxu0 %v1703
    %1850 = vmatprep.subr.mxu0 0.0
    %1851 = vmatpush2.msra.mxu0 0.0
    %1852 = vmatprep.subr.mxu0 0.0
    %1853 = vmatpush2.msra.mxu0 0.0
    %1854 = vmatprep.subr.mxu0 0.0
    %1855 = vmatpush2.msra.mxu0 0.0
    %1856 = vmatprep.subr.mxu0 0.0
    %1857 = vmatpush2.msra.mxu0 0.0
    %1858 = vmatprep.subr.mxu0 0.0
    %1859 = vmatpush2.msra.mxu0 0.0
    %1860 = vmatprep.subr.mxu0 0.0
    %1861 = vmatpush2.msra.mxu0 0.0
    %1862 = vmatprep.subr.mxu0 0.0
    %1863 = vmatpush2.msra.mxu0 0.0
    %1864 = vmatprep.subr.mxu0 0.0
    %1865 = vmatpush2.msra.mxu0 0.0
    %1866 = vmatprep.subr.mxu0 0.0
    %1867 = vmatpush2.msra.mxu0 0.0
    %1868 = vmatprep.subr.mxu0 0.0
    %1869 = vmatpush2.msra.mxu0 0.0
    %1870 = vmatprep.subr.mxu0 0.0
    %1871 = vmatpush2.msra.mxu0 0.0
    %1872 = vmatprep.subr.mxu0 0.0
    %1873 = vmatpush2.msra.mxu0 0.0
    %1874 = vmatprep.subr.mxu0 0.0
    %1875 = vmatpush2.msra.mxu0 0.0
    %1876 = vmatprep.subr.mxu0 0.0
    %1877 = vmatpush2.msra.mxu0 0.0
    %1878 = vmatprep.subr.mxu0 0.0
    %1879 = vmatpush2.msra.mxu0 0.0
    %1880 = vmatprep.subr.mxu0 0.0
    %1881 = vmatpush2.msra.mxu0 0.0
    %1882 = vmatprep.mubr.f32.mxu0 0.0
    %1883 = vmatmul.mubr.f32.gmra.mxu0 %v560
    %v1884 = vpop.f32.mrf.mxu0
    %v1885 = vadd.f32 %v1809, %v1884
    %v1886 = vpop.f32.mrf.mxu0
    %v1887 = vadd.f32 %v1813, %v1886
    %1888 = vmatprep.mubr.f32.mxu0 0.0
    %1889 = vmatmul.mubr.f32.gmra.mxu0 %v723
    %v1890 = vpop.f32.mrf.mxu0
    %v1891 = vadd.f32 %v1809, %v1890
    %v1892 = vpop.f32.mrf.mxu0
    %v1893 = vadd.f32 %v1813, %v1892
    %1894 = vmatprep.mubr.f32.mxu0 0.0
    %1895 = vmatmul.mubr.f32.gmra.mxu0 %v886
    %v1896 = vpop.f32.mrf.mxu0
    %v1897 = vadd.f32 %v1809, %v1896
    %v1898 = vpop.f32.mrf.mxu0
    %v1899 = vadd.f32 %v1813, %v1898
    %1900 = vmatprep.mubr.f32.mxu0 0.0
    %1901 = vmatmul.mubr.f32.gmra.mxu0 %v1049
    %v1902 = vpop.f32.mrf.mxu0
    %v1903 = vadd.f32 %v1809, %v1902
    %v1904 = vpop.f32.mrf.mxu0
    %v1905 = vadd.f32 %v1813, %v1904
    %1906 = vmatprep.mubr.f32.mxu0 0.0
    %1907 = vmatmul.mubr.f32.gmra.mxu0 %v1212
    %v1908 = vpop.f32.mrf.mxu0
    %v1909 = vadd.f32 %v1809, %v1908
    %v1910 = vpop.f32.mrf.mxu0
    %v1911 = vadd.f32 %v1813, %v1910
    %1912 = vmatprep.mubr.f32.mxu0 0.0
    %1913 = vmatmul.mubr.f32.gmra.mxu0 %v1375
    %v1914 = vpop.f32.mrf.mxu0
    %v1915 = vadd.f32 %v1809, %v1914
    %v1916 = vpop.f32.mrf.mxu0
    %v1917 = vadd.f32 %v1813, %v1916
    %1918 = vmatprep.mubr.f32.mxu0 0.0
    %1919 = vmatmul.mubr.f32.gmra.mxu0 %v1538
    %v1920 = vpop.f32.mrf.mxu0
    %v1921 = vadd.f32 %v1809, %v1920
    %v1922 = vpop.f32.mrf.mxu0
    %v1923 = vadd.f32 %v1813, %v1922
    %1924 = vmatprep.mubr.f32.mxu0 0.0
    %1925 = vmatmul.mubr.f32.gmra.mxu0 %v1701
    %v1926 = vpop.f32.mrf.mxu0
    %v1927 = vadd.f32 %v1809, %v1926
    %v1928 = vpop.f32.mrf.mxu0
    %v1929 = vadd.f32 %v1813, %v1928
    %1930 = vdwg.mxu0
    %1931 = vmatprep.subr.mxu0 0.0
    %1932 = vmatpush1.msra.mxu0 %v1750
    %1933 = vmatprep.subr.mxu0 0.0
    %1934 = vmatpush1.msra.mxu0 %v1747
    %1935 = vmatprep.subr.mxu0 0.0
    %1936 = vmatpush1.msra.mxu0 %v1744
    %1937 = vmatprep.subr.mxu0 0.0
    %1938 = vmatpush1.msra.mxu0 %v1741
    %1939 = vmatprep.subr.mxu0 0.0
    %1940 = vmatpush1.msra.mxu0 %v1738
    %1941 = vmatprep.subr.mxu0 0.0
    %1942 = vmatpush1.msra.mxu0 %v1735
    %1943 = vmatprep.subr.mxu0 0.0
    %1944 = vmatpush1.msra.mxu0 %v1732
    %1945 = vmatprep.subr.mxu0 0.0
    %1946 = vmatpush1.msra.mxu0 %v1729
    %1947 = vmatprep.subr.mxu0 0.0
    %1948 = vmatpush1.msra.mxu0 %v1726
    %1949 = vmatprep.subr.mxu0 0.0
    %1950 = vmatpush1.msra.mxu0 %v1723
    %1951 = vmatprep.subr.mxu0 0.0
    %1952 = vmatpush1.msra.mxu0 %v1720
    %1953 = vmatprep.subr.mxu0 0.0
    %1954 = vmatpush1.msra.mxu0 %v1717
    %1955 = vmatprep.subr.mxu0 0.0
    %1956 = vmatpush1.msra.mxu0 %v1714
    %1957 = vmatprep.subr.mxu0 0.0
    %1958 = vmatpush1.msra.mxu0 %v1711
    %1959 = vmatprep.subr.mxu0 0.0
    %1960 = vmatpush1.msra.mxu0 %v1708
    %1961 = vmatprep.subr.mxu0 0.0
    %1962 = vmatpush1.msra.mxu0 %v1705
    %1963 = vmatprep.subr.mxu0 0.0
    %1964 = vmatpush2.msra.mxu0 0.0
    %1965 = vmatprep.subr.mxu0 0.0
    %1966 = vmatpush2.msra.mxu0 0.0
    %1967 = vmatprep.subr.mxu0 0.0
    %1968 = vmatpush2.msra.mxu0 0.0
    %1969 = vmatprep.subr.mxu0 0.0
    %1970 = vmatpush2.msra.mxu0 0.0
    %1971 = vmatprep.subr.mxu0 0.0
    %1972 = vmatpush2.msra.mxu0 0.0
    %1973 = vmatprep.subr.mxu0 0.0
    %1974 = vmatpush2.msra.mxu0 0.0
    %1975 = vmatprep.subr.mxu0 0.0
    %1976 = vmatpush2.msra.mxu0 0.0
    %1977 = vmatprep.subr.mxu0 0.0
    %1978 = vmatpush2.msra.mxu0 0.0
    %1979 = vmatprep.subr.mxu0 0.0
    %1980 = vmatpush2.msra.mxu0 0.0
    %1981 = vmatprep.subr.mxu0 0.0
    %1982 = vmatpush2.msra.mxu0 0.0
    %1983 = vmatprep.subr.mxu0 0.0
    %1984 = vmatpush2.msra.mxu0 0.0
    %1985 = vmatprep.subr.mxu0 0.0
    %1986 = vmatpush2.msra.mxu0 0.0
    %1987 = vmatprep.subr.mxu0 0.0
    %1988 = vmatpush2.msra.mxu0 0.0
    %1989 = vmatprep.subr.mxu0 0.0
    %1990 = vmatpush2.msra.mxu0 0.0
    %1991 = vmatprep.subr.mxu0 0.0
    %1992 = vmatpush2.msra.mxu0 0.0
    %1993 = vmatprep.subr.mxu0 0.0
    %1994 = vmatpush2.msra.mxu0 0.0
    %1995 = vmatprep.mubr.f32.mxu0 0.0
    %1996 = vmatmul.mubr.f32.gmra.mxu0 %v560
    %v1997 = vpop.f32.mrf.mxu0
    %v1998 = vadd.f32 %v1817, %v1997
    %v1999 = vpop.f32.mrf.mxu0
    %2000 = vmatprep.mubr.f32.mxu0 0.0
    %2001 = vmatmul.mubr.f32.gmra.mxu0 %v723
    %v2002 = vpop.f32.mrf.mxu0
    %v2003 = vadd.f32 %v1817, %v2002
    %v2004 = vpop.f32.mrf.mxu0
    %2005 = vmatprep.mubr.f32.mxu0 0.0
    %2006 = vmatmul.mubr.f32.gmra.mxu0 %v886
    %v2007 = vpop.f32.mrf.mxu0
    %v2008 = vadd.f32 %v1817, %v2007
    %v2009 = vpop.f32.mrf.mxu0
    %2010 = vmatprep.mubr.f32.mxu0 0.0
    %2011 = vmatmul.mubr.f32.gmra.mxu0 %v1049
    %v2012 = vpop.f32.mrf.mxu0
    %v2013 = vadd.f32 %v1817, %v2012
    %v2014 = vpop.f32.mrf.mxu0
    %2015 = vmatprep.mubr.f32.mxu0 0.0
    %2016 = vmatmul.mubr.f32.gmra.mxu0 %v1212
    %v2017 = vpop.f32.mrf.mxu0
    %v2018 = vadd.f32 %v1817, %v2017
    %v2019 = vpop.f32.mrf.mxu0
    %2020 = vmatprep.mubr.f32.mxu0 0.0
    %2021 = vmatmul.mubr.f32.gmra.mxu0 %v1375
    %v2022 = vpop.f32.mrf.mxu0
    %v2023 = vadd.f32 %v1817, %v2022
    %v2024 = vpop.f32.mrf.mxu0
    %2025 = vmatprep.mubr.f32.mxu0 0.0
    %2026 = vmatmul.mubr.f32.gmra.mxu0 %v1538
    %v2027 = vpop.f32.mrf.mxu0
    %v2028 = vadd.f32 %v1817, %v2027
    %v2029 = vpop.f32.mrf.mxu0
    %2030 = vmatprep.mubr.f32.mxu0 0.0
    %2031 = vmatmul.mubr.f32.gmra.mxu0 %v1701
    %v2032 = vpop.f32.mrf.mxu0
    %v2033 = vadd.f32 %v1817, %v2032
    %v2034 = vpop.f32.mrf.mxu0
    %2035 = vdwg.mxu0
    %s2036 = scalar_lea.vmem [#allocation5], 8
    %v2037 = vld [vmem:[%s2036] sm:$0xff]
    %2038 = vmatprep.subr.mxu0 %v1797
    %2039 = vmatpush1.msra.mxu0 %v1796
    %2040 = vmatprep.subr.mxu0 %v1794
    %2041 = vmatpush1.msra.mxu0 %v1793
    %2042 = vmatprep.subr.mxu0 %v1791
    %2043 = vmatpush1.msra.mxu0 %v1790
    %2044 = vmatprep.subr.mxu0 %v1788
    %2045 = vmatpush1.msra.mxu0 %v1787
    %2046 = vmatprep.subr.mxu0 %v1785
    %2047 = vmatpush1.msra.mxu0 %v1784
    %2048 = vmatprep.subr.mxu0 %v1782
    %2049 = vmatpush1.msra.mxu0 %v1781
    %2050 = vmatprep.subr.mxu0 %v1779
    %2051 = vmatpush1.msra.mxu0 %v1778
    %2052 = vmatprep.subr.mxu0 %v1776
    %2053 = vmatpush1.msra.mxu0 %v1775
    %2054 = vmatprep.subr.mxu0 %v1773
    %2055 = vmatpush1.msra.mxu0 %v1772
    %2056 = vmatprep.subr.mxu0 %v1770
    %2057 = vmatpush1.msra.mxu0 %v1769
    %2058 = vmatprep.subr.mxu0 %v1767
    %2059 = vmatpush1.msra.mxu0 %v1766
    %2060 = vmatprep.subr.mxu0 %v1764
    %2061 = vmatpush1.msra.mxu0 %v1763
    %2062 = vmatprep.subr.mxu0 %v1761
    %2063 = vmatpush1.msra.mxu0 %v1760
    %2064 = vmatprep.subr.mxu0 %v1758
    %2065 = vmatpush1.msra.mxu0 %v1757
    %2066 = vmatprep.subr.mxu0 %v1755
    %2067 = vmatpush1.msra.mxu0 %v1754
    %2068 = vmatprep.subr.mxu0 %v1752
    %2069 = vmatpush1.msra.mxu0 %v1751
    %2070 = vmatprep.subr.mxu0 0.0
    %2071 = vmatpush2.msra.mxu0 0.0
    %2072 = vmatprep.subr.mxu0 0.0
    %2073 = vmatpush2.msra.mxu0 0.0
    %2074 = vmatprep.subr.mxu0 0.0
    %2075 = vmatpush2.msra.mxu0 0.0
    %2076 = vmatprep.subr.mxu0 0.0
    %2077 = vmatpush2.msra.mxu0 0.0
    %2078 = vmatprep.subr.mxu0 0.0
    %2079 = vmatpush2.msra.mxu0 0.0
    %2080 = vmatprep.subr.mxu0 0.0
    %2081 = vmatpush2.msra.mxu0 0.0
    %2082 = vmatprep.subr.mxu0 0.0
    %2083 = vmatpush2.msra.mxu0 0.0
    %2084 = vmatprep.subr.mxu0 0.0
    %2085 = vmatpush2.msra.mxu0 0.0
    %2086 = vmatprep.subr.mxu0 0.0
    %2087 = vmatpush2.msra.mxu0 0.0
    %2088 = vmatprep.subr.mxu0 0.0
    %2089 = vmatpush2.msra.mxu0 0.0
    %2090 = vmatprep.subr.mxu0 0.0
    %2091 = vmatpush2.msra.mxu0 0.0
    %2092 = vmatprep.subr.mxu0 0.0
    %2093 = vmatpush2.msra.mxu0 0.0
    %2094 = vmatprep.subr.mxu0 0.0
    %2095 = vmatpush2.msra.mxu0 0.0
    %2096 = vmatprep.subr.mxu0 0.0
    %2097 = vmatpush2.msra.mxu0 0.0
    %2098 = vmatprep.subr.mxu0 0.0
    %2099 = vmatpush2.msra.mxu0 0.0
    %2100 = vmatprep.subr.mxu0 0.0
    %2101 = vmatpush2.msra.mxu0 0.0
    %2102 = vmatprep.mubr.f32.mxu0 0.0
    %2103 = vmatmul.mubr.f32.gmra.mxu0 %v2037
    %v2104 = vpop.f32.mrf.mxu0
    %v2105 = vadd.f32 0.0, %v2104
    %v2106 = vpop.f32.mrf.mxu0
    %v2107 = vadd.f32 0.0, %v2106
    %2108 = vdwg.mxu0
    %2109 = vmatprep.subr.mxu0 0.0
    %2110 = vmatpush1.msra.mxu0 %v1798
    %2111 = vmatprep.subr.mxu0 0.0
    %2112 = vmatpush1.msra.mxu0 %v1795
    %2113 = vmatprep.subr.mxu0 0.0
    %2114 = vmatpush1.msra.mxu0 %v1792
    %2115 = vmatprep.subr.mxu0 0.0
    %2116 = vmatpush1.msra.mxu0 %v1789
    %2117 = vmatprep.subr.mxu0 0.0
    %2118 = vmatpush1.msra.mxu0 %v1786
    %2119 = vmatprep.subr.mxu0 0.0
    %2120 = vmatpush1.msra.mxu0 %v1783
    %2121 = vmatprep.subr.mxu0 0.0
    %2122 = vmatpush1.msra.mxu0 %v1780
    %2123 = vmatprep.subr.mxu0 0.0
    %2124 = vmatpush1.msra.mxu0 %v1777
    %2125 = vmatprep.subr.mxu0 0.0
    %2126 = vmatpush1.msra.mxu0 %v1774
    %2127 = vmatprep.subr.mxu0 0.0
    %2128 = vmatpush1.msra.mxu0 %v1771
    %2129 = vmatprep.subr.mxu0 0.0
    %2130 = vmatpush1.msra.mxu0 %v1768
    %2131 = vmatprep.subr.mxu0 0.0
    %2132 = vmatpush1.msra.mxu0 %v1765
    %2133 = vmatprep.subr.mxu0 0.0
    %2134 = vmatpush1.msra.mxu0 %v1762
    %2135 = vmatprep.subr.mxu0 0.0
    %2136 = vmatpush1.msra.mxu0 %v1759
    %2137 = vmatprep.subr.mxu0 0.0
    %2138 = vmatpush1.msra.mxu0 %v1756
    %2139 = vmatprep.subr.mxu0 0.0
    %2140 = vmatpush1.msra.mxu0 %v1753
    %2141 = vmatprep.subr.mxu0 0.0
    %2142 = vmatpush2.msra.mxu0 0.0
    %2143 = vmatprep.subr.mxu0 0.0
    %2144 = vmatpush2.msra.mxu0 0.0
    %2145 = vmatprep.subr.mxu0 0.0
    %2146 = vmatpush2.msra.mxu0 0.0
    %2147 = vmatprep.subr.mxu0 0.0
    %2148 = vmatpush2.msra.mxu0 0.0
    %2149 = vmatprep.subr.mxu0 0.0
    %2150 = vmatpush2.msra.mxu0 0.0
    %2151 = vmatprep.subr.mxu0 0.0
    %2152 = vmatpush2.msra.mxu0 0.0
    %2153 = vmatprep.subr.mxu0 0.0
    %2154 = vmatpush2.msra.mxu0 0.0
    %2155 = vmatprep.subr.mxu0 0.0
    %2156 = vmatpush2.msra.mxu0 0.0
    %2157 = vmatprep.subr.mxu0 0.0
    %2158 = vmatpush2.msra.mxu0 0.0
    %2159 = vmatprep.subr.mxu0 0.0
    %2160 = vmatpush2.msra.mxu0 0.0
    %2161 = vmatprep.subr.mxu0 0.0
    %2162 = vmatpush2.msra.mxu0 0.0
    %2163 = vmatprep.subr.mxu0 0.0
    %2164 = vmatpush2.msra.mxu0 0.0
    %2165 = vmatprep.subr.mxu0 0.0
    %2166 = vmatpush2.msra.mxu0 0.0
    %2167 = vmatprep.subr.mxu0 0.0
    %2168 = vmatpush2.msra.mxu0 0.0
    %2169 = vmatprep.subr.mxu0 0.0
    %2170 = vmatpush2.msra.mxu0 0.0
    %2171 = vmatprep.subr.mxu0 0.0
    %2172 = vmatpush2.msra.mxu0 0.0
    %2173 = vmatprep.mubr.f32.mxu0 0.0
    %2174 = vmatmul.mubr.f32.gmra.mxu0 %v2037
    %v2175 = vpop.f32.mrf.mxu0
    %v2176 = vadd.f32 0.0, %v2175
    %v2177 = vpop.f32.mrf.mxu0
    %2178 = vdwg.mxu0
    %v2179 = vadd.f32 %v1885, %v2105
    %v2180 = vxor.u32 %v2179, 2147483648
    %v2181 = vmul.f32 %v2180, 1.442695
    %v2182 = vpow.pop %v2181
    %v2183 = vadd.f32 %v2182, 1.0
    %v2184 = vrcp.pop %v2183
    %v2185 = vmul.f32 1.0, %v2184
    %v2186 = vadd.f32 %v1887, %v2107
    %v2187 = vxor.u32 %v2186, 2147483648
    %v2188 = vmul.f32 %v2187, 1.442695
    %v2189 = vpow.pop %v2188
    %v2190 = vadd.f32 %v2189, 1.0
    %v2191 = vrcp.pop %v2190
    %v2192 = vmul.f32 1.0, %v2191
    %v2193 = vadd.f32 %v2176, %v1805
    %v2194 = vmul.f32 %v2185, %v2193
    %v2195 = vadd.f32 %v1998, %v2194
    %v2196 = vtanh.pop %v2195
    %v2197 = vsub.f32 1.0, %v2192
    %v2198 = vmul.f32 %v2197, %v2196
    %v2199 = vmul.f32 %v2192, %v2037
    %v2200 = vadd.f32 %v2198, %v2199
    %2201 = vmatprep.subr.mxu0 %v1797
    %2202 = vmatpush1.msra.mxu0 %v1796
    %2203 = vmatprep.subr.mxu0 %v1794
    %2204 = vmatpush1.msra.mxu0 %v1793
    %2205 = vmatprep.subr.mxu0 %v1791
    %2206 = vmatpush1.msra.mxu0 %v1790
    %2207 = vmatprep.subr.mxu0 %v1788
    %2208 = vmatpush1.msra.mxu0 %v1787
    %2209 = vmatprep.subr.mxu0 %v1785
    %2210 = vmatpush1.msra.mxu0 %v1784
    %2211 = vmatprep.subr.mxu0 %v1782
    %2212 = vmatpush1.msra.mxu0 %v1781
    %2213 = vmatprep.subr.mxu0 %v1779
    %2214 = vmatpush1.msra.mxu0 %v1778
    %2215 = vmatprep.subr.mxu0 %v1776
    %2216 = vmatpush1.msra.mxu0 %v1775
    %2217 = vmatprep.subr.mxu0 %v1773
    %2218 = vmatpush1.msra.mxu0 %v1772
    %2219 = vmatprep.subr.mxu0 %v1770
    %2220 = vmatpush1.msra.mxu0 %v1769
    %2221 = vmatprep.subr.mxu0 %v1767
    %2222 = vmatpush1.msra.mxu0 %v1766
    %2223 = vmatprep.subr.mxu0 %v1764
    %2224 = vmatpush1.msra.mxu0 %v1763
    %2225 = vmatprep.subr.mxu0 %v1761
    %2226 = vmatpush1.msra.mxu0 %v1760
    %2227 = vmatprep.subr.mxu0 %v1758
    %2228 = vmatpush1.msra.mxu0 %v1757
    %2229 = vmatprep.subr.mxu0 %v1755
    %2230 = vmatpush1.msra.mxu0 %v1754
    %2231 = vmatprep.subr.mxu0 %v1752
    %2232 = vmatpush1.msra.mxu0 %v1751
    %2233 = vmatprep.subr.mxu0 0.0
    %2234 = vmatpush2.msra.mxu0 0.0
    %2235 = vmatprep.subr.mxu0 0.0
    %2236 = vmatpush2.msra.mxu0 0.0
    %2237 = vmatprep.subr.mxu0 0.0
    %2238 = vmatpush2.msra.mxu0 0.0
    %2239 = vmatprep.subr.mxu0 0.0
    %2240 = vmatpush2.msra.mxu0 0.0
    %2241 = vmatprep.subr.mxu0 0.0
    %2242 = vmatpush2.msra.mxu0 0.0
    %2243 = vmatprep.subr.mxu0 0.0
    %2244 = vmatpush2.msra.mxu0 0.0
    %2245 = vmatprep.subr.mxu0 0.0
    %2246 = vmatpush2.msra.mxu0 0.0
    %2247 = vmatprep.subr.mxu0 0.0
    %2248 = vmatpush2.msra.mxu0 0.0
    %2249 = vmatprep.subr.mxu0 0.0
    %2250 = vmatpush2.msra.mxu0 0.0
    %2251 = vmatprep.subr.mxu0 0.0
    %2252 = vmatpush2.msra.mxu0 0.0
    %2253 = vmatprep.subr.mxu0 0.0
    %2254 = vmatpush2.msra.mxu0 0.0
    %2255 = vmatprep.subr.mxu0 0.0
    %2256 = vmatpush2.msra.mxu0 0.0
    %2257 = vmatprep.subr.mxu0 0.0
    %2258 = vmatpush2.msra.mxu0 0.0
    %2259 = vmatprep.subr.mxu0 0.0
    %2260 = vmatpush2.msra.mxu0 0.0
    %2261 = vmatprep.subr.mxu0 0.0
    %2262 = vmatpush2.msra.mxu0 0.0
    %2263 = vmatprep.subr.mxu0 0.0
    %2264 = vmatpush2.msra.mxu0 0.0
    %2265 = vmatprep.mubr.f32.mxu0 0.0
    %2266 = vmatmul.mubr.f32.gmra.mxu0 %v2200
    %v2267 = vpop.f32.mrf.mxu0
    %v2268 = vadd.f32 0.0, %v2267
    %v2269 = vpop.f32.mrf.mxu0
    %v2270 = vadd.f32 0.0, %v2269
    %2271 = vdwg.mxu0
    %2272 = vmatprep.subr.mxu0 0.0
    %2273 = vmatpush1.msra.mxu0 %v1798
    %2274 = vmatprep.subr.mxu0 0.0
    %2275 = vmatpush1.msra.mxu0 %v1795
    %2276 = vmatprep.subr.mxu0 0.0
    %2277 = vmatpush1.msra.mxu0 %v1792
    %2278 = vmatprep.subr.mxu0 0.0
    %2279 = vmatpush1.msra.mxu0 %v1789
    %2280 = vmatprep.subr.mxu0 0.0
    %2281 = vmatpush1.msra.mxu0 %v1786
    %2282 = vmatprep.subr.mxu0 0.0
    %2283 = vmatpush1.msra.mxu0 %v1783
    %2284 = vmatprep.subr.mxu0 0.0
    %2285 = vmatpush1.msra.mxu0 %v1780
    %2286 = vmatprep.subr.mxu0 0.0
    %2287 = vmatpush1.msra.mxu0 %v1777
    %2288 = vmatprep.subr.mxu0 0.0
    %2289 = vmatpush1.msra.mxu0 %v1774
    %2290 = vmatprep.subr.mxu0 0.0
    %2291 = vmatpush1.msra.mxu0 %v1771
    %2292 = vmatprep.subr.mxu0 0.0
    %2293 = vmatpush1.msra.mxu0 %v1768
    %2294 = vmatprep.subr.mxu0 0.0
    %2295 = vmatpush1.msra.mxu0 %v1765
    %2296 = vmatprep.subr.mxu0 0.0
    %2297 = vmatpush1.msra.mxu0 %v1762
    %2298 = vmatprep.subr.mxu0 0.0
    %2299 = vmatpush1.msra.mxu0 %v1759
    %2300 = vmatprep.subr.mxu0 0.0
    %2301 = vmatpush1.msra.mxu0 %v1756
    %2302 = vmatprep.subr.mxu0 0.0
    %2303 = vmatpush1.msra.mxu0 %v1753
    %2304 = vmatprep.subr.mxu0 0.0
    %2305 = vmatpush2.msra.mxu0 0.0
    %2306 = vmatprep.subr.mxu0 0.0
    %2307 = vmatpush2.msra.mxu0 0.0
    %2308 = vmatprep.subr.mxu0 0.0
    %2309 = vmatpush2.msra.mxu0 0.0
    %2310 = vmatprep.subr.mxu0 0.0
    %2311 = vmatpush2.msra.mxu0 0.0
    %2312 = vmatprep.subr.mxu0 0.0
    %2313 = vmatpush2.msra.mxu0 0.0
    %2314 = vmatprep.subr.mxu0 0.0
    %2315 = vmatpush2.msra.mxu0 0.0
    %2316 = vmatprep.subr.mxu0 0.0
    %2317 = vmatpush2.msra.mxu0 0.0
    %2318 = vmatprep.subr.mxu0 0.0
    %2319 = vmatpush2.msra.mxu0 0.0
    %2320 = vmatprep.subr.mxu0 0.0
    %2321 = vmatpush2.msra.mxu0 0.0
    %2322 = vmatprep.subr.mxu0 0.0
    %2323 = vmatpush2.msra.mxu0 0.0
    %2324 = vmatprep.subr.mxu0 0.0
    %2325 = vmatpush2.msra.mxu0 0.0
    %2326 = vmatprep.subr.mxu0 0.0
    %2327 = vmatpush2.msra.mxu0 0.0
    %2328 = vmatprep.subr.mxu0 0.0
    %2329 = vmatpush2.msra.mxu0 0.0
    %2330 = vmatprep.subr.mxu0 0.0
    %2331 = vmatpush2.msra.mxu0 0.0
    %2332 = vmatprep.subr.mxu0 0.0
    %2333 = vmatpush2.msra.mxu0 0.0
    %2334 = vmatprep.subr.mxu0 0.0
    %2335 = vmatpush2.msra.mxu0 0.0
    %2336 = vmatprep.mubr.f32.mxu0 0.0
    %2337 = vmatmul.mubr.f32.gmra.mxu0 %v2200
    %v2338 = vpop.f32.mrf.mxu0
    %v2339 = vadd.f32 0.0, %v2338
    %v2340 = vpop.f32.mrf.mxu0
    %2341 = vdwg.mxu0
    %v2342 = vadd.f32 %v1891, %v2268
    %v2343 = vxor.u32 %v2342, 2147483648
    %v2344 = vmul.f32 %v2343, 1.442695
    %v2345 = vpow.pop %v2344
    %v2346 = vadd.f32 %v2345, 1.0
    %v2347 = vrcp.pop %v2346
    %v2348 = vmul.f32 1.0, %v2347
    %v2349 = vadd.f32 %v1893, %v2270
    %v2350 = vxor.u32 %v2349, 2147483648
    %v2351 = vmul.f32 %v2350, 1.442695
    %v2352 = vpow.pop %v2351
    %v2353 = vadd.f32 %v2352, 1.0
    %v2354 = vrcp.pop %v2353
    %v2355 = vmul.f32 1.0, %v2354
    %v2356 = vadd.f32 %v2339, %v1805
    %v2357 = vmul.f32 %v2348, %v2356
    %v2358 = vadd.f32 %v2003, %v2357
    %v2359 = vtanh.pop %v2358
    %v2360 = vsub.f32 1.0, %v2355
    %v2361 = vmul.f32 %v2360, %v2359
    %v2362 = vmul.f32 %v2355, %v2200
    %v2363 = vadd.f32 %v2361, %v2362
    %2364 = vmatprep.subr.mxu0 %v1797
    %2365 = vmatpush1.msra.mxu0 %v1796
    %2366 = vmatprep.subr.mxu0 %v1794
    %2367 = vmatpush1.msra.mxu0 %v1793
    %2368 = vmatprep.subr.mxu0 %v1791
    %2369 = vmatpush1.msra.mxu0 %v1790
    %2370 = vmatprep.subr.mxu0 %v1788
    %2371 = vmatpush1.msra.mxu0 %v1787
    %2372 = vmatprep.subr.mxu0 %v1785
    %2373 = vmatpush1.msra.mxu0 %v1784
    %2374 = vmatprep.subr.mxu0 %v1782
    %2375 = vmatpush1.msra.mxu0 %v1781
    %2376 = vmatprep.subr.mxu0 %v1779
    %2377 = vmatpush1.msra.mxu0 %v1778
    %2378 = vmatprep.subr.mxu0 %v1776
    %2379 = vmatpush1.msra.mxu0 %v1775
    %2380 = vmatprep.subr.mxu0 %v1773
    %2381 = vmatpush1.msra.mxu0 %v1772
    %2382 = vmatprep.subr.mxu0 %v1770
    %2383 = vmatpush1.msra.mxu0 %v1769
    %2384 = vmatprep.subr.mxu0 %v1767
    %2385 = vmatpush1.msra.mxu0 %v1766
    %2386 = vmatprep.subr.mxu0 %v1764
    %2387 = vmatpush1.msra.mxu0 %v1763
    %2388 = vmatprep.subr.mxu0 %v1761
    %2389 = vmatpush1.msra.mxu0 %v1760
    %2390 = vmatprep.subr.mxu0 %v1758
    %2391 = vmatpush1.msra.mxu0 %v1757
    %2392 = vmatprep.subr.mxu0 %v1755
    %2393 = vmatpush1.msra.mxu0 %v1754
    %2394 = vmatprep.subr.mxu0 %v1752
    %2395 = vmatpush1.msra.mxu0 %v1751
    %2396 = vmatprep.subr.mxu0 0.0
    %2397 = vmatpush2.msra.mxu0 0.0
    %2398 = vmatprep.subr.mxu0 0.0
    %2399 = vmatpush2.msra.mxu0 0.0
    %2400 = vmatprep.subr.mxu0 0.0
    %2401 = vmatpush2.msra.mxu0 0.0
    %2402 = vmatprep.subr.mxu0 0.0
    %2403 = vmatpush2.msra.mxu0 0.0
    %2404 = vmatprep.subr.mxu0 0.0
    %2405 = vmatpush2.msra.mxu0 0.0
    %2406 = vmatprep.subr.mxu0 0.0
    %2407 = vmatpush2.msra.mxu0 0.0
    %2408 = vmatprep.subr.mxu0 0.0
    %2409 = vmatpush2.msra.mxu0 0.0
    %2410 = vmatprep.subr.mxu0 0.0
    %2411 = vmatpush2.msra.mxu0 0.0
    %2412 = vmatprep.subr.mxu0 0.0
    %2413 = vmatpush2.msra.mxu0 0.0
    %2414 = vmatprep.subr.mxu0 0.0
    %2415 = vmatpush2.msra.mxu0 0.0
    %2416 = vmatprep.subr.mxu0 0.0
    %2417 = vmatpush2.msra.mxu0 0.0
    %2418 = vmatprep.subr.mxu0 0.0
    %2419 = vmatpush2.msra.mxu0 0.0
    %2420 = vmatprep.subr.mxu0 0.0
    %2421 = vmatpush2.msra.mxu0 0.0
    %2422 = vmatprep.subr.mxu0 0.0
    %2423 = vmatpush2.msra.mxu0 0.0
    %2424 = vmatprep.subr.mxu0 0.0
    %2425 = vmatpush2.msra.mxu0 0.0
    %2426 = vmatprep.subr.mxu0 0.0
    %2427 = vmatpush2.msra.mxu0 0.0
    %2428 = vmatprep.mubr.f32.mxu0 0.0
    %2429 = vmatmul.mubr.f32.gmra.mxu0 %v2363
    %v2430 = vpop.f32.mrf.mxu0
    %v2431 = vadd.f32 0.0, %v2430
    %v2432 = vpop.f32.mrf.mxu0
    %v2433 = vadd.f32 0.0, %v2432
    %2434 = vdwg.mxu0
    %2435 = vmatprep.subr.mxu0 0.0
    %2436 = vmatpush1.msra.mxu0 %v1798
    %2437 = vmatprep.subr.mxu0 0.0
    %2438 = vmatpush1.msra.mxu0 %v1795
    %2439 = vmatprep.subr.mxu0 0.0
    %2440 = vmatpush1.msra.mxu0 %v1792
    %2441 = vmatprep.subr.mxu0 0.0
    %2442 = vmatpush1.msra.mxu0 %v1789
    %2443 = vmatprep.subr.mxu0 0.0
    %2444 = vmatpush1.msra.mxu0 %v1786
    %2445 = vmatprep.subr.mxu0 0.0
    %2446 = vmatpush1.msra.mxu0 %v1783
    %2447 = vmatprep.subr.mxu0 0.0
    %2448 = vmatpush1.msra.mxu0 %v1780
    %2449 = vmatprep.subr.mxu0 0.0
    %2450 = vmatpush1.msra.mxu0 %v1777
    %2451 = vmatprep.subr.mxu0 0.0
    %2452 = vmatpush1.msra.mxu0 %v1774
    %2453 = vmatprep.subr.mxu0 0.0
    %2454 = vmatpush1.msra.mxu0 %v1771
    %2455 = vmatprep.subr.mxu0 0.0
    %2456 = vmatpush1.msra.mxu0 %v1768
    %2457 = vmatprep.subr.mxu0 0.0
    %2458 = vmatpush1.msra.mxu0 %v1765
    %2459 = vmatprep.subr.mxu0 0.0
    %2460 = vmatpush1.msra.mxu0 %v1762
    %2461 = vmatprep.subr.mxu0 0.0
    %2462 = vmatpush1.msra.mxu0 %v1759
    %2463 = vmatprep.subr.mxu0 0.0
    %2464 = vmatpush1.msra.mxu0 %v1756
    %2465 = vmatprep.subr.mxu0 0.0
    %2466 = vmatpush1.msra.mxu0 %v1753
    %2467 = vmatprep.subr.mxu0 0.0
    %2468 = vmatpush2.msra.mxu0 0.0
    %2469 = vmatprep.subr.mxu0 0.0
    %2470 = vmatpush2.msra.mxu0 0.0
    %2471 = vmatprep.subr.mxu0 0.0
    %2472 = vmatpush2.msra.mxu0 0.0
    %2473 = vmatprep.subr.mxu0 0.0
    %2474 = vmatpush2.msra.mxu0 0.0
    %2475 = vmatprep.subr.mxu0 0.0
    %2476 = vmatpush2.msra.mxu0 0.0
    %2477 = vmatprep.subr.mxu0 0.0
    %2478 = vmatpush2.msra.mxu0 0.0
    %2479 = vmatprep.subr.mxu0 0.0
    %2480 = vmatpush2.msra.mxu0 0.0
    %2481 = vmatprep.subr.mxu0 0.0
    %2482 = vmatpush2.msra.mxu0 0.0
    %2483 = vmatprep.subr.mxu0 0.0
    %2484 = vmatpush2.msra.mxu0 0.0
    %2485 = vmatprep.subr.mxu0 0.0
    %2486 = vmatpush2.msra.mxu0 0.0
    %2487 = vmatprep.subr.mxu0 0.0
    %2488 = vmatpush2.msra.mxu0 0.0
    %2489 = vmatprep.subr.mxu0 0.0
    %2490 = vmatpush2.msra.mxu0 0.0
    %2491 = vmatprep.subr.mxu0 0.0
    %2492 = vmatpush2.msra.mxu0 0.0
    %2493 = vmatprep.subr.mxu0 0.0
    %2494 = vmatpush2.msra.mxu0 0.0
    %2495 = vmatprep.subr.mxu0 0.0
    %2496 = vmatpush2.msra.mxu0 0.0
    %2497 = vmatprep.subr.mxu0 0.0
    %2498 = vmatpush2.msra.mxu0 0.0
    %2499 = vmatprep.mubr.f32.mxu0 0.0
    %2500 = vmatmul.mubr.f32.gmra.mxu0 %v2363
    %v2501 = vpop.f32.mrf.mxu0
    %v2502 = vadd.f32 0.0, %v2501
    %v2503 = vpop.f32.mrf.mxu0
    %2504 = vdwg.mxu0
    %v2505 = vadd.f32 %v1897, %v2431
    %v2506 = vxor.u32 %v2505, 2147483648
    %v2507 = vmul.f32 %v2506, 1.442695
    %v2508 = vpow.pop %v2507
    %v2509 = vadd.f32 %v2508, 1.0
    %v2510 = vrcp.pop %v2509
    %v2511 = vmul.f32 1.0, %v2510
    %v2512 = vadd.f32 %v1899, %v2433
    %v2513 = vxor.u32 %v2512, 2147483648
    %v2514 = vmul.f32 %v2513, 1.442695
    %v2515 = vpow.pop %v2514
    %v2516 = vadd.f32 %v2515, 1.0
    %v2517 = vrcp.pop %v2516
    %v2518 = vmul.f32 1.0, %v2517
    %v2519 = vadd.f32 %v2502, %v1805
    %v2520 = vmul.f32 %v2511, %v2519
    %v2521 = vadd.f32 %v2008, %v2520
    %v2522 = vtanh.pop %v2521
    %v2523 = vsub.f32 1.0, %v2518
    %v2524 = vmul.f32 %v2523, %v2522
    %v2525 = vmul.f32 %v2518, %v2363
    %v2526 = vadd.f32 %v2524, %v2525
    %2527 = vmatprep.subr.mxu0 %v1797
    %2528 = vmatpush1.msra.mxu0 %v1796
    %2529 = vmatprep.subr.mxu0 %v1794
    %2530 = vmatpush1.msra.mxu0 %v1793
    %2531 = vmatprep.subr.mxu0 %v1791
    %2532 = vmatpush1.msra.mxu0 %v1790
    %2533 = vmatprep.subr.mxu0 %v1788
    %2534 = vmatpush1.msra.mxu0 %v1787
    %2535 = vmatprep.subr.mxu0 %v1785
    %2536 = vmatpush1.msra.mxu0 %v1784
    %2537 = vmatprep.subr.mxu0 %v1782
    %2538 = vmatpush1.msra.mxu0 %v1781
    %2539 = vmatprep.subr.mxu0 %v1779
    %2540 = vmatpush1.msra.mxu0 %v1778
    %2541 = vmatprep.subr.mxu0 %v1776
    %2542 = vmatpush1.msra.mxu0 %v1775
    %2543 = vmatprep.subr.mxu0 %v1773
    %2544 = vmatpush1.msra.mxu0 %v1772
    %2545 = vmatprep.subr.mxu0 %v1770
    %2546 = vmatpush1.msra.mxu0 %v1769
    %2547 = vmatprep.subr.mxu0 %v1767
    %2548 = vmatpush1.msra.mxu0 %v1766
    %2549 = vmatprep.subr.mxu0 %v1764
    %2550 = vmatpush1.msra.mxu0 %v1763
    %2551 = vmatprep.subr.mxu0 %v1761
    %2552 = vmatpush1.msra.mxu0 %v1760
    %2553 = vmatprep.subr.mxu0 %v1758
    %2554 = vmatpush1.msra.mxu0 %v1757
    %2555 = vmatprep.subr.mxu0 %v1755
    %2556 = vmatpush1.msra.mxu0 %v1754
    %2557 = vmatprep.subr.mxu0 %v1752
    %2558 = vmatpush1.msra.mxu0 %v1751
    %2559 = vmatprep.subr.mxu0 0.0
    %2560 = vmatpush2.msra.mxu0 0.0
    %2561 = vmatprep.subr.mxu0 0.0
    %2562 = vmatpush2.msra.mxu0 0.0
    %2563 = vmatprep.subr.mxu0 0.0
    %2564 = vmatpush2.msra.mxu0 0.0
    %2565 = vmatprep.subr.mxu0 0.0
    %2566 = vmatpush2.msra.mxu0 0.0
    %2567 = vmatprep.subr.mxu0 0.0
    %2568 = vmatpush2.msra.mxu0 0.0
    %2569 = vmatprep.subr.mxu0 0.0
    %2570 = vmatpush2.msra.mxu0 0.0
    %2571 = vmatprep.subr.mxu0 0.0
    %2572 = vmatpush2.msra.mxu0 0.0
    %2573 = vmatprep.subr.mxu0 0.0
    %2574 = vmatpush2.msra.mxu0 0.0
    %2575 = vmatprep.subr.mxu0 0.0
    %2576 = vmatpush2.msra.mxu0 0.0
    %2577 = vmatprep.subr.mxu0 0.0
    %2578 = vmatpush2.msra.mxu0 0.0
    %2579 = vmatprep.subr.mxu0 0.0
    %2580 = vmatpush2.msra.mxu0 0.0
    %2581 = vmatprep.subr.mxu0 0.0
    %2582 = vmatpush2.msra.mxu0 0.0
    %2583 = vmatprep.subr.mxu0 0.0
    %2584 = vmatpush2.msra.mxu0 0.0
    %2585 = vmatprep.subr.mxu0 0.0
    %2586 = vmatpush2.msra.mxu0 0.0
    %2587 = vmatprep.subr.mxu0 0.0
    %2588 = vmatpush2.msra.mxu0 0.0
    %2589 = vmatprep.subr.mxu0 0.0
    %2590 = vmatpush2.msra.mxu0 0.0
    %2591 = vmatprep.mubr.f32.mxu0 0.0
    %2592 = vmatmul.mubr.f32.gmra.mxu0 %v2526
    %v2593 = vpop.f32.mrf.mxu0
    %v2594 = vadd.f32 0.0, %v2593
    %v2595 = vpop.f32.mrf.mxu0
    %v2596 = vadd.f32 0.0, %v2595
    %2597 = vdwg.mxu0
    %2598 = vmatprep.subr.mxu0 0.0
    %2599 = vmatpush1.msra.mxu0 %v1798
    %2600 = vmatprep.subr.mxu0 0.0
    %2601 = vmatpush1.msra.mxu0 %v1795
    %2602 = vmatprep.subr.mxu0 0.0
    %2603 = vmatpush1.msra.mxu0 %v1792
    %2604 = vmatprep.subr.mxu0 0.0
    %2605 = vmatpush1.msra.mxu0 %v1789
    %2606 = vmatprep.subr.mxu0 0.0
    %2607 = vmatpush1.msra.mxu0 %v1786
    %2608 = vmatprep.subr.mxu0 0.0
    %2609 = vmatpush1.msra.mxu0 %v1783
    %2610 = vmatprep.subr.mxu0 0.0
    %2611 = vmatpush1.msra.mxu0 %v1780
    %2612 = vmatprep.subr.mxu0 0.0
    %2613 = vmatpush1.msra.mxu0 %v1777
    %2614 = vmatprep.subr.mxu0 0.0
    %2615 = vmatpush1.msra.mxu0 %v1774
    %2616 = vmatprep.subr.mxu0 0.0
    %2617 = vmatpush1.msra.mxu0 %v1771
    %2618 = vmatprep.subr.mxu0 0.0
    %2619 = vmatpush1.msra.mxu0 %v1768
    %2620 = vmatprep.subr.mxu0 0.0
    %2621 = vmatpush1.msra.mxu0 %v1765
    %2622 = vmatprep.subr.mxu0 0.0
    %2623 = vmatpush1.msra.mxu0 %v1762
    %2624 = vmatprep.subr.mxu0 0.0
    %2625 = vmatpush1.msra.mxu0 %v1759
    %2626 = vmatprep.subr.mxu0 0.0
    %2627 = vmatpush1.msra.mxu0 %v1756
    %2628 = vmatprep.subr.mxu0 0.0
    %2629 = vmatpush1.msra.mxu0 %v1753
    %2630 = vmatprep.subr.mxu0 0.0
    %2631 = vmatpush2.msra.mxu0 0.0
    %2632 = vmatprep.subr.mxu0 0.0
    %2633 = vmatpush2.msra.mxu0 0.0
    %2634 = vmatprep.subr.mxu0 0.0
    %2635 = vmatpush2.msra.mxu0 0.0
    %2636 = vmatprep.subr.mxu0 0.0
    %2637 = vmatpush2.msra.mxu0 0.0
    %2638 = vmatprep.subr.mxu0 0.0
    %2639 = vmatpush2.msra.mxu0 0.0
    %2640 = vmatprep.subr.mxu0 0.0
    %2641 = vmatpush2.msra.mxu0 0.0
    %2642 = vmatprep.subr.mxu0 0.0
    %2643 = vmatpush2.msra.mxu0 0.0
    %2644 = vmatprep.subr.mxu0 0.0
    %2645 = vmatpush2.msra.mxu0 0.0
    %2646 = vmatprep.subr.mxu0 0.0
    %2647 = vmatpush2.msra.mxu0 0.0
    %2648 = vmatprep.subr.mxu0 0.0
    %2649 = vmatpush2.msra.mxu0 0.0
    %2650 = vmatprep.subr.mxu0 0.0
    %2651 = vmatpush2.msra.mxu0 0.0
    %2652 = vmatprep.subr.mxu0 0.0
    %2653 = vmatpush2.msra.mxu0 0.0
    %2654 = vmatprep.subr.mxu0 0.0
    %2655 = vmatpush2.msra.mxu0 0.0
    %2656 = vmatprep.subr.mxu0 0.0
    %2657 = vmatpush2.msra.mxu0 0.0
    %2658 = vmatprep.subr.mxu0 0.0
    %2659 = vmatpush2.msra.mxu0 0.0
    %2660 = vmatprep.subr.mxu0 0.0
    %2661 = vmatpush2.msra.mxu0 0.0
    %2662 = vmatprep.mubr.f32.mxu0 0.0
    %2663 = vmatmul.mubr.f32.gmra.mxu0 %v2526
    %v2664 = vpop.f32.mrf.mxu0
    %v2665 = vadd.f32 0.0, %v2664
    %v2666 = vpop.f32.mrf.mxu0
    %2667 = vdwg.mxu0
    %v2668 = vadd.f32 %v1903, %v2594
    %v2669 = vxor.u32 %v2668, 2147483648
    %v2670 = vmul.f32 %v2669, 1.442695
    %v2671 = vpow.pop %v2670
    %v2672 = vadd.f32 %v2671, 1.0
    %v2673 = vrcp.pop %v2672
    %v2674 = vmul.f32 1.0, %v2673
    %v2675 = vadd.f32 %v1905, %v2596
    %v2676 = vxor.u32 %v2675, 2147483648
    %v2677 = vmul.f32 %v2676, 1.442695
    %v2678 = vpow.pop %v2677
    %v2679 = vadd.f32 %v2678, 1.0
    %v2680 = vrcp.pop %v2679
    %v2681 = vmul.f32 1.0, %v2680
    %v2682 = vadd.f32 %v2665, %v1805
    %v2683 = vmul.f32 %v2674, %v2682
    %v2684 = vadd.f32 %v2013, %v2683
    %v2685 = vtanh.pop %v2684
    %v2686 = vsub.f32 1.0, %v2681
    %v2687 = vmul.f32 %v2686, %v2685
    %v2688 = vmul.f32 %v2681, %v2526
    %v2689 = vadd.f32 %v2687, %v2688
    %2690 = vmatprep.subr.mxu0 %v1797
    %2691 = vmatpush1.msra.mxu0 %v1796
    %2692 = vmatprep.subr.mxu0 %v1794
    %2693 = vmatpush1.msra.mxu0 %v1793
    %2694 = vmatprep.subr.mxu0 %v1791
    %2695 = vmatpush1.msra.mxu0 %v1790
    %2696 = vmatprep.subr.mxu0 %v1788
    %2697 = vmatpush1.msra.mxu0 %v1787
    %2698 = vmatprep.subr.mxu0 %v1785
    %2699 = vmatpush1.msra.mxu0 %v1784
    %2700 = vmatprep.subr.mxu0 %v1782
    %2701 = vmatpush1.msra.mxu0 %v1781
    %2702 = vmatprep.subr.mxu0 %v1779
    %2703 = vmatpush1.msra.mxu0 %v1778
    %2704 = vmatprep.subr.mxu0 %v1776
    %2705 = vmatpush1.msra.mxu0 %v1775
    %2706 = vmatprep.subr.mxu0 %v1773
    %2707 = vmatpush1.msra.mxu0 %v1772
    %2708 = vmatprep.subr.mxu0 %v1770
    %2709 = vmatpush1.msra.mxu0 %v1769
    %2710 = vmatprep.subr.mxu0 %v1767
    %2711 = vmatpush1.msra.mxu0 %v1766
    %2712 = vmatprep.subr.mxu0 %v1764
    %2713 = vmatpush1.msra.mxu0 %v1763
    %2714 = vmatprep.subr.mxu0 %v1761
    %2715 = vmatpush1.msra.mxu0 %v1760
    %2716 = vmatprep.subr.mxu0 %v1758
    %2717 = vmatpush1.msra.mxu0 %v1757
    %2718 = vmatprep.subr.mxu0 %v1755
    %2719 = vmatpush1.msra.mxu0 %v1754
    %2720 = vmatprep.subr.mxu0 %v1752
    %2721 = vmatpush1.msra.mxu0 %v1751
    %2722 = vmatprep.subr.mxu0 0.0
    %2723 = vmatpush2.msra.mxu0 0.0
    %2724 = vmatprep.subr.mxu0 0.0
    %2725 = vmatpush2.msra.mxu0 0.0
    %2726 = vmatprep.subr.mxu0 0.0
    %2727 = vmatpush2.msra.mxu0 0.0
    %2728 = vmatprep.subr.mxu0 0.0
    %2729 = vmatpush2.msra.mxu0 0.0
    %2730 = vmatprep.subr.mxu0 0.0
    %2731 = vmatpush2.msra.mxu0 0.0
    %2732 = vmatprep.subr.mxu0 0.0
    %2733 = vmatpush2.msra.mxu0 0.0
    %2734 = vmatprep.subr.mxu0 0.0
    %2735 = vmatpush2.msra.mxu0 0.0
    %2736 = vmatprep.subr.mxu0 0.0
    %2737 = vmatpush2.msra.mxu0 0.0
    %2738 = vmatprep.subr.mxu0 0.0
    %2739 = vmatpush2.msra.mxu0 0.0
    %2740 = vmatprep.subr.mxu0 0.0
    %2741 = vmatpush2.msra.mxu0 0.0
    %2742 = vmatprep.subr.mxu0 0.0
    %2743 = vmatpush2.msra.mxu0 0.0
    %2744 = vmatprep.subr.mxu0 0.0
    %2745 = vmatpush2.msra.mxu0 0.0
    %2746 = vmatprep.subr.mxu0 0.0
    %2747 = vmatpush2.msra.mxu0 0.0
    %2748 = vmatprep.subr.mxu0 0.0
    %2749 = vmatpush2.msra.mxu0 0.0
    %2750 = vmatprep.subr.mxu0 0.0
    %2751 = vmatpush2.msra.mxu0 0.0
    %2752 = vmatprep.subr.mxu0 0.0
    %2753 = vmatpush2.msra.mxu0 0.0
    %2754 = vmatprep.mubr.f32.mxu0 0.0
    %2755 = vmatmul.mubr.f32.gmra.mxu0 %v2689
    %v2756 = vpop.f32.mrf.mxu0
    %v2757 = vadd.f32 0.0, %v2756
    %v2758 = vpop.f32.mrf.mxu0
    %v2759 = vadd.f32 0.0, %v2758
    %2760 = vdwg.mxu0
    %2761 = vmatprep.subr.mxu0 0.0
    %2762 = vmatpush1.msra.mxu0 %v1798
    %2763 = vmatprep.subr.mxu0 0.0
    %2764 = vmatpush1.msra.mxu0 %v1795
    %2765 = vmatprep.subr.mxu0 0.0
    %2766 = vmatpush1.msra.mxu0 %v1792
    %2767 = vmatprep.subr.mxu0 0.0
    %2768 = vmatpush1.msra.mxu0 %v1789
    %2769 = vmatprep.subr.mxu0 0.0
    %2770 = vmatpush1.msra.mxu0 %v1786
    %2771 = vmatprep.subr.mxu0 0.0
    %2772 = vmatpush1.msra.mxu0 %v1783
    %2773 = vmatprep.subr.mxu0 0.0
    %2774 = vmatpush1.msra.mxu0 %v1780
    %2775 = vmatprep.subr.mxu0 0.0
    %2776 = vmatpush1.msra.mxu0 %v1777
    %2777 = vmatprep.subr.mxu0 0.0
    %2778 = vmatpush1.msra.mxu0 %v1774
    %2779 = vmatprep.subr.mxu0 0.0
    %2780 = vmatpush1.msra.mxu0 %v1771
    %2781 = vmatprep.subr.mxu0 0.0
    %2782 = vmatpush1.msra.mxu0 %v1768
    %2783 = vmatprep.subr.mxu0 0.0
    %2784 = vmatpush1.msra.mxu0 %v1765
    %2785 = vmatprep.subr.mxu0 0.0
    %2786 = vmatpush1.msra.mxu0 %v1762
    %2787 = vmatprep.subr.mxu0 0.0
    %2788 = vmatpush1.msra.mxu0 %v1759
    %2789 = vmatprep.subr.mxu0 0.0
    %2790 = vmatpush1.msra.mxu0 %v1756
    %2791 = vmatprep.subr.mxu0 0.0
    %2792 = vmatpush1.msra.mxu0 %v1753
    %2793 = vmatprep.subr.mxu0 0.0
    %2794 = vmatpush2.msra.mxu0 0.0
    %2795 = vmatprep.subr.mxu0 0.0
    %2796 = vmatpush2.msra.mxu0 0.0
    %2797 = vmatprep.subr.mxu0 0.0
    %2798 = vmatpush2.msra.mxu0 0.0
    %2799 = vmatprep.subr.mxu0 0.0
    %2800 = vmatpush2.msra.mxu0 0.0
    %2801 = vmatprep.subr.mxu0 0.0
    %2802 = vmatpush2.msra.mxu0 0.0
    %2803 = vmatprep.subr.mxu0 0.0
    %2804 = vmatpush2.msra.mxu0 0.0
    %2805 = vmatprep.subr.mxu0 0.0
    %2806 = vmatpush2.msra.mxu0 0.0
    %2807 = vmatprep.subr.mxu0 0.0
    %2808 = vmatpush2.msra.mxu0 0.0
    %2809 = vmatprep.subr.mxu0 0.0
    %2810 = vmatpush2.msra.mxu0 0.0
    %2811 = vmatprep.subr.mxu0 0.0
    %2812 = vmatpush2.msra.mxu0 0.0
    %2813 = vmatprep.subr.mxu0 0.0
    %2814 = vmatpush2.msra.mxu0 0.0
    %2815 = vmatprep.subr.mxu0 0.0
    %2816 = vmatpush2.msra.mxu0 0.0
    %2817 = vmatprep.subr.mxu0 0.0
    %2818 = vmatpush2.msra.mxu0 0.0
    %2819 = vmatprep.subr.mxu0 0.0
    %2820 = vmatpush2.msra.mxu0 0.0
    %2821 = vmatprep.subr.mxu0 0.0
    %2822 = vmatpush2.msra.mxu0 0.0
    %2823 = vmatprep.subr.mxu0 0.0
    %2824 = vmatpush2.msra.mxu0 0.0
    %2825 = vmatprep.mubr.f32.mxu0 0.0
    %2826 = vmatmul.mubr.f32.gmra.mxu0 %v2689
    %v2827 = vpop.f32.mrf.mxu0
    %v2828 = vadd.f32 0.0, %v2827
    %v2829 = vpop.f32.mrf.mxu0
    %2830 = vdwg.mxu0
    %v2831 = vadd.f32 %v1909, %v2757
    %v2832 = vxor.u32 %v2831, 2147483648
    %v2833 = vmul.f32 %v2832, 1.442695
    %v2834 = vpow.pop %v2833
    %v2835 = vadd.f32 %v2834, 1.0
    %v2836 = vrcp.pop %v2835
    %v2837 = vmul.f32 1.0, %v2836
    %v2838 = vadd.f32 %v1911, %v2759
    %v2839 = vxor.u32 %v2838, 2147483648
    %v2840 = vmul.f32 %v2839, 1.442695
    %v2841 = vpow.pop %v2840
    %v2842 = vadd.f32 %v2841, 1.0
    %v2843 = vrcp.pop %v2842
    %v2844 = vmul.f32 1.0, %v2843
    %v2845 = vadd.f32 %v2828, %v1805
    %v2846 = vmul.f32 %v2837, %v2845
    %v2847 = vadd.f32 %v2018, %v2846
    %v2848 = vtanh.pop %v2847
    %v2849 = vsub.f32 1.0, %v2844
    %v2850 = vmul.f32 %v2849, %v2848
    %v2851 = vmul.f32 %v2844, %v2689
    %v2852 = vadd.f32 %v2850, %v2851
    %2853 = vmatprep.subr.mxu0 %v1797
    %2854 = vmatpush1.msra.mxu0 %v1796
    %2855 = vmatprep.subr.mxu0 %v1794
    %2856 = vmatpush1.msra.mxu0 %v1793
    %2857 = vmatprep.subr.mxu0 %v1791
    %2858 = vmatpush1.msra.mxu0 %v1790
    %2859 = vmatprep.subr.mxu0 %v1788
    %2860 = vmatpush1.msra.mxu0 %v1787
    %2861 = vmatprep.subr.mxu0 %v1785
    %2862 = vmatpush1.msra.mxu0 %v1784
    %2863 = vmatprep.subr.mxu0 %v1782
    %2864 = vmatpush1.msra.mxu0 %v1781
    %2865 = vmatprep.subr.mxu0 %v1779
    %2866 = vmatpush1.msra.mxu0 %v1778
    %2867 = vmatprep.subr.mxu0 %v1776
    %2868 = vmatpush1.msra.mxu0 %v1775
    %2869 = vmatprep.subr.mxu0 %v1773
    %2870 = vmatpush1.msra.mxu0 %v1772
    %2871 = vmatprep.subr.mxu0 %v1770
    %2872 = vmatpush1.msra.mxu0 %v1769
    %2873 = vmatprep.subr.mxu0 %v1767
    %2874 = vmatpush1.msra.mxu0 %v1766
    %2875 = vmatprep.subr.mxu0 %v1764
    %2876 = vmatpush1.msra.mxu0 %v1763
    %2877 = vmatprep.subr.mxu0 %v1761
    %2878 = vmatpush1.msra.mxu0 %v1760
    %2879 = vmatprep.subr.mxu0 %v1758
    %2880 = vmatpush1.msra.mxu0 %v1757
    %2881 = vmatprep.subr.mxu0 %v1755
    %2882 = vmatpush1.msra.mxu0 %v1754
    %2883 = vmatprep.subr.mxu0 %v1752
    %2884 = vmatpush1.msra.mxu0 %v1751
    %2885 = vmatprep.subr.mxu0 0.0
    %2886 = vmatpush2.msra.mxu0 0.0
    %2887 = vmatprep.subr.mxu0 0.0
    %2888 = vmatpush2.msra.mxu0 0.0
    %2889 = vmatprep.subr.mxu0 0.0
    %2890 = vmatpush2.msra.mxu0 0.0
    %2891 = vmatprep.subr.mxu0 0.0
    %2892 = vmatpush2.msra.mxu0 0.0
    %2893 = vmatprep.subr.mxu0 0.0
    %2894 = vmatpush2.msra.mxu0 0.0
    %2895 = vmatprep.subr.mxu0 0.0
    %2896 = vmatpush2.msra.mxu0 0.0
    %2897 = vmatprep.subr.mxu0 0.0
    %2898 = vmatpush2.msra.mxu0 0.0
    %2899 = vmatprep.subr.mxu0 0.0
    %2900 = vmatpush2.msra.mxu0 0.0
    %2901 = vmatprep.subr.mxu0 0.0
    %2902 = vmatpush2.msra.mxu0 0.0
    %2903 = vmatprep.subr.mxu0 0.0
    %2904 = vmatpush2.msra.mxu0 0.0
    %2905 = vmatprep.subr.mxu0 0.0
    %2906 = vmatpush2.msra.mxu0 0.0
    %2907 = vmatprep.subr.mxu0 0.0
    %2908 = vmatpush2.msra.mxu0 0.0
    %2909 = vmatprep.subr.mxu0 0.0
    %2910 = vmatpush2.msra.mxu0 0.0
    %2911 = vmatprep.subr.mxu0 0.0
    %2912 = vmatpush2.msra.mxu0 0.0
    %2913 = vmatprep.subr.mxu0 0.0
    %2914 = vmatpush2.msra.mxu0 0.0
    %2915 = vmatprep.subr.mxu0 0.0
    %2916 = vmatpush2.msra.mxu0 0.0
    %2917 = vmatprep.mubr.f32.mxu0 0.0
    %2918 = vmatmul.mubr.f32.gmra.mxu0 %v2852
    %v2919 = vpop.f32.mrf.mxu0
    %v2920 = vadd.f32 0.0, %v2919
    %v2921 = vpop.f32.mrf.mxu0
    %v2922 = vadd.f32 0.0, %v2921
    %2923 = vdwg.mxu0
    %2924 = vmatprep.subr.mxu0 0.0
    %2925 = vmatpush1.msra.mxu0 %v1798
    %2926 = vmatprep.subr.mxu0 0.0
    %2927 = vmatpush1.msra.mxu0 %v1795
    %2928 = vmatprep.subr.mxu0 0.0
    %2929 = vmatpush1.msra.mxu0 %v1792
    %2930 = vmatprep.subr.mxu0 0.0
    %2931 = vmatpush1.msra.mxu0 %v1789
    %2932 = vmatprep.subr.mxu0 0.0
    %2933 = vmatpush1.msra.mxu0 %v1786
    %2934 = vmatprep.subr.mxu0 0.0
    %2935 = vmatpush1.msra.mxu0 %v1783
    %2936 = vmatprep.subr.mxu0 0.0
    %2937 = vmatpush1.msra.mxu0 %v1780
    %2938 = vmatprep.subr.mxu0 0.0
    %2939 = vmatpush1.msra.mxu0 %v1777
    %2940 = vmatprep.subr.mxu0 0.0
    %2941 = vmatpush1.msra.mxu0 %v1774
    %2942 = vmatprep.subr.mxu0 0.0
    %2943 = vmatpush1.msra.mxu0 %v1771
    %2944 = vmatprep.subr.mxu0 0.0
    %2945 = vmatpush1.msra.mxu0 %v1768
    %2946 = vmatprep.subr.mxu0 0.0
    %2947 = vmatpush1.msra.mxu0 %v1765
    %2948 = vmatprep.subr.mxu0 0.0
    %2949 = vmatpush1.msra.mxu0 %v1762
    %2950 = vmatprep.subr.mxu0 0.0
    %2951 = vmatpush1.msra.mxu0 %v1759
    %2952 = vmatprep.subr.mxu0 0.0
    %2953 = vmatpush1.msra.mxu0 %v1756
    %2954 = vmatprep.subr.mxu0 0.0
    %2955 = vmatpush1.msra.mxu0 %v1753
    %2956 = vmatprep.subr.mxu0 0.0
    %2957 = vmatpush2.msra.mxu0 0.0
    %2958 = vmatprep.subr.mxu0 0.0
    %2959 = vmatpush2.msra.mxu0 0.0
    %2960 = vmatprep.subr.mxu0 0.0
    %2961 = vmatpush2.msra.mxu0 0.0
    %2962 = vmatprep.subr.mxu0 0.0
    %2963 = vmatpush2.msra.mxu0 0.0
    %2964 = vmatprep.subr.mxu0 0.0
    %2965 = vmatpush2.msra.mxu0 0.0
    %2966 = vmatprep.subr.mxu0 0.0
    %2967 = vmatpush2.msra.mxu0 0.0
    %2968 = vmatprep.subr.mxu0 0.0
    %2969 = vmatpush2.msra.mxu0 0.0
    %2970 = vmatprep.subr.mxu0 0.0
    %2971 = vmatpush2.msra.mxu0 0.0
    %2972 = vmatprep.subr.mxu0 0.0
    %2973 = vmatpush2.msra.mxu0 0.0
    %2974 = vmatprep.subr.mxu0 0.0
    %2975 = vmatpush2.msra.mxu0 0.0
    %2976 = vmatprep.subr.mxu0 0.0
    %2977 = vmatpush2.msra.mxu0 0.0
    %2978 = vmatprep.subr.mxu0 0.0
    %2979 = vmatpush2.msra.mxu0 0.0
    %2980 = vmatprep.subr.mxu0 0.0
    %2981 = vmatpush2.msra.mxu0 0.0
    %2982 = vmatprep.subr.mxu0 0.0
    %2983 = vmatpush2.msra.mxu0 0.0
    %2984 = vmatprep.subr.mxu0 0.0
    %2985 = vmatpush2.msra.mxu0 0.0
    %2986 = vmatprep.subr.mxu0 0.0
    %2987 = vmatpush2.msra.mxu0 0.0
    %2988 = vmatprep.mubr.f32.mxu0 0.0
    %2989 = vmatmul.mubr.f32.gmra.mxu0 %v2852
    %v2990 = vpop.f32.mrf.mxu0
    %v2991 = vadd.f32 0.0, %v2990
    %v2992 = vpop.f32.mrf.mxu0
    %2993 = vdwg.mxu0
    %v2994 = vadd.f32 %v1915, %v2920
    %v2995 = vxor.u32 %v2994, 2147483648
    %v2996 = vmul.f32 %v2995, 1.442695
    %v2997 = vpow.pop %v2996
    %v2998 = vadd.f32 %v2997, 1.0
    %v2999 = vrcp.pop %v2998
    %v3000 = vmul.f32 1.0, %v2999
    %v3001 = vadd.f32 %v1917, %v2922
    %v3002 = vxor.u32 %v3001, 2147483648
    %v3003 = vmul.f32 %v3002, 1.442695
    %v3004 = vpow.pop %v3003
    %v3005 = vadd.f32 %v3004, 1.0
    %v3006 = vrcp.pop %v3005
    %v3007 = vmul.f32 1.0, %v3006
    %v3008 = vadd.f32 %v2991, %v1805
    %v3009 = vmul.f32 %v3000, %v3008
    %v3010 = vadd.f32 %v2023, %v3009
    %v3011 = vtanh.pop %v3010
    %v3012 = vsub.f32 1.0, %v3007
    %v3013 = vmul.f32 %v3012, %v3011
    %v3014 = vmul.f32 %v3007, %v2852
    %v3015 = vadd.f32 %v3013, %v3014
    %3016 = vmatprep.subr.mxu0 %v1797
    %3017 = vmatpush1.msra.mxu0 %v1796
    %3018 = vmatprep.subr.mxu0 %v1794
    %3019 = vmatpush1.msra.mxu0 %v1793
    %3020 = vmatprep.subr.mxu0 %v1791
    %3021 = vmatpush1.msra.mxu0 %v1790
    %3022 = vmatprep.subr.mxu0 %v1788
    %3023 = vmatpush1.msra.mxu0 %v1787
    %3024 = vmatprep.subr.mxu0 %v1785
    %3025 = vmatpush1.msra.mxu0 %v1784
    %3026 = vmatprep.subr.mxu0 %v1782
    %3027 = vmatpush1.msra.mxu0 %v1781
    %3028 = vmatprep.subr.mxu0 %v1779
    %3029 = vmatpush1.msra.mxu0 %v1778
    %3030 = vmatprep.subr.mxu0 %v1776
    %3031 = vmatpush1.msra.mxu0 %v1775
    %3032 = vmatprep.subr.mxu0 %v1773
    %3033 = vmatpush1.msra.mxu0 %v1772
    %3034 = vmatprep.subr.mxu0 %v1770
    %3035 = vmatpush1.msra.mxu0 %v1769
    %3036 = vmatprep.subr.mxu0 %v1767
    %3037 = vmatpush1.msra.mxu0 %v1766
    %3038 = vmatprep.subr.mxu0 %v1764
    %3039 = vmatpush1.msra.mxu0 %v1763
    %3040 = vmatprep.subr.mxu0 %v1761
    %3041 = vmatpush1.msra.mxu0 %v1760
    %3042 = vmatprep.subr.mxu0 %v1758
    %3043 = vmatpush1.msra.mxu0 %v1757
    %3044 = vmatprep.subr.mxu0 %v1755
    %3045 = vmatpush1.msra.mxu0 %v1754
    %3046 = vmatprep.subr.mxu0 %v1752
    %3047 = vmatpush1.msra.mxu0 %v1751
    %3048 = vmatprep.subr.mxu0 0.0
    %3049 = vmatpush2.msra.mxu0 0.0
    %3050 = vmatprep.subr.mxu0 0.0
    %3051 = vmatpush2.msra.mxu0 0.0
    %3052 = vmatprep.subr.mxu0 0.0
    %3053 = vmatpush2.msra.mxu0 0.0
    %3054 = vmatprep.subr.mxu0 0.0
    %3055 = vmatpush2.msra.mxu0 0.0
    %3056 = vmatprep.subr.mxu0 0.0
    %3057 = vmatpush2.msra.mxu0 0.0
    %3058 = vmatprep.subr.mxu0 0.0
    %3059 = vmatpush2.msra.mxu0 0.0
    %3060 = vmatprep.subr.mxu0 0.0
    %3061 = vmatpush2.msra.mxu0 0.0
    %3062 = vmatprep.subr.mxu0 0.0
    %3063 = vmatpush2.msra.mxu0 0.0
    %3064 = vmatprep.subr.mxu0 0.0
    %3065 = vmatpush2.msra.mxu0 0.0
    %3066 = vmatprep.subr.mxu0 0.0
    %3067 = vmatpush2.msra.mxu0 0.0
    %3068 = vmatprep.subr.mxu0 0.0
    %3069 = vmatpush2.msra.mxu0 0.0
    %3070 = vmatprep.subr.mxu0 0.0
    %3071 = vmatpush2.msra.mxu0 0.0
    %3072 = vmatprep.subr.mxu0 0.0
    %3073 = vmatpush2.msra.mxu0 0.0
    %3074 = vmatprep.subr.mxu0 0.0
    %3075 = vmatpush2.msra.mxu0 0.0
    %3076 = vmatprep.subr.mxu0 0.0
    %3077 = vmatpush2.msra.mxu0 0.0
    %3078 = vmatprep.subr.mxu0 0.0
    %3079 = vmatpush2.msra.mxu0 0.0
    %3080 = vmatprep.mubr.f32.mxu0 0.0
    %3081 = vmatmul.mubr.f32.gmra.mxu0 %v3015
    %v3082 = vpop.f32.mrf.mxu0
    %v3083 = vadd.f32 0.0, %v3082
    %v3084 = vpop.f32.mrf.mxu0
    %v3085 = vadd.f32 0.0, %v3084
    %3086 = vdwg.mxu0
    %3087 = vmatprep.subr.mxu0 0.0
    %3088 = vmatpush1.msra.mxu0 %v1798
    %3089 = vmatprep.subr.mxu0 0.0
    %3090 = vmatpush1.msra.mxu0 %v1795
    %3091 = vmatprep.subr.mxu0 0.0
    %3092 = vmatpush1.msra.mxu0 %v1792
    %3093 = vmatprep.subr.mxu0 0.0
    %3094 = vmatpush1.msra.mxu0 %v1789
    %3095 = vmatprep.subr.mxu0 0.0
    %3096 = vmatpush1.msra.mxu0 %v1786
    %3097 = vmatprep.subr.mxu0 0.0
    %3098 = vmatpush1.msra.mxu0 %v1783
    %3099 = vmatprep.subr.mxu0 0.0
    %3100 = vmatpush1.msra.mxu0 %v1780
    %3101 = vmatprep.subr.mxu0 0.0
    %3102 = vmatpush1.msra.mxu0 %v1777
    %3103 = vmatprep.subr.mxu0 0.0
    %3104 = vmatpush1.msra.mxu0 %v1774
    %3105 = vmatprep.subr.mxu0 0.0
    %3106 = vmatpush1.msra.mxu0 %v1771
    %3107 = vmatprep.subr.mxu0 0.0
    %3108 = vmatpush1.msra.mxu0 %v1768
    %3109 = vmatprep.subr.mxu0 0.0
    %3110 = vmatpush1.msra.mxu0 %v1765
    %3111 = vmatprep.subr.mxu0 0.0
    %3112 = vmatpush1.msra.mxu0 %v1762
    %3113 = vmatprep.subr.mxu0 0.0
    %3114 = vmatpush1.msra.mxu0 %v1759
    %3115 = vmatprep.subr.mxu0 0.0
    %3116 = vmatpush1.msra.mxu0 %v1756
    %3117 = vmatprep.subr.mxu0 0.0
    %3118 = vmatpush1.msra.mxu0 %v1753
    %3119 = vmatprep.subr.mxu0 0.0
    %3120 = vmatpush2.msra.mxu0 0.0
    %3121 = vmatprep.subr.mxu0 0.0
    %3122 = vmatpush2.msra.mxu0 0.0
    %3123 = vmatprep.subr.mxu0 0.0
    %3124 = vmatpush2.msra.mxu0 0.0
    %3125 = vmatprep.subr.mxu0 0.0
    %3126 = vmatpush2.msra.mxu0 0.0
    %3127 = vmatprep.subr.mxu0 0.0
    %3128 = vmatpush2.msra.mxu0 0.0
    %3129 = vmatprep.subr.mxu0 0.0
    %3130 = vmatpush2.msra.mxu0 0.0
    %3131 = vmatprep.subr.mxu0 0.0
    %3132 = vmatpush2.msra.mxu0 0.0
    %3133 = vmatprep.subr.mxu0 0.0
    %3134 = vmatpush2.msra.mxu0 0.0
    %3135 = vmatprep.subr.mxu0 0.0
    %3136 = vmatpush2.msra.mxu0 0.0
    %3137 = vmatprep.subr.mxu0 0.0
    %3138 = vmatpush2.msra.mxu0 0.0
    %3139 = vmatprep.subr.mxu0 0.0
    %3140 = vmatpush2.msra.mxu0 0.0
    %3141 = vmatprep.subr.mxu0 0.0
    %3142 = vmatpush2.msra.mxu0 0.0
    %3143 = vmatprep.subr.mxu0 0.0
    %3144 = vmatpush2.msra.mxu0 0.0
    %3145 = vmatprep.subr.mxu0 0.0
    %3146 = vmatpush2.msra.mxu0 0.0
    %3147 = vmatprep.subr.mxu0 0.0
    %3148 = vmatpush2.msra.mxu0 0.0
    %3149 = vmatprep.subr.mxu0 0.0
    %3150 = vmatpush2.msra.mxu0 0.0
    %3151 = vmatprep.mubr.f32.mxu0 0.0
    %3152 = vmatmul.mubr.f32.gmra.mxu0 %v3015
    %v3153 = vpop.f32.mrf.mxu0
    %v3154 = vadd.f32 0.0, %v3153
    %v3155 = vpop.f32.mrf.mxu0
    %3156 = vdwg.mxu0
    %v3157 = vadd.f32 %v1921, %v3083
    %v3158 = vxor.u32 %v3157, 2147483648
    %v3159 = vmul.f32 %v3158, 1.442695
    %v3160 = vpow.pop %v3159
    %v3161 = vadd.f32 %v3160, 1.0
    %v3162 = vrcp.pop %v3161
    %v3163 = vmul.f32 1.0, %v3162
    %v3164 = vadd.f32 %v1923, %v3085
    %v3165 = vxor.u32 %v3164, 2147483648
    %v3166 = vmul.f32 %v3165, 1.442695
    %v3167 = vpow.pop %v3166
    %v3168 = vadd.f32 %v3167, 1.0
    %v3169 = vrcp.pop %v3168
    %v3170 = vmul.f32 1.0, %v3169
    %v3171 = vadd.f32 %v3154, %v1805
    %v3172 = vmul.f32 %v3163, %v3171
    %v3173 = vadd.f32 %v2028, %v3172
    %v3174 = vtanh.pop %v3173
    %v3175 = vsub.f32 1.0, %v3170
    %v3176 = vmul.f32 %v3175, %v3174
    %v3177 = vmul.f32 %v3170, %v3015
    %v3178 = vadd.f32 %v3176, %v3177
    %3179 = vmatprep.subr.mxu0 %v1797
    %3180 = vmatpush1.msra.mxu0 %v1796
    %3181 = vmatprep.subr.mxu0 %v1794
    %3182 = vmatpush1.msra.mxu0 %v1793
    %3183 = vmatprep.subr.mxu0 %v1791
    %3184 = vmatpush1.msra.mxu0 %v1790
    %3185 = vmatprep.subr.mxu0 %v1788
    %3186 = vmatpush1.msra.mxu0 %v1787
    %3187 = vmatprep.subr.mxu0 %v1785
    %3188 = vmatpush1.msra.mxu0 %v1784
    %3189 = vmatprep.subr.mxu0 %v1782
    %3190 = vmatpush1.msra.mxu0 %v1781
    %3191 = vmatprep.subr.mxu0 %v1779
    %3192 = vmatpush1.msra.mxu0 %v1778
    %3193 = vmatprep.subr.mxu0 %v1776
    %3194 = vmatpush1.msra.mxu0 %v1775
    %3195 = vmatprep.subr.mxu0 %v1773
    %3196 = vmatpush1.msra.mxu0 %v1772
    %3197 = vmatprep.subr.mxu0 %v1770
    %3198 = vmatpush1.msra.mxu0 %v1769
    %3199 = vmatprep.subr.mxu0 %v1767
    %3200 = vmatpush1.msra.mxu0 %v1766
    %3201 = vmatprep.subr.mxu0 %v1764
    %3202 = vmatpush1.msra.mxu0 %v1763
    %3203 = vmatprep.subr.mxu0 %v1761
    %3204 = vmatpush1.msra.mxu0 %v1760
    %3205 = vmatprep.subr.mxu0 %v1758
    %3206 = vmatpush1.msra.mxu0 %v1757
    %3207 = vmatprep.subr.mxu0 %v1755
    %3208 = vmatpush1.msra.mxu0 %v1754
    %3209 = vmatprep.subr.mxu0 %v1752
    %3210 = vmatpush1.msra.mxu0 %v1751
    %3211 = vmatprep.subr.mxu0 0.0
    %3212 = vmatpush2.msra.mxu0 0.0
    %3213 = vmatprep.subr.mxu0 0.0
    %3214 = vmatpush2.msra.mxu0 0.0
    %3215 = vmatprep.subr.mxu0 0.0
    %3216 = vmatpush2.msra.mxu0 0.0
    %3217 = vmatprep.subr.mxu0 0.0
    %3218 = vmatpush2.msra.mxu0 0.0
    %3219 = vmatprep.subr.mxu0 0.0
    %3220 = vmatpush2.msra.mxu0 0.0
    %3221 = vmatprep.subr.mxu0 0.0
    %3222 = vmatpush2.msra.mxu0 0.0
    %3223 = vmatprep.subr.mxu0 0.0
    %3224 = vmatpush2.msra.mxu0 0.0
    %3225 = vmatprep.subr.mxu0 0.0
    %3226 = vmatpush2.msra.mxu0 0.0
    %3227 = vmatprep.subr.mxu0 0.0
    %3228 = vmatpush2.msra.mxu0 0.0
    %3229 = vmatprep.subr.mxu0 0.0
    %3230 = vmatpush2.msra.mxu0 0.0
    %3231 = vmatprep.subr.mxu0 0.0
    %3232 = vmatpush2.msra.mxu0 0.0
    %3233 = vmatprep.subr.mxu0 0.0
    %3234 = vmatpush2.msra.mxu0 0.0
    %3235 = vmatprep.subr.mxu0 0.0
    %3236 = vmatpush2.msra.mxu0 0.0
    %3237 = vmatprep.subr.mxu0 0.0
    %3238 = vmatpush2.msra.mxu0 0.0
    %3239 = vmatprep.subr.mxu0 0.0
    %3240 = vmatpush2.msra.mxu0 0.0
    %3241 = vmatprep.subr.mxu0 0.0
    %3242 = vmatpush2.msra.mxu0 0.0
    %3243 = vmatprep.mubr.f32.mxu0 0.0
    %3244 = vmatmul.mubr.f32.gmra.mxu0 %v3178
    %v3245 = vpop.f32.mrf.mxu0
    %v3246 = vadd.f32 0.0, %v3245
    %v3247 = vpop.f32.mrf.mxu0
    %v3248 = vadd.f32 0.0, %v3247
    %3249 = vdwg.mxu0
    %3250 = vmatprep.subr.mxu0 0.0
    %3251 = vmatpush1.msra.mxu0 %v1798
    %3252 = vmatprep.subr.mxu0 0.0
    %3253 = vmatpush1.msra.mxu0 %v1795
    %3254 = vmatprep.subr.mxu0 0.0
    %3255 = vmatpush1.msra.mxu0 %v1792
    %3256 = vmatprep.subr.mxu0 0.0
    %3257 = vmatpush1.msra.mxu0 %v1789
    %3258 = vmatprep.subr.mxu0 0.0
    %3259 = vmatpush1.msra.mxu0 %v1786
    %3260 = vmatprep.subr.mxu0 0.0
    %3261 = vmatpush1.msra.mxu0 %v1783
    %3262 = vmatprep.subr.mxu0 0.0
    %3263 = vmatpush1.msra.mxu0 %v1780
    %3264 = vmatprep.subr.mxu0 0.0
    %3265 = vmatpush1.msra.mxu0 %v1777
    %3266 = vmatprep.subr.mxu0 0.0
    %3267 = vmatpush1.msra.mxu0 %v1774
    %3268 = vmatprep.subr.mxu0 0.0
    %3269 = vmatpush1.msra.mxu0 %v1771
    %3270 = vmatprep.subr.mxu0 0.0
    %3271 = vmatpush1.msra.mxu0 %v1768
    %3272 = vmatprep.subr.mxu0 0.0
    %3273 = vmatpush1.msra.mxu0 %v1765
    %3274 = vmatprep.subr.mxu0 0.0
    %3275 = vmatpush1.msra.mxu0 %v1762
    %3276 = vmatprep.subr.mxu0 0.0
    %3277 = vmatpush1.msra.mxu0 %v1759
    %3278 = vmatprep.subr.mxu0 0.0
    %3279 = vmatpush1.msra.mxu0 %v1756
    %3280 = vmatprep.subr.mxu0 0.0
    %3281 = vmatpush1.msra.mxu0 %v1753
    %3282 = vmatprep.subr.mxu0 0.0
    %3283 = vmatpush2.msra.mxu0 0.0
    %3284 = vmatprep.subr.mxu0 0.0
    %3285 = vmatpush2.msra.mxu0 0.0
    %3286 = vmatprep.subr.mxu0 0.0
    %3287 = vmatpush2.msra.mxu0 0.0
    %3288 = vmatprep.subr.mxu0 0.0
    %3289 = vmatpush2.msra.mxu0 0.0
    %3290 = vmatprep.subr.mxu0 0.0
    %3291 = vmatpush2.msra.mxu0 0.0
    %3292 = vmatprep.subr.mxu0 0.0
    %3293 = vmatpush2.msra.mxu0 0.0
    %3294 = vmatprep.subr.mxu0 0.0
    %3295 = vmatpush2.msra.mxu0 0.0
    %3296 = vmatprep.subr.mxu0 0.0
    %3297 = vmatpush2.msra.mxu0 0.0
    %3298 = vmatprep.subr.mxu0 0.0
    %3299 = vmatpush2.msra.mxu0 0.0
    %3300 = vmatprep.subr.mxu0 0.0
    %3301 = vmatpush2.msra.mxu0 0.0
    %3302 = vmatprep.subr.mxu0 0.0
    %3303 = vmatpush2.msra.mxu0 0.0
    %3304 = vmatprep.subr.mxu0 0.0
    %3305 = vmatpush2.msra.mxu0 0.0
    %3306 = vmatprep.subr.mxu0 0.0
    %3307 = vmatpush2.msra.mxu0 0.0
    %3308 = vmatprep.subr.mxu0 0.0
    %3309 = vmatpush2.msra.mxu0 0.0
    %3310 = vmatprep.subr.mxu0 0.0
    %3311 = vmatpush2.msra.mxu0 0.0
    %3312 = vmatprep.subr.mxu0 0.0
    %3313 = vmatpush2.msra.mxu0 0.0
    %3314 = vmatprep.mubr.f32.mxu0 0.0
    %3315 = vmatmul.mubr.f32.gmra.mxu0 %v3178
    %v3316 = vpop.f32.mrf.mxu0
    %v3317 = vadd.f32 0.0, %v3316
    %v3318 = vpop.f32.mrf.mxu0
    %3319 = vdwg.mxu0
    %v3320 = vadd.f32 %v1927, %v3246
    %v3321 = vxor.u32 %v3320, 2147483648
    %v3322 = vmul.f32 %v3321, 1.442695
    %v3323 = vpow.pop %v3322
    %v3324 = vadd.f32 %v3323, 1.0
    %v3325 = vrcp.pop %v3324
    %v3326 = vmul.f32 1.0, %v3325
    %v3327 = vadd.f32 %v1929, %v3248
    %v3328 = vxor.u32 %v3327, 2147483648
    %v3329 = vmul.f32 %v3328, 1.442695
    %v3330 = vpow.pop %v3329
    %v3331 = vadd.f32 %v3330, 1.0
    %v3332 = vrcp.pop %v3331
    %v3333 = vmul.f32 1.0, %v3332
    %v3334 = vadd.f32 %v3317, %v1805
    %v3335 = vmul.f32 %v3326, %v3334
    %v3336 = vadd.f32 %v2033, %v3335
    %v3337 = vtanh.pop %v3336
    %v3338 = vsub.f32 1.0, %v3333
    %v3339 = vmul.f32 %v3338, %v3337
    %v3340 = vmul.f32 %v3333, %v3178
    %v3341 = vadd.f32 %v3339, %v3340
    %3342 = vst [vmem:[#allocation8 + $0x8] sm:$0xff] %v3341
    %v3343 = vld [vmem:[#allocation7 + $0x630] sm:$0xff]
    %v3344 = vld [vmem:[#allocation7 + $0x638] sm:$0xff]
    %v3345 = vld [vmem:[#allocation7 + $0x648] sm:$0xff]
    %v3346 = vld [vmem:[#allocation7 + $0x650] sm:$0xff]
    %v3347 = vld [vmem:[#allocation7 + $0x660] sm:$0xff]
    %v3348 = vld [vmem:[#allocation7 + $0x668] sm:$0xff]
    %v3349 = vld [vmem:[#allocation7 + $0x678] sm:$0xff]
    %v3350 = vld [vmem:[#allocation7 + $0x680] sm:$0xff]
    %v3351 = vld [vmem:[#allocation7 + $0x690] sm:$0xff]
    %v3352 = vld [vmem:[#allocation7 + $0x698] sm:$0xff]
    %v3353 = vld [vmem:[#allocation7 + $0x6a8] sm:$0xff]
    %v3354 = vld [vmem:[#allocation7 + $0x6b0] sm:$0xff]
    %v3355 = vld [vmem:[#allocation7 + $0x6c0] sm:$0xff]
    %v3356 = vld [vmem:[#allocation7 + $0x6c8] sm:$0xff]
    %v3357 = vld [vmem:[#allocation7 + $0x6d8] sm:$0xff]
    %v3358 = vld [vmem:[#allocation7 + $0x6e0] sm:$0xff]
    %v3359 = vld [vmem:[#allocation7 + $0x6f0] sm:$0xff]
    %v3360 = vld [vmem:[#allocation7 + $0x6f8] sm:$0xff]
    %v3361 = vld [vmem:[#allocation7 + $0x708] sm:$0xff]
    %v3362 = vld [vmem:[#allocation7 + $0x710] sm:$0xff]
    %v3363 = vld [vmem:[#allocation7 + $0x720] sm:$0xff]
    %v3364 = vld [vmem:[#allocation7 + $0x728] sm:$0xff]
    %v3365 = vld [vmem:[#allocation7 + $0x738] sm:$0xff]
    %v3366 = vld [vmem:[#allocation7 + $0x740] sm:$0xff]
    %v3367 = vld [vmem:[#allocation7 + $0x750] sm:$0xff]
    %v3368 = vld [vmem:[#allocation7 + $0x758] sm:$0xff]
    %v3369 = vld [vmem:[#allocation7 + $0x768] sm:$0xff]
    %v3370 = vld [vmem:[#allocation7 + $0x770] sm:$0xff]
    %v3371 = vld [vmem:[#allocation7 + $0x780] sm:$0xff]
    %v3372 = vld [vmem:[#allocation7 + $0x788] sm:$0xff]
    %v3373 = vld [vmem:[#allocation7 + $0x798] sm:$0xff]
    %v3374 = vld [vmem:[#allocation7 + $0x7a0] sm:$0xff]
    %v3375 = vld [vmem:[#allocation7 + $0x7b0] sm:$0xff]
    %3376 = vmatprep.subr.mxu0 %v3374
    %3377 = vmatpush1.msra.mxu0 %v3373
    %3378 = vmatprep.subr.mxu0 %v3372
    %3379 = vmatpush1.msra.mxu0 %v3371
    %3380 = vmatprep.subr.mxu0 %v3370
    %3381 = vmatpush1.msra.mxu0 %v3369
    %3382 = vmatprep.subr.mxu0 %v3368
    %3383 = vmatpush1.msra.mxu0 %v3367
    %3384 = vmatprep.subr.mxu0 %v3366
    %3385 = vmatpush1.msra.mxu0 %v3365
    %3386 = vmatprep.subr.mxu0 %v3364
    %3387 = vmatpush1.msra.mxu0 %v3363
    %3388 = vmatprep.subr.mxu0 %v3362
    %3389 = vmatpush1.msra.mxu0 %v3361
    %3390 = vmatprep.subr.mxu0 %v3360
    %3391 = vmatpush1.msra.mxu0 %v3359
    %3392 = vmatprep.subr.mxu0 %v3358
    %3393 = vmatpush1.msra.mxu0 %v3357
    %3394 = vmatprep.subr.mxu0 %v3356
    %3395 = vmatpush1.msra.mxu0 %v3355
    %3396 = vmatprep.subr.mxu0 %v3354
    %3397 = vmatpush1.msra.mxu0 %v3353
    %3398 = vmatprep.subr.mxu0 %v3352
    %3399 = vmatpush1.msra.mxu0 %v3351
    %3400 = vmatprep.subr.mxu0 %v3350
    %3401 = vmatpush1.msra.mxu0 %v3349
    %3402 = vmatprep.subr.mxu0 %v3348
    %3403 = vmatpush1.msra.mxu0 %v3347
    %3404 = vmatprep.subr.mxu0 %v3346
    %3405 = vmatpush1.msra.mxu0 %v3345
    %3406 = vmatprep.subr.mxu0 %v3344
    %3407 = vmatpush1.msra.mxu0 %v3343
    %3408 = vmatprep.subr.mxu0 0.0
    %3409 = vmatpush2.msra.mxu0 0.0
    %3410 = vmatprep.subr.mxu0 0.0
    %3411 = vmatpush2.msra.mxu0 0.0
    %3412 = vmatprep.subr.mxu0 0.0
    %3413 = vmatpush2.msra.mxu0 0.0
    %3414 = vmatprep.subr.mxu0 0.0
    %3415 = vmatpush2.msra.mxu0 0.0
    %3416 = vmatprep.subr.mxu0 0.0
    %3417 = vmatpush2.msra.mxu0 0.0
    %3418 = vmatprep.subr.mxu0 0.0
    %3419 = vmatpush2.msra.mxu0 0.0
    %3420 = vmatprep.subr.mxu0 0.0
    %3421 = vmatpush2.msra.mxu0 0.0
    %3422 = vmatprep.subr.mxu0 0.0
    %3423 = vmatpush2.msra.mxu0 0.0
    %3424 = vmatprep.subr.mxu0 0.0
    %3425 = vmatpush2.msra.mxu0 0.0
    %3426 = vmatprep.subr.mxu0 0.0
    %3427 = vmatpush2.msra.mxu0 0.0
    %3428 = vmatprep.subr.mxu0 0.0
    %3429 = vmatpush2.msra.mxu0 0.0
    %3430 = vmatprep.subr.mxu0 0.0
    %3431 = vmatpush2.msra.mxu0 0.0
    %3432 = vmatprep.subr.mxu0 0.0
    %3433 = vmatpush2.msra.mxu0 0.0
    %3434 = vmatprep.subr.mxu0 0.0
    %3435 = vmatpush2.msra.mxu0 0.0
    %3436 = vmatprep.subr.mxu0 0.0
    %3437 = vmatpush2.msra.mxu0 0.0
    %3438 = vmatprep.subr.mxu0 0.0
    %3439 = vmatpush2.msra.mxu0 0.0
    %3440 = vmatprep.mubr.f32.mxu0 0.0
    %3441 = vmatmul.mubr.f32.gmra.mxu0 %v3341
    %v3442 = vpop.f32.mrf.mxu0
    %v3443 = vadd.f32 0.0, %v3442
    %v3444 = vpop.f32.mrf.mxu0
    %3445 = vdwg.mxu0
    %v3446 = vlaneseq
    %v3447 = vshrl.u32 %v3446, 7
    %v3448 = vsub.s32 0, %v3447
    %v3449 = vrot.slane %v3375, %v3448
    %v3450 = vadd.f32 %v3443, %v3449
    %v3451 = vxor.u32 %v3450, 2147483648
    %v3452 = vmul.f32 %v3451, 1.442695
    %v3453 = vpow.pop %v3452
    %v3454 = vadd.f32 %v3453, 1.0
    %v3455 = vrcp.pop %v3454
    %v3456 = vmul.f32 1.0, %v3455
    %3457 = vst [vmem:[#allocation8 + $0x10] sm:$0xff] %v3456
    // Predicated region
    $region26: #{tpu_custom_call.1} parent=1 // pred_check
      _
    $region27: #{tpu_custom_call.1} parent=1 // pred_check_branch
      %3459 = sbr.rel (0) target = $region29
    $region28: #{tpu_custom_call.1} parent=1 // pred_region
      %s3461 = ssub.s32 384, 384
      %3462 = vsyncadd [#allocation4], %s3461
      %s3463 = sshll.u32 [#allocation8], 4
      %s3464 = int_to_ptr.vmem [resolvable:$true] %s3463
      %3469 = dma.vmem_to_hbm [thread:$0]  %s3464, 384, %s3, [#allocation4], 128, 128, 8
    $region29: #{tpu_custom_call.1} parent=1 // pred_fallthru
      _
    // Predicated region
    $region30: #{tpu_custom_call.1} parent=1 // pred_check
      _
    $region31: #{tpu_custom_call.1} parent=1 // pred_check_branch
      %3471 = sbr.rel (0) target = $region33
    $region32: #{tpu_custom_call.1} parent=1 // pred_region
      %3472 = dma.done [#allocation4], 384
    $region33: #{tpu_custom_call.1} parent=1 // pred_fallthru
      _
    %3473 = vsyncpa [#allocation3], 1
    %3474 = vsyncpa [#allocation6], 1
    %3475 = vsyncpa [#allocation4], 1

</llo_original>
